<compile_context>
chip_gen: v7x
topology: tpu7x:2x2x1
jax: 0.10.0
libtpu: 0.0.40
codegen_flags: <defaults>
</compile_context>

<pallas_src>
import functools
import math

import jax
import jax.numpy as jnp
from jax.experimental import pallas as pl
from jax.experimental.pallas import tpu as pltpu

VMEM_LIMIT = 64 * 1024 * 1024  # scoped VMEM ceiling; fits v7x's 64 MiB physical VMEM


def _pick_tile(dim, target, align):
    """Largest tile <= target that divides `dim` and is a multiple of `align`.

    Falls back to the full dim (always layout-legal: full-extent block). This keeps
    the toy test shapes (H=32, S=8) as single full blocks while real BERT shapes
    (768 / 3072 / large B*S) get 128/256-aligned tiles and pipelining.
    """
    if dim <= target:
        return dim
    t = (target // align) * align
    while t >= align:
        if dim % t == 0:
            return t
        t -= align
    return dim


# ----------------------------- Pallas kernels -----------------------------

def _dense_kernel(x_ref, w_ref, b_ref, o_ref, acc_ref, *, activation):
    """Tiled y = act(x @ w + b); bf16 MXU inputs, f32 accumulation."""
    @pl.when(pl.program_id(2) == 0)
    def _():
        acc_ref[...] = jnp.zeros_like(acc_ref)

    acc_ref[...] += jnp.dot(x_ref[...], w_ref[...],
                            preferred_element_type=jnp.float32)

    @pl.when(pl.program_id(2) == pl.num_programs(2) - 1)
    def _():
        y = acc_ref[...] + b_ref[...]
        if activation == "gelu":
            # TODO(synk): tanh-approx GELU; HF BertIntermediate default is exact erf GELU.
            y = 0.5 * y * (1.0 + jnp.tanh(
                0.7978845608028654 * (y + 0.044715 * y * y * y)))
        o_ref[...] = y.astype(o_ref.dtype)


def _dense_add_ln_kernel(x_ref, w_ref, b_ref, r_ref, g_ref, beta_ref, o_ref, acc_ref):
    """Fused tiled (x @ w + b + residual) followed by LayerNorm over full H."""
    @pl.when(pl.program_id(1) == 0)
    def _():
        acc_ref[...] = jnp.zeros_like(acc_ref)

    acc_ref[...] += jnp.dot(x_ref[...], w_ref[...],
                            preferred_element_type=jnp.float32)

    @pl.when(pl.program_id(1) == pl.num_programs(1) - 1)
    def _():
        y = acc_ref[...] + b_ref[...] + r_ref[...].astype(jnp.float32)
        mu = jnp.mean(y, axis=-1, keepdims=True)
        yc = y - mu
        var = jnp.mean(yc * yc, axis=-1, keepdims=True)
        o_ref[...] = (yc * jax.lax.rsqrt(var + 1e-12) * g_ref[...]
                      + beta_ref[...]).astype(o_ref.dtype)


def _layernorm_kernel(x_ref, g_ref, b_ref, o_ref):
    """Row-tiled LayerNorm in f32, bf16 output."""
    x = x_ref[...].astype(jnp.float32)
    mu = jnp.mean(x, axis=-1, keepdims=True)
    xc = x - mu
    var = jnp.mean(xc * xc, axis=-1, keepdims=True)
    o_ref[...] = (xc * jax.lax.rsqrt(var + 1e-12) * g_ref[...]
                  + b_ref[...]).astype(o_ref.dtype)


def _flash_attn_kernel(q_ref, k_ref, v_ref, mask_ref, o_ref, m_sc, l_sc, acc_sc):
    """Flash-style attention over one batch element (all heads), KV-blocked.

    q/k/v blocks: (1, nH, S|tkv, dH) bf16 (1/sqrt(dH) already folded into q).
    mask block: (1, 1, tkv) additive f32, shared across heads.
    """
    kv = pl.program_id(1)

    @pl.when(kv == 0)
    def _():
        m_sc[...] = jnp.full_like(m_sc, -jnp.inf)
        l_sc[...] = jnp.zeros_like(l_sc)
        acc_sc[...] = jnp.zeros_like(acc_sc)

    q = q_ref[0]            # (nH, S, dH) bf16
    k = k_ref[0]            # (nH, tkv, dH) bf16
    v = v_ref[0]            # (nH, tkv, dH) bf16

    s = jnp.einsum("hqd,hkd->hqk", q, k,
                   preferred_element_type=jnp.float32)          # (nH, S, tkv) f32
    s = s + mask_ref[0]                                          # (1, tkv) broadcast

    m_prev = m_sc[...]                                           # (nH, S, 1)
    m_new = jnp.maximum(m_prev, jnp.max(s, axis=-1, keepdims=True))
    alpha = jnp.exp(m_prev - m_new)
    p = jnp.exp(s - m_new)
    l_sc[...] = alpha * l_sc[...] + jnp.sum(p, axis=-1, keepdims=True)
    acc_sc[...] = alpha * acc_sc[...] + jnp.einsum(
        "hqk,hkd->hqd", p.astype(v.dtype), v,
        preferred_element_type=jnp.float32)
    m_sc[...] = m_new

    @pl.when(kv == pl.num_programs(1) - 1)
    def _():
        inv_l = pl.reciprocal(l_sc[...], approx=True)
        o_ref[0] = (acc_sc[...] * inv_l).astype(o_ref.dtype)


# --------------------------- pallas_call wrappers --------------------------

def dense(x, w, b, activation=None, out_dtype=jnp.bfloat16):
    M, K = x.shape
    Kw, N = w.shape
    assert K == Kw
    tm = _pick_tile(M, 256, 8)
    tn = _pick_tile(N, 256, 128)
    tk = _pick_tile(K, 512, 128)
    grid = (M // tm, N // tn, K // tk)
    bytes_accessed = int(M * K * x.dtype.itemsize + K * N * w.dtype.itemsize
                         + N * b.dtype.itemsize
                         + M * N * jnp.dtype(out_dtype).itemsize)
    return pl.pallas_call(
        functools.partial(_dense_kernel, activation=activation),
        out_shape=jax.ShapeDtypeStruct((M, N), out_dtype),
        grid_spec=pltpu.PrefetchScalarGridSpec(
            num_scalar_prefetch=0,
            grid=grid,
            in_specs=[
                pl.BlockSpec((tm, tk), lambda i, j, k: (i, k)),
                pl.BlockSpec((tk, tn), lambda i, j, k: (k, j)),
                pl.BlockSpec((1, tn), lambda i, j, k: (0, j)),
            ],
            out_specs=pl.BlockSpec((tm, tn), lambda i, j, k: (i, j)),
            scratch_shapes=[pltpu.VMEM((tm, tn), jnp.float32)]),
        compiler_params=pltpu.CompilerParams(
            dimension_semantics=("parallel", "parallel", "arbitrary"),
            vmem_limit_bytes=VMEM_LIMIT),
        cost_estimate=pl.CostEstimate(
            flops=int(2 * M * N * K),
            transcendentals=int(M * N) if activation is not None else 0,
            bytes_accessed=bytes_accessed),
    )(x, w, b)


def dense_add_layernorm(x, w, b, residual, gamma, beta, out_dtype=jnp.bfloat16):
    M, K = x.shape
    _, H = w.shape
    tm = _pick_tile(M, 256, 8)
    tk = _pick_tile(K, 512, 128)
    grid = (M // tm, K // tk)
    bytes_accessed = int(M * K * x.dtype.itemsize + K * H * w.dtype.itemsize
                         + M * H * residual.dtype.itemsize
                         + M * H * jnp.dtype(out_dtype).itemsize)
    return pl.pallas_call(
        _dense_add_ln_kernel,
        out_shape=jax.ShapeDtypeStruct((M, H), out_dtype),
        grid_spec=pltpu.PrefetchScalarGridSpec(
            num_scalar_prefetch=0,
            grid=grid,
            in_specs=[
                pl.BlockSpec((tm, tk), lambda i, k: (i, k)),
                pl.BlockSpec((tk, H), lambda i, k: (k, 0)),
                pl.BlockSpec((1, H), lambda i, k: (0, 0)),
                pl.BlockSpec((tm, H), lambda i, k: (i, 0)),
                pl.BlockSpec((1, H), lambda i, k: (0, 0)),
                pl.BlockSpec((1, H), lambda i, k: (0, 0)),
            ],
            out_specs=pl.BlockSpec((tm, H), lambda i, k: (i, 0)),
            scratch_shapes=[pltpu.VMEM((tm, H), jnp.float32)]),
        compiler_params=pltpu.CompilerParams(
            dimension_semantics=("parallel", "arbitrary"),
            vmem_limit_bytes=VMEM_LIMIT),
        cost_estimate=pl.CostEstimate(
            flops=int(2 * M * H * K + 10 * M * H),
            transcendentals=0,
            bytes_accessed=bytes_accessed),
    )(x, w, b, residual, gamma, beta)


def layernorm(x, g, b, out_dtype=jnp.bfloat16):
    M, H = x.shape
    tm = _pick_tile(M, 512, 8)
    grid = (M // tm,)
    return pl.pallas_call(
        _layernorm_kernel,
        out_shape=jax.ShapeDtypeStruct((M, H), out_dtype),
        grid_spec=pltpu.PrefetchScalarGridSpec(
            num_scalar_prefetch=0,
            grid=grid,
            in_specs=[
                pl.BlockSpec((tm, H), lambda i: (i, 0)),
                pl.BlockSpec((1, H), lambda i: (0, 0)),
                pl.BlockSpec((1, H), lambda i: (0, 0)),
            ],
            out_specs=pl.BlockSpec((tm, H), lambda i: (i, 0))),
        compiler_params=pltpu.CompilerParams(
            dimension_semantics=("parallel",),
            vmem_limit_bytes=VMEM_LIMIT),
        cost_estimate=pl.CostEstimate(
            flops=int(8 * M * H),
            transcendentals=0,
            bytes_accessed=int(M * H * x.dtype.itemsize
                               + M * H * jnp.dtype(out_dtype).itemsize)),
    )(x, g, b)


def flash_attention(q, k, v, mask):
    """q/k/v: [B, nH, S, dH] bf16 (scale folded into q); mask: [B, 1, S] additive f32."""
    B, nH, S, dH = q.shape
    tkv = _pick_tile(S, 512, 128)
    n_kv = S // tkv
    grid = (B, n_kv)
    bytes_accessed = int(4 * B * nH * S * dH * q.dtype.itemsize
                         + B * S * mask.dtype.itemsize)
    return pl.pallas_call(
        _flash_attn_kernel,
        out_shape=jax.ShapeDtypeStruct((B, nH, S, dH), jnp.bfloat16),
        grid_spec=pltpu.PrefetchScalarGridSpec(
            num_scalar_prefetch=0,
            grid=grid,
            in_specs=[
                pl.BlockSpec((1, nH, S, dH), lambda b, kv: (b, 0, 0, 0)),
                pl.BlockSpec((1, nH, tkv, dH), lambda b, kv: (b, 0, kv, 0)),
                pl.BlockSpec((1, nH, tkv, dH), lambda b, kv: (b, 0, kv, 0)),
                pl.BlockSpec((1, 1, tkv), lambda b, kv: (b, 0, kv)),
            ],
            out_specs=pl.BlockSpec((1, nH, S, dH), lambda b, kv: (b, 0, 0, 0)),
            scratch_shapes=[
                pltpu.VMEM((nH, S, 1), jnp.float32),
                pltpu.VMEM((nH, S, 1), jnp.float32),
                pltpu.VMEM((nH, S, dH), jnp.float32),
            ]),
        compiler_params=pltpu.CompilerParams(
            dimension_semantics=("parallel", "arbitrary"),
            vmem_limit_bytes=VMEM_LIMIT),
        cost_estimate=pl.CostEstimate(
            flops=int(4 * B * nH * S * S * dH),
            transcendentals=int(B * nH * S * S),
            bytes_accessed=bytes_accessed),
    )(q, k, v, mask)


# ------------------------------ BERT (glue) --------------------------------

def bert_layer(p, x, mask, B, S, H, nH, dH):
    # Fused QKV projection (1/sqrt(dH) already folded into the Q columns).
    qkv = dense(x, p["qkv_w"], p["qkv_b"])                       # [B*S, 3H] bf16
    # TODO(synk): head split/merge still goes through XLA transposes (one HBM
    # round trip each way); folding it into the attention BlockSpecs would need
    # dH-wide (sub-128) lane blocks.
    qkv = qkv.reshape(B, S, 3, nH, dH).transpose(2, 0, 3, 1, 4)  # [3, B, nH, S, dH]
    q, k, v = qkv[0], qkv[1], qkv[2]

    ctx = flash_attention(q, k, v, mask)                         # [B, nH, S, dH] bf16
    ctx = ctx.transpose(0, 2, 1, 3).reshape(B * S, H)

    # attention output dense + residual + LayerNorm, fused
    x = dense_add_layernorm(ctx, p["attn_out_w"], p["attn_out_b"], x,
                            p["attn_ln_g"], p["attn_ln_b"])

    inter = dense(x, p["inter_w"], p["inter_b"], activation="gelu")
    # FFN output dense + residual + LayerNorm, fused
    x = dense_add_layernorm(inter, p["out_w"], p["out_b"], x,
                            p["out_ln_g"], p["out_ln_b"])
    return x


def bert_forward(bp, input_ids, token_type_ids, attention_mask, cfg):
    B, S = input_ids.shape
    H, nH = cfg["hidden"], cfg["heads"]
    dH = H // nH

    # embedding gathers: plain-JAX glue
    pos_ids = jnp.arange(S, dtype=jnp.int32)[None, :]
    emb = (bp["word_emb"][input_ids]
           + bp["pos_emb"][pos_ids]
           + bp["type_emb"][token_type_ids])                     # [B, S, H] f32
    x = layernorm(emb.reshape(B * S, H), bp["emb_ln_g"], bp["emb_ln_b"])  # bf16

    # extended additive mask, passed once per batch element (heads share it)
    mask = ((1.0 - attention_mask.astype(jnp.float32)) * -10000.0)[:, None, :]  # [B,1,S]

    for layer_params in bp["layers"]:
        x = bert_layer(layer_params, x, mask, B, S, H, nH, dH)

    # pooler: dense + tanh on [CLS] — tiny [B,H] matmul, plain JAX (sub-128 rows)
    cls = x.reshape(B, S, H)[:, 0, :].astype(jnp.float32)
    pooled = jnp.tanh(cls @ bp["pooler_w"] + bp["pooler_b"])
    return pooled


def bbfc_forward(params, input_ids, token_type_ids, attention_mask,
                 input_t_ids, input_t_mask, segment_t_ids, cfg):
    B = input_ids.shape[0]
    # Run both weight-sharing BERT towers as one batched forward (2B rows).
    ids = jnp.concatenate([input_ids, input_t_ids], axis=0)
    types = jnp.concatenate([token_type_ids, segment_t_ids], axis=0)
    masks = jnp.concatenate([attention_mask, input_t_mask], axis=0)
    pooled_all = bert_forward(params["bert"], ids, types, masks, cfg)   # [2B, H] f32

    cat = jnp.concatenate([pooled_all[:B], pooled_all[B:]], axis=1)     # [B, 2H]
    # dropout = identity (eval); final FC (output_dim=4 < 128 lanes) in plain JAX.
    logits = cat @ params["fc_w"] + params["fc_b"]
    # TODO(synk): labels / CrossEntropyLoss branch of the reference module not implemented.
    return logits


# ------------------------------ param init ---------------------------------

def init_params(key, cfg):
    """Raw f32 parameters mirroring the PyTorch module's parameterization."""
    H, I = cfg["hidden"], cfg["intermediate"]
    V, P, T, O = cfg["vocab"], cfg["max_pos"], cfg["type_vocab"], cfg["output_dim"]
    keys = iter(jax.random.split(key, 8 + 8 * cfg["layers"]))

    def w(shape):
        return (0.02 * jax.random.normal(next(keys), shape)).astype(jnp.float32)

    def zeros(shape):
        return jnp.zeros(shape, jnp.float32)

    def ones(shape):
        return jnp.ones(shape, jnp.float32)

    bert = {
        "word_emb": w((V, H)),
        "pos_emb": w((P, H)),
        "type_emb": w((T, H)),
        "emb_ln_g": ones((1, H)), "emb_ln_b": zeros((1, H)),
        "pooler_w": w((H, H)), "pooler_b": zeros((1, H)),
        "layers": [],
    }
    for _ in range(cfg["layers"]):
        bert["layers"].append({
            "q_w": w((H, H)), "q_b": zeros((1, H)),
            "k_w": w((H, H)), "k_b": zeros((1, H)),
            "v_w": w((H, H)), "v_b": zeros((1, H)),
            "attn_out_w": w((H, H)), "attn_out_b": zeros((1, H)),
            "attn_ln_g": ones((1, H)), "attn_ln_b": zeros((1, H)),
            "inter_w": w((H, I)), "inter_b": zeros((1, I)),
            "out_w": w((I, H)), "out_b": zeros((1, H)),
            "out_ln_g": ones((1, H)), "out_ln_b": zeros((1, H)),
        })
    return {"bert": bert, "fc_w": w((2 * H, O)), "fc_b": zeros((1, O))}


def prepare_params(raw, cfg):
    """Kernel-ready params: fused QKV with 1/sqrt(dH) folded into Q, bf16 matmul weights."""
    H, nH = cfg["hidden"], cfg["heads"]
    dH = H // nH
    scale = 1.0 / math.sqrt(dH)
    src = raw["bert"]

    layers = []
    for lp in src["layers"]:
        qkv_w = jnp.concatenate([lp["q_w"] * scale, lp["k_w"], lp["v_w"]], axis=1)
        qkv_b = jnp.concatenate([lp["q_b"] * scale, lp["k_b"], lp["v_b"]], axis=1)
        layers.append({
            "qkv_w": qkv_w.astype(jnp.bfloat16), "qkv_b": qkv_b.astype(jnp.float32),
            "attn_out_w": lp["attn_out_w"].astype(jnp.bfloat16),
            "attn_out_b": lp["attn_out_b"],
            "attn_ln_g": lp["attn_ln_g"], "attn_ln_b": lp["attn_ln_b"],
            "inter_w": lp["inter_w"].astype(jnp.bfloat16), "inter_b": lp["inter_b"],
            "out_w": lp["out_w"].astype(jnp.bfloat16), "out_b": lp["out_b"],
            "out_ln_g": lp["out_ln_g"], "out_ln_b": lp["out_ln_b"],
        })

    bert = {
        "word_emb": src["word_emb"], "pos_emb": src["pos_emb"], "type_emb": src["type_emb"],
        "emb_ln_g": src["emb_ln_g"], "emb_ln_b": src["emb_ln_b"],
        "pooler_w": src["pooler_w"], "pooler_b": src["pooler_b"],
        "layers": layers,
    }
    return {"bert": bert, "fc_w": raw["fc_w"], "fc_b": raw["fc_b"]}


# --------------------------------- main -------------------------------------

if __name__ == "__main__":
    cfg = dict(vocab=32, hidden=32, heads=2, intermediate=64, layers=2,
               max_pos=16, type_vocab=2, output_dim=4)
    B, S = 2, 8

    root = jax.random.PRNGKey(0)
    pkey, k1, k2 = jax.random.split(root, 3)
    params = prepare_params(init_params(pkey, cfg), cfg)

    input_ids = jax.random.randint(k1, (B, S), 0, cfg["vocab"], dtype=jnp.int32)
    input_t_ids = jax.random.randint(k2, (B, S), 0, cfg["vocab"], dtype=jnp.int32)
    token_type_ids = jnp.zeros((B, S), jnp.int32)
    segment_t_ids = jnp.zeros((B, S), jnp.int32)
    attention_mask = jnp.ones((B, S), jnp.int32)
    input_t_mask = jnp.ones((B, S), jnp.int32)

    fwd = jax.jit(functools.partial(bbfc_forward, cfg=cfg))
    logits = fwd(params, input_ids, token_type_ids, attention_mask,
                 input_t_ids, input_t_mask, segment_t_ids)
    jax.block_until_ready(logits)
    assert logits.shape == (B, cfg["output_dim"])
    assert bool(jnp.all(jnp.isfinite(logits)))
    print("KERNEL_OK")
</pallas_src>

<mosaic_0001>
module attributes {stable_mosaic.version = 11 : i64} {
  func.func @_dense_kernel(%arg0: i32, %arg1: i32, %arg2: i32, %arg3: memref<32x32xbf16, #tpu.memory_space<vmem>>, %arg4: memref<32x96xbf16, #tpu.memory_space<vmem>>, %arg5: memref<1x96xf32, #tpu.memory_space<vmem>>, %arg6: memref<32x96xbf16, #tpu.memory_space<vmem>>, %arg7: memref<32x96xf32, #tpu.memory_space<vmem>>) attributes {dimension_semantics = [#tpu.dimension_semantics<parallel>, #tpu.dimension_semantics<parallel>, #tpu.dimension_semantics<arbitrary>], iteration_bounds = array<i64: 1, 1, 1>, scalar_prefetch = 0 : i64, scratch_operands = 1 : i64, tpu.core_type = #tpu.core_type<tc>, window_params = [{transform_indices = @transform_0, window_bounds = array<i64: 32, 32>}, {transform_indices = @transform_1, window_bounds = array<i64: 32, 96>}, {transform_indices = @transform_2, window_bounds = array<i64: 1, 96>}, {transform_indices = @transform_3, window_bounds = array<i64: 32, 96>}]} {
    %c0_i32 = arith.constant 0 : i32
    %0 = arith.cmpi eq, %arg2, %c0_i32 : i32
    %1 = arith.extui %0 : i1 to i32
    %c0_i32_0 = arith.constant 0 : i32
    %2 = arith.cmpi ne, %1, %c0_i32_0 : i32
    scf.if %2 {
      %cst_10 = arith.constant 0.000000e+00 : f32
      %12 = vector.broadcast %cst_10 : f32 to vector<32x96xf32>
      %c0_11 = arith.constant 0 : index
      %c0_12 = arith.constant 0 : index
      %13 = vector.load %arg7[%c0_11, %c0_12] : memref<32x96xf32, #tpu.memory_space<vmem>>, vector<32x96xf32>
      tpu.vector_store %arg7[%c0_11, %c0_12], %12 {strides = array<i32>} : memref<32x96xf32, #tpu.memory_space<vmem>>, vector<32x96xf32>,
    } else {
    }
    %c0 = arith.constant 0 : index
    %c0_1 = arith.constant 0 : index
    %3 = vector.load %arg7[%c0, %c0_1] : memref<32x96xf32, #tpu.memory_space<vmem>>, vector<32x96xf32>
    %c0_2 = arith.constant 0 : index
    %c0_3 = arith.constant 0 : index
    %4 = vector.load %arg3[%c0_2, %c0_3] : memref<32x32xbf16, #tpu.memory_space<vmem>>, vector<32x32xbf16>
    %c0_4 = arith.constant 0 : index
    %c0_5 = arith.constant 0 : index
    %5 = vector.load %arg4[%c0_4, %c0_5] : memref<32x96xbf16, #tpu.memory_space<vmem>>, vector<32x96xbf16>
    %cst = arith.constant dense<0.000000e+00> : vector<32x96xf32>
    %6 = tpu.matmul %4, %5, %cst {dimension_numbers = #tpu.dot_dimension_numbers<[1], [0], [0], [1], [0, 0, 1, 1], [], []>} : vector<32x32xbf16>, vector<32x96xbf16>, vector<32x96xf32> -> vector<32x96xf32>
    %7 = arith.addf %3, %6 : vector<32x96xf32>
    %c0_6 = arith.constant 0 : index
    %c0_7 = arith.constant 0 : index
    %8 = vector.load %arg7[%c0_6, %c0_7] : memref<32x96xf32, #tpu.memory_space<vmem>>, vector<32x96xf32>
    tpu.vector_store %arg7[%c0_6, %c0_7], %7 {strides = array<i32>} : memref<32x96xf32, #tpu.memory_space<vmem>>, vector<32x96xf32>,
    %c0_i32_8 = arith.constant 0 : i32
    %9 = arith.cmpi eq, %arg2, %c0_i32_8 : i32
    %10 = arith.extui %9 : i1 to i32
    %c0_i32_9 = arith.constant 0 : i32
    %11 = arith.cmpi ne, %10, %c0_i32_9 : i32
    scf.if %11 {
      %c0_10 = arith.constant 0 : index
      %c0_11 = arith.constant 0 : index
      %12 = vector.load %arg7[%c0_10, %c0_11] : memref<32x96xf32, #tpu.memory_space<vmem>>, vector<32x96xf32>
      %c0_12 = arith.constant 0 : index
      %c0_13 = arith.constant 0 : index
      %13 = vector.load %arg5[%c0_12, %c0_13] : memref<1x96xf32, #tpu.memory_space<vmem>>, vector<1x96xf32>
      %14 = vector.broadcast %13 : vector<1x96xf32> to vector<32x96xf32>
      %15 = arith.addf %12, %14 : vector<32x96xf32>
      %16 = arith.truncf %15 : vector<32x96xf32> to vector<32x96xbf16>
      %c0_14 = arith.constant 0 : index
      %c0_15 = arith.constant 0 : index
      %17 = vector.load %arg6[%c0_14, %c0_15] : memref<32x96xbf16, #tpu.memory_space<vmem>>, vector<32x96xbf16>
      tpu.vector_store %arg6[%c0_14, %c0_15], %16 {strides = array<i32>} : memref<32x96xbf16, #tpu.memory_space<vmem>>, vector<32x96xbf16>,
    } else {
    }
    return
  }
  func.func @transform_0(%arg0: i32, %arg1: i32, %arg2: i32) -> (i32, i32) {
    %c0_i32 = arith.constant 0 : i32
    return %arg0, %arg2 : i32, i32
  }
  func.func @transform_1(%arg0: i32, %arg1: i32, %arg2: i32) -> (i32, i32) {
    %c0_i32 = arith.constant 0 : i32
    return %arg2, %arg1 : i32, i32
  }
  func.func @transform_2(%arg0: i32, %arg1: i32, %arg2: i32) -> (i32, i32) {
    %c0_i32 = arith.constant 0 : i32
    %c0_i32_0 = arith.constant 0 : i32
    return %c0_i32, %arg1 : i32, i32
  }
  func.func @transform_3(%arg0: i32, %arg1: i32, %arg2: i32) -> (i32, i32) {
    %c0_i32 = arith.constant 0 : i32
    return %arg0, %arg1 : i32, i32
  }
}

module attributes {stable_mosaic.version = 11 : i64} {
  func.func @_layernorm_kernel(%arg0: i32, %arg1: memref<32x32xf32, #tpu.memory_space<vmem>>, %arg2: memref<1x32xf32, #tpu.memory_space<vmem>>, %arg3: memref<1x32xf32, #tpu.memory_space<vmem>>, %arg4: memref<32x32xbf16, #tpu.memory_space<vmem>>) attributes {dimension_semantics = [#tpu.dimension_semantics<parallel>], iteration_bounds = array<i64: 1>, scalar_prefetch = 0 : i64, scratch_operands = 0 : i64, tpu.core_type = #tpu.core_type<tc>, window_params = [{transform_indices = @transform_0, window_bounds = array<i64: 32, 32>}, {pipeline_mode = #tpu.pipeline_mode<synchronous>, transform_indices = @transform_1, window_bounds = array<i64: 1, 32>}, {pipeline_mode = #tpu.pipeline_mode<synchronous>, transform_indices = @transform_2, window_bounds = array<i64: 1, 32>}, {transform_indices = @transform_3, window_bounds = array<i64: 32, 32>}]} {
    %c0 = arith.constant 0 : index
    %c0_0 = arith.constant 0 : index
    %0 = vector.load %arg1[%c0, %c0_0] : memref<32x32xf32, #tpu.memory_space<vmem>>, vector<32x32xf32>
    %cst = arith.constant dense<0.000000e+00> : vector<32xf32>
    %1 = vector.multi_reduction <add>, %0, %cst [1] : vector<32x32xf32> to vector<32xf32>
    %2 = vector.shape_cast %1 : vector<32xf32> to vector<32x1xf32>
    %cst_1 = arith.constant 3.200000e+01 : f32
    %3 = vector.broadcast %cst_1 : f32 to vector<32x1xf32>
    %4 = arith.divf %2, %3 : vector<32x1xf32>
    %5 = vector.broadcast %4 : vector<32x1xf32> to vector<32x32xf32>
    %6 = arith.subf %0, %5 : vector<32x32xf32>
    %7 = arith.mulf %6, %6 : vector<32x32xf32>
    %cst_2 = arith.constant dense<0.000000e+00> : vector<32xf32>
    %8 = vector.multi_reduction <add>, %7, %cst_2 [1] : vector<32x32xf32> to vector<32xf32>
    %9 = vector.shape_cast %8 : vector<32xf32> to vector<32x1xf32>
    %cst_3 = arith.constant 3.200000e+01 : f32
    %10 = vector.broadcast %cst_3 : f32 to vector<32x1xf32>
    %11 = arith.divf %9, %10 : vector<32x1xf32>
    %cst_4 = arith.constant 9.99999996E-13 : f32
    %12 = vector.broadcast %cst_4 : f32 to vector<32x1xf32>
    %13 = arith.addf %11, %12 : vector<32x1xf32>
    %14 = math.rsqrt %13 : vector<32x1xf32>
    %15 = vector.broadcast %14 : vector<32x1xf32> to vector<32x32xf32>
    %16 = arith.mulf %6, %15 : vector<32x32xf32>
    %c0_5 = arith.constant 0 : index
    %c0_6 = arith.constant 0 : index
    %17 = vector.load %arg2[%c0_5, %c0_6] : memref<1x32xf32, #tpu.memory_space<vmem>>, vector<1x32xf32>
    %18 = vector.broadcast %17 : vector<1x32xf32> to vector<32x32xf32>
    %19 = arith.mulf %16, %18 : vector<32x32xf32>
    %c0_7 = arith.constant 0 : index
    %c0_8 = arith.constant 0 : index
    %20 = vector.load %arg3[%c0_7, %c0_8] : memref<1x32xf32, #tpu.memory_space<vmem>>, vector<1x32xf32>
    %21 = vector.broadcast %20 : vector<1x32xf32> to vector<32x32xf32>
    %22 = arith.addf %19, %21 : vector<32x32xf32>
    %23 = arith.truncf %22 : vector<32x32xf32> to vector<32x32xbf16>
    %c0_9 = arith.constant 0 : index
    %c0_10 = arith.constant 0 : index
    %24 = vector.load %arg4[%c0_9, %c0_10] : memref<32x32xbf16, #tpu.memory_space<vmem>>, vector<32x32xbf16>
    tpu.vector_store %arg4[%c0_9, %c0_10], %23 {strides = array<i32>} : memref<32x32xbf16, #tpu.memory_space<vmem>>, vector<32x32xbf16>,
    return
  }
  func.func @transform_0(%arg0: i32) -> (i32, i32) {
    %c0_i32 = arith.constant 0 : i32
    %c0_i32_0 = arith.constant 0 : i32
    return %arg0, %c0_i32 : i32, i32
  }
  func.func @transform_1(%arg0: i32) -> (i32, i32) {
    %c0_i32 = arith.constant 0 : i32
    %c0_i32_0 = arith.constant 0 : i32
    %c0_i32_1 = arith.constant 0 : i32
    return %c0_i32, %c0_i32_0 : i32, i32
  }
  func.func @transform_2(%arg0: i32) -> (i32, i32) {
    %c0_i32 = arith.constant 0 : i32
    %c0_i32_0 = arith.constant 0 : i32
    %c0_i32_1 = arith.constant 0 : i32
    return %c0_i32, %c0_i32_0 : i32, i32
  }
  func.func @transform_3(%arg0: i32) -> (i32, i32) {
    %c0_i32 = arith.constant 0 : i32
    %c0_i32_0 = arith.constant 0 : i32
    return %arg0, %c0_i32 : i32, i32
  }
}

module attributes {stable_mosaic.version = 11 : i64} {
  func.func @_flash_attn_kernel(%arg0: i32, %arg1: i32, %arg2: memref<1x2x8x16xbf16, #tpu.memory_space<vmem>>, %arg3: memref<1x2x8x16xbf16, #tpu.memory_space<vmem>>, %arg4: memref<1x2x8x16xbf16, #tpu.memory_space<vmem>>, %arg5: memref<1x1x8xf32, #tpu.memory_space<vmem>>, %arg6: memref<1x2x8x16xbf16, #tpu.memory_space<vmem>>, %arg7: memref<2x8x1xf32, #tpu.memory_space<vmem>>, %arg8: memref<2x8x1xf32, #tpu.memory_space<vmem>>, %arg9: memref<2x8x16xf32, #tpu.memory_space<vmem>>) attributes {dimension_semantics = [#tpu.dimension_semantics<parallel>, #tpu.dimension_semantics<arbitrary>], iteration_bounds = array<i64: 4, 1>, scalar_prefetch = 0 : i64, scratch_operands = 3 : i64, tpu.core_type = #tpu.core_type<tc>, window_params = [{transform_indices = @transform_0, window_bounds = array<i64: 1, 2, 8, 16>}, {transform_indices = @transform_1, window_bounds = array<i64: 1, 2, 8, 16>}, {transform_indices = @transform_2, window_bounds = array<i64: 1, 2, 8, 16>}, {transform_indices = @transform_3, window_bounds = array<i64: 1, 1, 8>}, {transform_indices = @transform_4, window_bounds = array<i64: 1, 2, 8, 16>}]} {
    %c0_i32 = arith.constant 0 : i32
    %0 = arith.cmpi eq, %arg1, %c0_i32 : i32
    %1 = arith.extui %0 : i1 to i32
    %c0_i32_0 = arith.constant 0 : i32
    %2 = arith.cmpi ne, %1, %c0_i32_0 : i32
    scf.if %2 {
      %cst_38 = arith.constant 0xFF800000 : f32
      %41 = vector.broadcast %cst_38 : f32 to vector<2x8x1xf32>
      %c0_39 = arith.constant 0 : index
      %c0_40 = arith.constant 0 : index
      %c0_41 = arith.constant 0 : index
      %42 = vector.load %arg7[%c0_39, %c0_40, %c0_41] : memref<2x8x1xf32, #tpu.memory_space<vmem>>, vector<2x8x1xf32>
      tpu.vector_store %arg7[%c0_39, %c0_40, %c0_41], %41 {strides = array<i32>} : memref<2x8x1xf32, #tpu.memory_space<vmem>>, vector<2x8x1xf32>,
      %cst_42 = arith.constant 0.000000e+00 : f32
      %43 = vector.broadcast %cst_42 : f32 to vector<2x8x1xf32>
      %c0_43 = arith.constant 0 : index
      %c0_44 = arith.constant 0 : index
      %c0_45 = arith.constant 0 : index
      %44 = vector.load %arg8[%c0_43, %c0_44, %c0_45] : memref<2x8x1xf32, #tpu.memory_space<vmem>>, vector<2x8x1xf32>
      tpu.vector_store %arg8[%c0_43, %c0_44, %c0_45], %43 {strides = array<i32>} : memref<2x8x1xf32, #tpu.memory_space<vmem>>, vector<2x8x1xf32>,
      %cst_46 = arith.constant 0.000000e+00 : f32
      %45 = vector.broadcast %cst_46 : f32 to vector<2x8x16xf32>
      %c0_47 = arith.constant 0 : index
      %c0_48 = arith.constant 0 : index
      %c0_49 = arith.constant 0 : index
      %46 = vector.load %arg9[%c0_47, %c0_48, %c0_49] : memref<2x8x16xf32, #tpu.memory_space<vmem>>, vector<2x8x16xf32>
      tpu.vector_store %arg9[%c0_47, %c0_48, %c0_49], %45 {strides = array<i32>} : memref<2x8x16xf32, #tpu.memory_space<vmem>>, vector<2x8x16xf32>,
    } else {
    }
    %c0 = arith.constant 0 : index
    %c0_1 = arith.constant 0 : index
    %c0_2 = arith.constant 0 : index
    %c0_3 = arith.constant 0 : index
    %3 = vector.load %arg2[%c0, %c0_1, %c0_2, %c0_3] : memref<1x2x8x16xbf16, #tpu.memory_space<vmem>>, vector<1x2x8x16xbf16>
    %4 = vector.shape_cast %3 : vector<1x2x8x16xbf16> to vector<2x8x16xbf16>
    %c0_4 = arith.constant 0 : index
    %c0_5 = arith.constant 0 : index
    %c0_6 = arith.constant 0 : index
    %c0_7 = arith.constant 0 : index
    %5 = vector.load %arg3[%c0_4, %c0_5, %c0_6, %c0_7] : memref<1x2x8x16xbf16, #tpu.memory_space<vmem>>, vector<1x2x8x16xbf16>
    %6 = vector.shape_cast %5 : vector<1x2x8x16xbf16> to vector<2x8x16xbf16>
    %c0_8 = arith.constant 0 : index
    %c0_9 = arith.constant 0 : index
    %c0_10 = arith.constant 0 : index
    %c0_11 = arith.constant 0 : index
    %7 = vector.load %arg4[%c0_8, %c0_9, %c0_10, %c0_11] : memref<1x2x8x16xbf16, #tpu.memory_space<vmem>>, vector<1x2x8x16xbf16>
    %8 = vector.shape_cast %7 : vector<1x2x8x16xbf16> to vector<2x8x16xbf16>
    "tpu.trace_start"() <{level = 10 : i32, message = "hqd,hkd->hqk"}> : () -> ()
    %cst = arith.constant dense<0.000000e+00> : vector<2x8x8xf32>
    %9 = tpu.matmul %4, %6, %cst {dimension_numbers = #tpu.dot_dimension_numbers<[2], [2], [1], [1], [0, 0, 0, 1, 1, 1], [0], [0]>} : vector<2x8x16xbf16>, vector<2x8x16xbf16>, vector<2x8x8xf32> -> vector<2x8x8xf32>
    "tpu.trace_stop"() : () -> ()
    %c0_12 = arith.constant 0 : index
    %c0_13 = arith.constant 0 : index
    %c0_14 = arith.constant 0 : index
    %10 = vector.load %arg5[%c0_12, %c0_13, %c0_14] : memref<1x1x8xf32, #tpu.memory_space<vmem>>, vector<1x1x8xf32>
    %11 = vector.shape_cast %10 : vector<1x1x8xf32> to vector<1x8xf32>
    %12 = vector.shape_cast %11 : vector<1x8xf32> to vector<1x1x8xf32>
    %13 = vector.broadcast %12 : vector<1x1x8xf32> to vector<2x8x8xf32>
    %14 = arith.addf %9, %13 : vector<2x8x8xf32>
    %c0_15 = arith.constant 0 : index
    %c0_16 = arith.constant 0 : index
    %c0_17 = arith.constant 0 : index
    %15 = vector.load %arg7[%c0_15, %c0_16, %c0_17] : memref<2x8x1xf32, #tpu.memory_space<vmem>>, vector<2x8x1xf32>
    %cst_18 = arith.constant dense<0xFF800000> : vector<2x8xf32>
    %16 = vector.multi_reduction <maximumf>, %14, %cst_18 [2] : vector<2x8x8xf32> to vector<2x8xf32>
    %17 = vector.shape_cast %16 : vector<2x8xf32> to vector<2x8x1xf32>
    %18 = arith.maximumf %15, %17 : vector<2x8x1xf32>
    %19 = arith.subf %15, %18 : vector<2x8x1xf32>
    %20 = math.exp %19 : vector<2x8x1xf32>
    %21 = vector.broadcast %18 : vector<2x8x1xf32> to vector<2x8x8xf32>
    %22 = arith.subf %14, %21 : vector<2x8x8xf32>
    %23 = math.exp %22 : vector<2x8x8xf32>
    %c0_19 = arith.constant 0 : index
    %c0_20 = arith.constant 0 : index
    %c0_21 = arith.constant 0 : index
    %24 = vector.load %arg8[%c0_19, %c0_20, %c0_21] : memref<2x8x1xf32, #tpu.memory_space<vmem>>, vector<2x8x1xf32>
    %25 = arith.mulf %20, %24 : vector<2x8x1xf32>
    %cst_22 = arith.constant dense<0.000000e+00> : vector<2x8xf32>
    %26 = vector.multi_reduction <add>, %23, %cst_22 [2] : vector<2x8x8xf32> to vector<2x8xf32>
    %27 = vector.shape_cast %26 : vector<2x8xf32> to vector<2x8x1xf32>
    %28 = arith.addf %25, %27 : vector<2x8x1xf32>
    %c0_23 = arith.constant 0 : index
    %c0_24 = arith.constant 0 : index
    %c0_25 = arith.constant 0 : index
    %29 = vector.load %arg8[%c0_23, %c0_24, %c0_25] : memref<2x8x1xf32, #tpu.memory_space<vmem>>, vector<2x8x1xf32>
    tpu.vector_store %arg8[%c0_23, %c0_24, %c0_25], %28 {strides = array<i32>} : memref<2x8x1xf32, #tpu.memory_space<vmem>>, vector<2x8x1xf32>,
    %c0_26 = arith.constant 0 : index
    %c0_27 = arith.constant 0 : index
    %c0_28 = arith.constant 0 : index
    %30 = vector.load %arg9[%c0_26, %c0_27, %c0_28] : memref<2x8x16xf32, #tpu.memory_space<vmem>>, vector<2x8x16xf32>
    %31 = vector.broadcast %20 : vector<2x8x1xf32> to vector<2x8x16xf32>
    %32 = arith.mulf %31, %30 : vector<2x8x16xf32>
    %33 = arith.truncf %23 : vector<2x8x8xf32> to vector<2x8x8xbf16>
    "tpu.trace_start"() <{level = 10 : i32, message = "hqk,hkd->hqd"}> : () -> ()
    %cst_29 = arith.constant dense<0.000000e+00> : vector<2x8x16xf32>
    %34 = tpu.matmul %33, %8, %cst_29 {dimension_numbers = #tpu.dot_dimension_numbers<[2], [1], [1], [2], [0, 0, 0, 1, 1, 2], [0], [0]>} : vector<2x8x8xbf16>, vector<2x8x16xbf16>, vector<2x8x16xf32> -> vector<2x8x16xf32>
    "tpu.trace_stop"() : () -> ()
    %35 = arith.addf %32, %34 : vector<2x8x16xf32>
    %c0_30 = arith.constant 0 : index
    %c0_31 = arith.constant 0 : index
    %c0_32 = arith.constant 0 : index
    %36 = vector.load %arg9[%c0_30, %c0_31, %c0_32] : memref<2x8x16xf32, #tpu.memory_space<vmem>>, vector<2x8x16xf32>
    tpu.vector_store %arg9[%c0_30, %c0_31, %c0_32], %35 {strides = array<i32>} : memref<2x8x16xf32, #tpu.memory_space<vmem>>, vector<2x8x16xf32>,
    %c0_33 = arith.constant 0 : index
    %c0_34 = arith.constant 0 : index
    %c0_35 = arith.constant 0 : index
    %37 = vector.load %arg7[%c0_33, %c0_34, %c0_35] : memref<2x8x1xf32, #tpu.memory_space<vmem>>, vector<2x8x1xf32>
    tpu.vector_store %arg7[%c0_33, %c0_34, %c0_35], %18 {strides = array<i32>} : memref<2x8x1xf32, #tpu.memory_space<vmem>>, vector<2x8x1xf32>,
    %c0_i32_36 = arith.constant 0 : i32
    %38 = arith.cmpi eq, %arg1, %c0_i32_36 : i32
    %39 = arith.extui %38 : i1 to i32
    %c0_i32_37 = arith.constant 0 : i32
    %40 = arith.cmpi ne, %39, %c0_i32_37 : i32
    scf.if %40 {
      %c0_38 = arith.constant 0 : index
      %c0_39 = arith.constant 0 : index
      %c0_40 = arith.constant 0 : index
      %41 = vector.load %arg8[%c0_38, %c0_39, %c0_40] : memref<2x8x1xf32, #tpu.memory_space<vmem>>, vector<2x8x1xf32>
      %42 = tpu.reciprocal %41 {approx = true} : vector<2x8x1xf32> -> vector<2x8x1xf32>
      %c0_41 = arith.constant 0 : index
      %c0_42 = arith.constant 0 : index
      %c0_43 = arith.constant 0 : index
      %43 = vector.load %arg9[%c0_41, %c0_42, %c0_43] : memref<2x8x16xf32, #tpu.memory_space<vmem>>, vector<2x8x16xf32>
      %44 = vector.broadcast %42 : vector<2x8x1xf32> to vector<2x8x16xf32>
      %45 = arith.mulf %43, %44 : vector<2x8x16xf32>
      %46 = arith.truncf %45 : vector<2x8x16xf32> to vector<2x8x16xbf16>
      %c0_44 = arith.constant 0 : index
      %c0_45 = arith.constant 0 : index
      %c0_46 = arith.constant 0 : index
      %c0_47 = arith.constant 0 : index
      %47 = vector.load %arg6[%c0_44, %c0_45, %c0_46, %c0_47] : memref<1x2x8x16xbf16, #tpu.memory_space<vmem>>, vector<1x2x8x16xbf16>
      %48 = vector.shape_cast %47 : vector<1x2x8x16xbf16> to vector<2x8x16xbf16>
      %49 = vector.shape_cast %46 : vector<2x8x16xbf16> to vector<1x2x8x16xbf16>
      tpu.vector_store %arg6[%c0_44, %c0_45, %c0_46, %c0_47], %49 {strides = array<i32>} : memref<1x2x8x16xbf16, #tpu.memory_space<vmem>>, vector<1x2x8x16xbf16>,
    } else {
    }
    return
  }
  func.func @transform_0(%arg0: i32, %arg1: i32) -> (i32, i32, i32, i32) {
    %c0_i32 = arith.constant 0 : i32
    %c0_i32_0 = arith.constant 0 : i32
    %c0_i32_1 = arith.constant 0 : i32
    %c0_i32_2 = arith.constant 0 : i32
    return %arg0, %c0_i32, %c0_i32_0, %c0_i32_1 : i32, i32, i32, i32
  }
  func.func @transform_1(%arg0: i32, %arg1: i32) -> (i32, i32, i32, i32) {
    %c0_i32 = arith.constant 0 : i32
    %c0_i32_0 = arith.constant 0 : i32
    %c0_i32_1 = arith.constant 0 : i32
    return %arg0, %c0_i32, %arg1, %c0_i32_0 : i32, i32, i32, i32
  }
  func.func @transform_2(%arg0: i32, %arg1: i32) -> (i32, i32, i32, i32) {
    %c0_i32 = arith.constant 0 : i32
    %c0_i32_0 = arith.constant 0 : i32
    %c0_i32_1 = arith.constant 0 : i32
    return %arg0, %c0_i32, %arg1, %c0_i32_0 : i32, i32, i32, i32
  }
  func.func @transform_3(%arg0: i32, %arg1: i32) -> (i32, i32, i32) {
    %c0_i32 = arith.constant 0 : i32
    %c0_i32_0 = arith.constant 0 : i32
    return %arg0, %c0_i32, %arg1 : i32, i32, i32
  }
  func.func @transform_4(%arg0: i32, %arg1: i32) -> (i32, i32, i32, i32) {
    %c0_i32 = arith.constant 0 : i32
    %c0_i32_0 = arith.constant 0 : i32
    %c0_i32_1 = arith.constant 0 : i32
    %c0_i32_2 = arith.constant 0 : i32
    return %arg0, %c0_i32, %c0_i32_0, %c0_i32_1 : i32, i32, i32, i32
  }
}

module attributes {stable_mosaic.version = 11 : i64} {
  func.func @_dense_add_ln_kernel(%arg0: i32, %arg1: i32, %arg2: memref<32x32xbf16, #tpu.memory_space<vmem>>, %arg3: memref<32x32xbf16, #tpu.memory_space<vmem>>, %arg4: memref<1x32xf32, #tpu.memory_space<vmem>>, %arg5: memref<32x32xbf16, #tpu.memory_space<vmem>>, %arg6: memref<1x32xf32, #tpu.memory_space<vmem>>, %arg7: memref<1x32xf32, #tpu.memory_space<vmem>>, %arg8: memref<32x32xbf16, #tpu.memory_space<vmem>>, %arg9: memref<32x32xf32, #tpu.memory_space<vmem>>) attributes {dimension_semantics = [#tpu.dimension_semantics<parallel>, #tpu.dimension_semantics<arbitrary>], iteration_bounds = array<i64: 1, 1>, scalar_prefetch = 0 : i64, scratch_operands = 1 : i64, tpu.core_type = #tpu.core_type<tc>, window_params = [{transform_indices = @transform_0, window_bounds = array<i64: 32, 32>}, {transform_indices = @transform_1, window_bounds = array<i64: 32, 32>}, {pipeline_mode = #tpu.pipeline_mode<synchronous>, transform_indices = @transform_2, window_bounds = array<i64: 1, 32>}, {transform_indices = @transform_3, window_bounds = array<i64: 32, 32>}, {pipeline_mode = #tpu.pipeline_mode<synchronous>, transform_indices = @transform_4, window_bounds = array<i64: 1, 32>}, {pipeline_mode = #tpu.pipeline_mode<synchronous>, transform_indices = @transform_5, window_bounds = array<i64: 1, 32>}, {transform_indices = @transform_6, window_bounds = array<i64: 32, 32>}]} {
    %c0_i32 = arith.constant 0 : i32
    %0 = arith.cmpi eq, %arg1, %c0_i32 : i32
    %1 = arith.extui %0 : i1 to i32
    %c0_i32_0 = arith.constant 0 : i32
    %2 = arith.cmpi ne, %1, %c0_i32_0 : i32
    scf.if %2 {
      %cst_10 = arith.constant 0.000000e+00 : f32
      %12 = vector.broadcast %cst_10 : f32 to vector<32x32xf32>
      %c0_11 = arith.constant 0 : index
      %c0_12 = arith.constant 0 : index
      %13 = vector.load %arg9[%c0_11, %c0_12] : memref<32x32xf32, #tpu.memory_space<vmem>>, vector<32x32xf32>
      tpu.vector_store %arg9[%c0_11, %c0_12], %12 {strides = array<i32>} : memref<32x32xf32, #tpu.memory_space<vmem>>, vector<32x32xf32>,
    } else {
    }
    %c0 = arith.constant 0 : index
    %c0_1 = arith.constant 0 : index
    %3 = vector.load %arg9[%c0, %c0_1] : memref<32x32xf32, #tpu.memory_space<vmem>>, vector<32x32xf32>
    %c0_2 = arith.constant 0 : index
    %c0_3 = arith.constant 0 : index
    %4 = vector.load %arg2[%c0_2, %c0_3] : memref<32x32xbf16, #tpu.memory_space<vmem>>, vector<32x32xbf16>
    %c0_4 = arith.constant 0 : index
    %c0_5 = arith.constant 0 : index
    %5 = vector.load %arg3[%c0_4, %c0_5] : memref<32x32xbf16, #tpu.memory_space<vmem>>, vector<32x32xbf16>
    %cst = arith.constant dense<0.000000e+00> : vector<32x32xf32>
    %6 = tpu.matmul %4, %5, %cst {dimension_numbers = #tpu.dot_dimension_numbers<[1], [0], [0], [1], [0, 0, 1, 1], [], []>} : vector<32x32xbf16>, vector<32x32xbf16>, vector<32x32xf32> -> vector<32x32xf32>
    %7 = arith.addf %3, %6 : vector<32x32xf32>
    %c0_6 = arith.constant 0 : index
    %c0_7 = arith.constant 0 : index
    %8 = vector.load %arg9[%c0_6, %c0_7] : memref<32x32xf32, #tpu.memory_space<vmem>>, vector<32x32xf32>
    tpu.vector_store %arg9[%c0_6, %c0_7], %7 {strides = array<i32>} : memref<32x32xf32, #tpu.memory_space<vmem>>, vector<32x32xf32>,
    %c0_i32_8 = arith.constant 0 : i32
    %9 = arith.cmpi eq, %arg1, %c0_i32_8 : i32
    %10 = arith.extui %9 : i1 to i32
    %c0_i32_9 = arith.constant 0 : i32
    %11 = arith.cmpi ne, %10, %c0_i32_9 : i32
    scf.if %11 {
      %c0_10 = arith.constant 0 : index
      %c0_11 = arith.constant 0 : index
      %12 = vector.load %arg9[%c0_10, %c0_11] : memref<32x32xf32, #tpu.memory_space<vmem>>, vector<32x32xf32>
      %c0_12 = arith.constant 0 : index
      %c0_13 = arith.constant 0 : index
      %13 = vector.load %arg4[%c0_12, %c0_13] : memref<1x32xf32, #tpu.memory_space<vmem>>, vector<1x32xf32>
      %14 = vector.broadcast %13 : vector<1x32xf32> to vector<32x32xf32>
      %15 = arith.addf %12, %14 : vector<32x32xf32>
      %c0_14 = arith.constant 0 : index
      %c0_15 = arith.constant 0 : index
      %16 = vector.load %arg5[%c0_14, %c0_15] : memref<32x32xbf16, #tpu.memory_space<vmem>>, vector<32x32xbf16>
      %17 = arith.extf %16 : vector<32x32xbf16> to vector<32x32xf32>
      %18 = arith.addf %15, %17 : vector<32x32xf32>
      %cst_16 = arith.constant dense<0.000000e+00> : vector<32xf32>
      %19 = vector.multi_reduction <add>, %18, %cst_16 [1] : vector<32x32xf32> to vector<32xf32>
      %20 = vector.shape_cast %19 : vector<32xf32> to vector<32x1xf32>
      %cst_17 = arith.constant 3.200000e+01 : f32
      %21 = vector.broadcast %cst_17 : f32 to vector<32x1xf32>
      %22 = arith.divf %20, %21 : vector<32x1xf32>
      %23 = vector.broadcast %22 : vector<32x1xf32> to vector<32x32xf32>
      %24 = arith.subf %18, %23 : vector<32x32xf32>
      %25 = arith.mulf %24, %24 : vector<32x32xf32>
      %cst_18 = arith.constant dense<0.000000e+00> : vector<32xf32>
      %26 = vector.multi_reduction <add>, %25, %cst_18 [1] : vector<32x32xf32> to vector<32xf32>
      %27 = vector.shape_cast %26 : vector<32xf32> to vector<32x1xf32>
      %cst_19 = arith.constant 3.200000e+01 : f32
      %28 = vector.broadcast %cst_19 : f32 to vector<32x1xf32>
      %29 = arith.divf %27, %28 : vector<32x1xf32>
      %cst_20 = arith.constant 9.99999996E-13 : f32
      %30 = vector.broadcast %cst_20 : f32 to vector<32x1xf32>
      %31 = arith.addf %29, %30 : vector<32x1xf32>
      %32 = math.rsqrt %31 : vector<32x1xf32>
      %33 = vector.broadcast %32 : vector<32x1xf32> to vector<32x32xf32>
      %34 = arith.mulf %24, %33 : vector<32x32xf32>
      %c0_21 = arith.constant 0 : index
      %c0_22 = arith.constant 0 : index
      %35 = vector.load %arg6[%c0_21, %c0_22] : memref<1x32xf32, #tpu.memory_space<vmem>>, vector<1x32xf32>
      %36 = vector.broadcast %35 : vector<1x32xf32> to vector<32x32xf32>
      %37 = arith.mulf %34, %36 : vector<32x32xf32>
      %c0_23 = arith.constant 0 : index
      %c0_24 = arith.constant 0 : index
      %38 = vector.load %arg7[%c0_23, %c0_24] : memref<1x32xf32, #tpu.memory_space<vmem>>, vector<1x32xf32>
      %39 = vector.broadcast %38 : vector<1x32xf32> to vector<32x32xf32>
      %40 = arith.addf %37, %39 : vector<32x32xf32>
      %41 = arith.truncf %40 : vector<32x32xf32> to vector<32x32xbf16>
      %c0_25 = arith.constant 0 : index
      %c0_26 = arith.constant 0 : index
      %42 = vector.load %arg8[%c0_25, %c0_26] : memref<32x32xbf16, #tpu.memory_space<vmem>>, vector<32x32xbf16>
      tpu.vector_store %arg8[%c0_25, %c0_26], %41 {strides = array<i32>} : memref<32x32xbf16, #tpu.memory_space<vmem>>, vector<32x32xbf16>,
    } else {
    }
    return
  }
  func.func @transform_0(%arg0: i32, %arg1: i32) -> (i32, i32) {
    %c0_i32 = arith.constant 0 : i32
    return %arg0, %arg1 : i32, i32
  }
  func.func @transform_1(%arg0: i32, %arg1: i32) -> (i32, i32) {
    %c0_i32 = arith.constant 0 : i32
    %c0_i32_0 = arith.constant 0 : i32
    return %arg1, %c0_i32 : i32, i32
  }
  func.func @transform_2(%arg0: i32, %arg1: i32) -> (i32, i32) {
    %c0_i32 = arith.constant 0 : i32
    %c0_i32_0 = arith.constant 0 : i32
    %c0_i32_1 = arith.constant 0 : i32
    return %c0_i32, %c0_i32_0 : i32, i32
  }
  func.func @transform_3(%arg0: i32, %arg1: i32) -> (i32, i32) {
    %c0_i32 = arith.constant 0 : i32
    %c0_i32_0 = arith.constant 0 : i32
    return %arg0, %c0_i32 : i32, i32
  }
  func.func @transform_4(%arg0: i32, %arg1: i32) -> (i32, i32) {
    %c0_i32 = arith.constant 0 : i32
    %c0_i32_0 = arith.constant 0 : i32
    %c0_i32_1 = arith.constant 0 : i32
    return %c0_i32, %c0_i32_0 : i32, i32
  }
  func.func @transform_5(%arg0: i32, %arg1: i32) -> (i32, i32) {
    %c0_i32 = arith.constant 0 : i32
    %c0_i32_0 = arith.constant 0 : i32
    %c0_i32_1 = arith.constant 0 : i32
    return %c0_i32, %c0_i32_0 : i32, i32
  }
  func.func @transform_6(%arg0: i32, %arg1: i32) -> (i32, i32) {
    %c0_i32 = arith.constant 0 : i32
    %c0_i32_0 = arith.constant 0 : i32
    return %arg0, %c0_i32 : i32, i32
  }
}

module attributes {stable_mosaic.version = 11 : i64} {
  func.func @_dense_kernel(%arg0: i32, %arg1: i32, %arg2: i32, %arg3: memref<32x32xbf16, #tpu.memory_space<vmem>>, %arg4: memref<32x64xbf16, #tpu.memory_space<vmem>>, %arg5: memref<1x64xf32, #tpu.memory_space<vmem>>, %arg6: memref<32x64xbf16, #tpu.memory_space<vmem>>, %arg7: memref<32x64xf32, #tpu.memory_space<vmem>>) attributes {dimension_semantics = [#tpu.dimension_semantics<parallel>, #tpu.dimension_semantics<parallel>, #tpu.dimension_semantics<arbitrary>], iteration_bounds = array<i64: 1, 1, 1>, scalar_prefetch = 0 : i64, scratch_operands = 1 : i64, tpu.core_type = #tpu.core_type<tc>, window_params = [{transform_indices = @transform_0, window_bounds = array<i64: 32, 32>}, {transform_indices = @transform_1, window_bounds = array<i64: 32, 64>}, {transform_indices = @transform_2, window_bounds = array<i64: 1, 64>}, {transform_indices = @transform_3, window_bounds = array<i64: 32, 64>}]} {
    %c0_i32 = arith.constant 0 : i32
    %0 = arith.cmpi eq, %arg2, %c0_i32 : i32
    %1 = arith.extui %0 : i1 to i32
    %c0_i32_0 = arith.constant 0 : i32
    %2 = arith.cmpi ne, %1, %c0_i32_0 : i32
    scf.if %2 {
      %cst_10 = arith.constant 0.000000e+00 : f32
      %12 = vector.broadcast %cst_10 : f32 to vector<32x64xf32>
      %c0_11 = arith.constant 0 : index
      %c0_12 = arith.constant 0 : index
      %13 = vector.load %arg7[%c0_11, %c0_12] : memref<32x64xf32, #tpu.memory_space<vmem>>, vector<32x64xf32>
      tpu.vector_store %arg7[%c0_11, %c0_12], %12 {strides = array<i32>} : memref<32x64xf32, #tpu.memory_space<vmem>>, vector<32x64xf32>,
    } else {
    }
    %c0 = arith.constant 0 : index
    %c0_1 = arith.constant 0 : index
    %3 = vector.load %arg7[%c0, %c0_1] : memref<32x64xf32, #tpu.memory_space<vmem>>, vector<32x64xf32>
    %c0_2 = arith.constant 0 : index
    %c0_3 = arith.constant 0 : index
    %4 = vector.load %arg3[%c0_2, %c0_3] : memref<32x32xbf16, #tpu.memory_space<vmem>>, vector<32x32xbf16>
    %c0_4 = arith.constant 0 : index
    %c0_5 = arith.constant 0 : index
    %5 = vector.load %arg4[%c0_4, %c0_5] : memref<32x64xbf16, #tpu.memory_space<vmem>>, vector<32x64xbf16>
    %cst = arith.constant dense<0.000000e+00> : vector<32x64xf32>
    %6 = tpu.matmul %4, %5, %cst {dimension_numbers = #tpu.dot_dimension_numbers<[1], [0], [0], [1], [0, 0, 1, 1], [], []>} : vector<32x32xbf16>, vector<32x64xbf16>, vector<32x64xf32> -> vector<32x64xf32>
    %7 = arith.addf %3, %6 : vector<32x64xf32>
    %c0_6 = arith.constant 0 : index
    %c0_7 = arith.constant 0 : index
    %8 = vector.load %arg7[%c0_6, %c0_7] : memref<32x64xf32, #tpu.memory_space<vmem>>, vector<32x64xf32>
    tpu.vector_store %arg7[%c0_6, %c0_7], %7 {strides = array<i32>} : memref<32x64xf32, #tpu.memory_space<vmem>>, vector<32x64xf32>,
    %c0_i32_8 = arith.constant 0 : i32
    %9 = arith.cmpi eq, %arg2, %c0_i32_8 : i32
    %10 = arith.extui %9 : i1 to i32
    %c0_i32_9 = arith.constant 0 : i32
    %11 = arith.cmpi ne, %10, %c0_i32_9 : i32
    scf.if %11 {
      %c0_10 = arith.constant 0 : index
      %c0_11 = arith.constant 0 : index
      %12 = vector.load %arg7[%c0_10, %c0_11] : memref<32x64xf32, #tpu.memory_space<vmem>>, vector<32x64xf32>
      %c0_12 = arith.constant 0 : index
      %c0_13 = arith.constant 0 : index
      %13 = vector.load %arg5[%c0_12, %c0_13] : memref<1x64xf32, #tpu.memory_space<vmem>>, vector<1x64xf32>
      %14 = vector.broadcast %13 : vector<1x64xf32> to vector<32x64xf32>
      %15 = arith.addf %12, %14 : vector<32x64xf32>
      %cst_14 = arith.constant 5.000000e-01 : f32
      %16 = vector.broadcast %cst_14 : f32 to vector<32x64xf32>
      %17 = arith.mulf %16, %15 : vector<32x64xf32>
      %cst_15 = arith.constant 4.471500e-02 : f32
      %18 = vector.broadcast %cst_15 : f32 to vector<32x64xf32>
      %19 = arith.mulf %18, %15 : vector<32x64xf32>
      %20 = arith.mulf %19, %15 : vector<32x64xf32>
      %21 = arith.mulf %20, %15 : vector<32x64xf32>
      %22 = arith.addf %15, %21 : vector<32x64xf32>
      %cst_16 = arith.constant 0.797884583 : f32
      %23 = vector.broadcast %cst_16 : f32 to vector<32x64xf32>
      %24 = arith.mulf %23, %22 : vector<32x64xf32>
      %25 = math.tanh %24 : vector<32x64xf32>
      %cst_17 = arith.constant 1.000000e+00 : f32
      %26 = vector.broadcast %cst_17 : f32 to vector<32x64xf32>
      %27 = arith.addf %26, %25 : vector<32x64xf32>
      %28 = arith.mulf %17, %27 : vector<32x64xf32>
      %29 = arith.truncf %28 : vector<32x64xf32> to vector<32x64xbf16>
      %c0_18 = arith.constant 0 : index
      %c0_19 = arith.constant 0 : index
      %30 = vector.load %arg6[%c0_18, %c0_19] : memref<32x64xbf16, #tpu.memory_space<vmem>>, vector<32x64xbf16>
      tpu.vector_store %arg6[%c0_18, %c0_19], %29 {strides = array<i32>} : memref<32x64xbf16, #tpu.memory_space<vmem>>, vector<32x64xbf16>,
    } else {
    }
    return
  }
  func.func @transform_0(%arg0: i32, %arg1: i32, %arg2: i32) -> (i32, i32) {
    %c0_i32 = arith.constant 0 : i32
    return %arg0, %arg2 : i32, i32
  }
  func.func @transform_1(%arg0: i32, %arg1: i32, %arg2: i32) -> (i32, i32) {
    %c0_i32 = arith.constant 0 : i32
    return %arg2, %arg1 : i32, i32
  }
  func.func @transform_2(%arg0: i32, %arg1: i32, %arg2: i32) -> (i32, i32) {
    %c0_i32 = arith.constant 0 : i32
    %c0_i32_0 = arith.constant 0 : i32
    return %c0_i32, %arg1 : i32, i32
  }
  func.func @transform_3(%arg0: i32, %arg1: i32, %arg2: i32) -> (i32, i32) {
    %c0_i32 = arith.constant 0 : i32
    return %arg0, %arg1 : i32, i32
  }
}

module attributes {stable_mosaic.version = 11 : i64} {
  func.func @_dense_add_ln_kernel(%arg0: i32, %arg1: i32, %arg2: memref<32x64xbf16, #tpu.memory_space<vmem>>, %arg3: memref<64x32xbf16, #tpu.memory_space<vmem>>, %arg4: memref<1x32xf32, #tpu.memory_space<vmem>>, %arg5: memref<32x32xbf16, #tpu.memory_space<vmem>>, %arg6: memref<1x32xf32, #tpu.memory_space<vmem>>, %arg7: memref<1x32xf32, #tpu.memory_space<vmem>>, %arg8: memref<32x32xbf16, #tpu.memory_space<vmem>>, %arg9: memref<32x32xf32, #tpu.memory_space<vmem>>) attributes {dimension_semantics = [#tpu.dimension_semantics<parallel>, #tpu.dimension_semantics<arbitrary>], iteration_bounds = array<i64: 1, 1>, scalar_prefetch = 0 : i64, scratch_operands = 1 : i64, tpu.core_type = #tpu.core_type<tc>, window_params = [{transform_indices = @transform_0, window_bounds = array<i64: 32, 64>}, {transform_indices = @transform_1, window_bounds = array<i64: 64, 32>}, {pipeline_mode = #tpu.pipeline_mode<synchronous>, transform_indices = @transform_2, window_bounds = array<i64: 1, 32>}, {transform_indices = @transform_3, window_bounds = array<i64: 32, 32>}, {pipeline_mode = #tpu.pipeline_mode<synchronous>, transform_indices = @transform_4, window_bounds = array<i64: 1, 32>}, {pipeline_mode = #tpu.pipeline_mode<synchronous>, transform_indices = @transform_5, window_bounds = array<i64: 1, 32>}, {transform_indices = @transform_6, window_bounds = array<i64: 32, 32>}]} {
    %c0_i32 = arith.constant 0 : i32
    %0 = arith.cmpi eq, %arg1, %c0_i32 : i32
    %1 = arith.extui %0 : i1 to i32
    %c0_i32_0 = arith.constant 0 : i32
    %2 = arith.cmpi ne, %1, %c0_i32_0 : i32
    scf.if %2 {
      %cst_10 = arith.constant 0.000000e+00 : f32
      %12 = vector.broadcast %cst_10 : f32 to vector<32x32xf32>
      %c0_11 = arith.constant 0 : index
      %c0_12 = arith.constant 0 : index
      %13 = vector.load %arg9[%c0_11, %c0_12] : memref<32x32xf32, #tpu.memory_space<vmem>>, vector<32x32xf32>
      tpu.vector_store %arg9[%c0_11, %c0_12], %12 {strides = array<i32>} : memref<32x32xf32, #tpu.memory_space<vmem>>, vector<32x32xf32>,
    } else {
    }
    %c0 = arith.constant 0 : index
    %c0_1 = arith.constant 0 : index
    %3 = vector.load %arg9[%c0, %c0_1] : memref<32x32xf32, #tpu.memory_space<vmem>>, vector<32x32xf32>
    %c0_2 = arith.constant 0 : index
    %c0_3 = arith.constant 0 : index
    %4 = vector.load %arg2[%c0_2, %c0_3] : memref<32x64xbf16, #tpu.memory_space<vmem>>, vector<32x64xbf16>
    %c0_4 = arith.constant 0 : index
    %c0_5 = arith.constant 0 : index
    %5 = vector.load %arg3[%c0_4, %c0_5] : memref<64x32xbf16, #tpu.memory_space<vmem>>, vector<64x32xbf16>
    %cst = arith.constant dense<0.000000e+00> : vector<32x32xf32>
    %6 = tpu.matmul %4, %5, %cst {dimension_numbers = #tpu.dot_dimension_numbers<[1], [0], [0], [1], [0, 0, 1, 1], [], []>} : vector<32x64xbf16>, vector<64x32xbf16>, vector<32x32xf32> -> vector<32x32xf32>
    %7 = arith.addf %3, %6 : vector<32x32xf32>
    %c0_6 = arith.constant 0 : index
    %c0_7 = arith.constant 0 : index
    %8 = vector.load %arg9[%c0_6, %c0_7] : memref<32x32xf32, #tpu.memory_space<vmem>>, vector<32x32xf32>
    tpu.vector_store %arg9[%c0_6, %c0_7], %7 {strides = array<i32>} : memref<32x32xf32, #tpu.memory_space<vmem>>, vector<32x32xf32>,
    %c0_i32_8 = arith.constant 0 : i32
    %9 = arith.cmpi eq, %arg1, %c0_i32_8 : i32
    %10 = arith.extui %9 : i1 to i32
    %c0_i32_9 = arith.constant 0 : i32
    %11 = arith.cmpi ne, %10, %c0_i32_9 : i32
    scf.if %11 {
      %c0_10 = arith.constant 0 : index
      %c0_11 = arith.constant 0 : index
      %12 = vector.load %arg9[%c0_10, %c0_11] : memref<32x32xf32, #tpu.memory_space<vmem>>, vector<32x32xf32>
      %c0_12 = arith.constant 0 : index
      %c0_13 = arith.constant 0 : index
      %13 = vector.load %arg4[%c0_12, %c0_13] : memref<1x32xf32, #tpu.memory_space<vmem>>, vector<1x32xf32>
      %14 = vector.broadcast %13 : vector<1x32xf32> to vector<32x32xf32>
      %15 = arith.addf %12, %14 : vector<32x32xf32>
      %c0_14 = arith.constant 0 : index
      %c0_15 = arith.constant 0 : index
      %16 = vector.load %arg5[%c0_14, %c0_15] : memref<32x32xbf16, #tpu.memory_space<vmem>>, vector<32x32xbf16>
      %17 = arith.extf %16 : vector<32x32xbf16> to vector<32x32xf32>
      %18 = arith.addf %15, %17 : vector<32x32xf32>
      %cst_16 = arith.constant dense<0.000000e+00> : vector<32xf32>
      %19 = vector.multi_reduction <add>, %18, %cst_16 [1] : vector<32x32xf32> to vector<32xf32>
      %20 = vector.shape_cast %19 : vector<32xf32> to vector<32x1xf32>
      %cst_17 = arith.constant 3.200000e+01 : f32
      %21 = vector.broadcast %cst_17 : f32 to vector<32x1xf32>
      %22 = arith.divf %20, %21 : vector<32x1xf32>
      %23 = vector.broadcast %22 : vector<32x1xf32> to vector<32x32xf32>
      %24 = arith.subf %18, %23 : vector<32x32xf32>
      %25 = arith.mulf %24, %24 : vector<32x32xf32>
      %cst_18 = arith.constant dense<0.000000e+00> : vector<32xf32>
      %26 = vector.multi_reduction <add>, %25, %cst_18 [1] : vector<32x32xf32> to vector<32xf32>
      %27 = vector.shape_cast %26 : vector<32xf32> to vector<32x1xf32>
      %cst_19 = arith.constant 3.200000e+01 : f32
      %28 = vector.broadcast %cst_19 : f32 to vector<32x1xf32>
      %29 = arith.divf %27, %28 : vector<32x1xf32>
      %cst_20 = arith.constant 9.99999996E-13 : f32
      %30 = vector.broadcast %cst_20 : f32 to vector<32x1xf32>
      %31 = arith.addf %29, %30 : vector<32x1xf32>
      %32 = math.rsqrt %31 : vector<32x1xf32>
      %33 = vector.broadcast %32 : vector<32x1xf32> to vector<32x32xf32>
      %34 = arith.mulf %24, %33 : vector<32x32xf32>
      %c0_21 = arith.constant 0 : index
      %c0_22 = arith.constant 0 : index
      %35 = vector.load %arg6[%c0_21, %c0_22] : memref<1x32xf32, #tpu.memory_space<vmem>>, vector<1x32xf32>
      %36 = vector.broadcast %35 : vector<1x32xf32> to vector<32x32xf32>
      %37 = arith.mulf %34, %36 : vector<32x32xf32>
      %c0_23 = arith.constant 0 : index
      %c0_24 = arith.constant 0 : index
      %38 = vector.load %arg7[%c0_23, %c0_24] : memref<1x32xf32, #tpu.memory_space<vmem>>, vector<1x32xf32>
      %39 = vector.broadcast %38 : vector<1x32xf32> to vector<32x32xf32>
      %40 = arith.addf %37, %39 : vector<32x32xf32>
      %41 = arith.truncf %40 : vector<32x32xf32> to vector<32x32xbf16>
      %c0_25 = arith.constant 0 : index
      %c0_26 = arith.constant 0 : index
      %42 = vector.load %arg8[%c0_25, %c0_26] : memref<32x32xbf16, #tpu.memory_space<vmem>>, vector<32x32xbf16>
      tpu.vector_store %arg8[%c0_25, %c0_26], %41 {strides = array<i32>} : memref<32x32xbf16, #tpu.memory_space<vmem>>, vector<32x32xbf16>,
    } else {
    }
    return
  }
  func.func @transform_0(%arg0: i32, %arg1: i32) -> (i32, i32) {
    %c0_i32 = arith.constant 0 : i32
    return %arg0, %arg1 : i32, i32
  }
  func.func @transform_1(%arg0: i32, %arg1: i32) -> (i32, i32) {
    %c0_i32 = arith.constant 0 : i32
    %c0_i32_0 = arith.constant 0 : i32
    return %arg1, %c0_i32 : i32, i32
  }
  func.func @transform_2(%arg0: i32, %arg1: i32) -> (i32, i32) {
    %c0_i32 = arith.constant 0 : i32
    %c0_i32_0 = arith.constant 0 : i32
    %c0_i32_1 = arith.constant 0 : i32
    return %c0_i32, %c0_i32_0 : i32, i32
  }
  func.func @transform_3(%arg0: i32, %arg1: i32) -> (i32, i32) {
    %c0_i32 = arith.constant 0 : i32
    %c0_i32_0 = arith.constant 0 : i32
    return %arg0, %c0_i32 : i32, i32
  }
  func.func @transform_4(%arg0: i32, %arg1: i32) -> (i32, i32) {
    %c0_i32 = arith.constant 0 : i32
    %c0_i32_0 = arith.constant 0 : i32
    %c0_i32_1 = arith.constant 0 : i32
    return %c0_i32, %c0_i32_0 : i32, i32
  }
  func.func @transform_5(%arg0: i32, %arg1: i32) -> (i32, i32) {
    %c0_i32 = arith.constant 0 : i32
    %c0_i32_0 = arith.constant 0 : i32
    %c0_i32_1 = arith.constant 0 : i32
    return %c0_i32, %c0_i32_0 : i32, i32
  }
  func.func @transform_6(%arg0: i32, %arg1: i32) -> (i32, i32) {
    %c0_i32 = arith.constant 0 : i32
    %c0_i32_0 = arith.constant 0 : i32
    return %arg0, %c0_i32 : i32, i32
  }
}

</mosaic_0001>

<llo_original>
// kernel: bbfc_forward.12
$region0: #{bbfc_forward.12}
  #allocation0 [shape = 'u32[]', space=smem, size = 0x4, offset = 0x4, fixed_abs, tag = 'smem constant byte address 0x4 - core index']
  #allocation1 [shape = 'u32[144,128]{1,0:T(1,128)}', space=vmem, size = 0x12000, scoped, tag = 'internal scratch']
  #allocation2 [shape = 'f32[32,96]{1,0:T(8,128)}', space=vmem, size = 0x4000, scoped, tag = 'scratch operand']
  %s0 = inlined_call_operand.hbm [shape: bf16[32,32], index: 0, kind: input, shape index: {}]
  %s1 = inlined_call_operand.hbm [shape: bf16[32,96], index: 1, kind: input, shape index: {}]
  %s2 = inlined_call_operand.hbm [shape: f32[1,96], index: 2, kind: input, shape index: {}]
  %s3 = inlined_call_operand.hbm [shape: bf16[32,96], index: 3, kind: output, shape index: {}]
  %s4 = sld [smem:[#allocation0]]
  $region42: #{bbfc_forward.12} parent=0
    _
  %s6 = ssub.s32 1, %s4
  %s7 = scalar_select 0, %s6, %s4
  $region1: #{bbfc_forward.12} parent=0
    #allocation3 [shape = 'u8[8192]{0}', space=vmem, size = 0x2000, scoped, tag = 'input window, operand 0, single buffered']
    #allocation4 [shape = 's32[1]{0}', space=sflag, size = 0x4, scoped, tag = 'scoped memory for bbfc_forward.12']
    #allocation5 [shape = 's32[1]{0}', space=sflag, size = 0x4, scoped, tag = 'scoped memory for bbfc_forward.12']
    #allocation6 [shape = 'u8[8192]{0}', space=vmem, size = 0x2000, scoped, tag = 'input window, operand 1, single buffered']
    #allocation7 [shape = 's32[1]{0}', space=sflag, size = 0x4, scoped, tag = 'scoped memory for bbfc_forward.12']
    #allocation8 [shape = 'u8[512]{0}', space=vmem, size = 0x400, scoped, tag = 'input window, operand 2, single buffered']
    #allocation9 [shape = 'u8[8192]{0}', space=vmem, size = 0x2000, scoped, tag = 'output window, operand 0, single buffered']
    %8 = vsyncpa [#allocation4], 0
    %9 = vsyncpa [#allocation7], 0
    %10 = vsyncpa [#allocation5], 0
    // Predicated region
    $region2: #{bbfc_forward.12} parent=1 // pred_check
      _
    $region3: #{bbfc_forward.12} parent=1 // pred_check_branch
      %12 = sbr.rel (0) target = $region5
    $region4: #{bbfc_forward.12} parent=1 // pred_region
      %s14 = ssub.s32 256, 256
      %15 = vsyncadd [#allocation4], %s14
      %s16 = sshll.u32 [#allocation3], 4
      %s17 = int_to_ptr.vmem [resolvable:$true] %s16
      %22 = dma.hbm_to_vmem [thread:$0]  %s0, 256, %s17, [#allocation4], 64, 64, 4
    $region5: #{bbfc_forward.12} parent=1 // pred_fallthru
      _
    // Predicated region
    $region6: #{bbfc_forward.12} parent=1 // pred_check
      _
    $region7: #{bbfc_forward.12} parent=1 // pred_check_branch
      %24 = sbr.rel (0) target = $region9
    $region8: #{bbfc_forward.12} parent=1 // pred_region
      %s26 = ssub.s32 256, 256
      %27 = vsyncadd [#allocation7], %s26
      %s28 = sshll.u32 [#allocation6], 4
      %s29 = int_to_ptr.vmem [resolvable:$true] %s28
      %34 = dma.hbm_to_vmem [thread:$0]  %s1, 256, %s29, [#allocation7], 64, 64, 4
    $region9: #{bbfc_forward.12} parent=1 // pred_fallthru
      _
    // Predicated region
    $region10: #{bbfc_forward.12} parent=1 // pred_check
      _
    $region11: #{bbfc_forward.12} parent=1 // pred_check_branch
      %36 = sbr.rel (0) target = $region13
    $region12: #{bbfc_forward.12} parent=1 // pred_region
      %s38 = ssub.s32 16, 16
      %39 = vsyncadd [#allocation7], %s38
      %s41 = sshll.u32 [#allocation8], 4
      %s42 = int_to_ptr.vmem [resolvable:$true] %s41
      %44 = dma.hbm_to_vmem [thread:$0]  %s2, 16, %s42, [#allocation7]
    $region13: #{bbfc_forward.12} parent=1 // pred_fallthru
      _
    // Predicated region
    $region14: #{bbfc_forward.12} parent=1 // pred_check
      _
    $region15: #{bbfc_forward.12} parent=1 // pred_check_branch
      %46 = sbr.rel (0) target = $region17
    $region16: #{bbfc_forward.12} parent=1 // pred_region
      %47 = dma.done [#allocation4], 256
    $region17: #{bbfc_forward.12} parent=1 // pred_fallthru
      _
    // Predicated region
    $region18: #{bbfc_forward.12} parent=1 // pred_check
      _
    $region19: #{bbfc_forward.12} parent=1 // pred_check_branch
      %49 = sbr.rel (0) target = $region21
    $region20: #{bbfc_forward.12} parent=1 // pred_region
      %50 = dma.done [#allocation7], 256
    $region21: #{bbfc_forward.12} parent=1 // pred_fallthru
      _
    // Predicated region
    $region22: #{bbfc_forward.12} parent=1 // pred_check
      _
    $region23: #{bbfc_forward.12} parent=1 // pred_check_branch
      %52 = sbr.rel (0) target = $region25
    $region24: #{bbfc_forward.12} parent=1 // pred_region
      %53 = dma.done [#allocation7], 16
    $region25: #{bbfc_forward.12} parent=1 // pred_fallthru
      _
    %p55 = scmp.eq.s32.totalorder 0, 0
    // Predicated region
    $region26: #{bbfc_forward.12} parent=1 // pred_check
      %p56 = pneg %p55
    $region27: #{bbfc_forward.12} parent=1 // pred_check_branch
      %58 = sbr.rel (%p56) target = $region29
    $region28: #{bbfc_forward.12} parent=1 // pred_region
      %vm59 = vcmask 785408
      %60 = vst.msk [vmem:[#allocation2] sm:$0xff] %vm59, 0.0
      %61 = vst.msk [vmem:[#allocation2 + $0x8] sm:$0xff] %vm59, 0.0
      %62 = vst.msk [vmem:[#allocation2 + $0x10] sm:$0xff] %vm59, 0.0
      %63 = vst.msk [vmem:[#allocation2 + $0x18] sm:$0xff] %vm59, 0.0
    $region29: #{bbfc_forward.12} parent=1 // pred_fallthru
      _
    %v64 = vld [vmem:[#allocation2] sm:$0xff]
    %v65 = vld [vmem:[#allocation2 + $0x8] sm:$0xff]
    %v66 = vld [vmem:[#allocation2 + $0x10] sm:$0xff]
    %v67 = vld [vmem:[#allocation2 + $0x18] sm:$0xff]
    %v68 = vld [vmem:[#allocation3] sm:$0xf]
    %v69 = vld [vmem:[#allocation3 + $0x4] sm:$0xf]
    %v70 = vld [vmem:[#allocation3 + $0x8] sm:$0xf]
    %v71 = vld [vmem:[#allocation3 + $0xc] sm:$0xf]
    %v72 = vld [vmem:[#allocation6] sm:$0xf]
    %v73 = vld [vmem:[#allocation6 + $0x4] sm:$0xf]
    %v74 = vld [vmem:[#allocation6 + $0x8] sm:$0xf]
    %v75 = vld [vmem:[#allocation6 + $0xc] sm:$0xf]
    %v80 = vunpack.c.l.b16 %v68
    %v81 = vunpack.c.l.b16 %v69
    %v82 = vunpack.c.l.b16 %v70
    %v83 = vunpack.c.l.b16 %v71
    %v84 = vpack.c.b16 %v81, %v80
    %v85 = vpack.c.b16 %v83, %v82
    %v90 = vunpack.c.l.b16 %v72
    %v91 = vunpack.c.l.b16 %v73
    %v92 = vunpack.c.l.b16 %v74
    %v93 = vunpack.c.l.b16 %v75
    %v94 = vpack.c.b16 %v91, %v90
    %v95 = vpack.c.b16 %v93, %v92
    %vm98 = vcmask 261120
    %v100 = vsel %vm98, %v84, 0
    %v103 = vsel %vm98, %v85, 0
    %105 = vmatprep.subr.bf16.mxu0 0
    %106 = vmatpush1.bf16.msra.mxu0 %v94
    %107 = vmatprep.subr.bf16.mxu0 0
    %108 = vmatpush1.bf16.msra.mxu0 %v95
    %109 = vmatprep.subr.bf16.mxu0 0
    %110 = vmatpush1.bf16.msra.mxu0 0
    %111 = vmatprep.subr.bf16.mxu0 0
    %112 = vmatpush1.bf16.msra.mxu0 0
    %113 = vmatprep.subr.bf16.mxu0 0
    %114 = vmatpush1.bf16.msra.mxu0 0
    %115 = vmatprep.subr.bf16.mxu0 0
    %116 = vmatpush1.bf16.msra.mxu0 0
    %117 = vmatprep.subr.bf16.mxu0 0
    %118 = vmatpush1.bf16.msra.mxu0 0
    %119 = vmatprep.subr.bf16.mxu0 0
    %120 = vmatpush1.bf16.msra.mxu0 0
    %121 = vmatprep.subr.bf16.mxu0 0
    %122 = vmatpush1.bf16.msra.mxu0 0
    %123 = vmatprep.subr.bf16.mxu0 0
    %124 = vmatpush1.bf16.msra.mxu0 0
    %125 = vmatprep.subr.bf16.mxu0 0
    %126 = vmatpush1.bf16.msra.mxu0 0
    %127 = vmatprep.subr.bf16.mxu0 0
    %128 = vmatpush1.bf16.msra.mxu0 0
    %129 = vmatprep.subr.bf16.mxu0 0
    %130 = vmatpush1.bf16.msra.mxu0 0
    %131 = vmatprep.subr.bf16.mxu0 0
    %132 = vmatpush1.bf16.msra.mxu0 0
    %133 = vmatprep.subr.bf16.mxu0 0
    %134 = vmatpush1.bf16.msra.mxu0 0
    %135 = vmatprep.subr.bf16.mxu0 0
    %136 = vmatpush1.bf16.msra.mxu0 0
    %137 = vmatprep.mubr.bf16.mxu0 0
    %138 = vmatmul.mubr.bf16.gmra.mrb[0].mxu0 %v100
    %v139 = vpop.f32.mrb[0].mxu0
    %v140 = vadd.f32 0.0, %v139
    %v141 = vpop.f32.mrb[0].mxu0
    %v142 = vpop.f32.mrb[0].mxu0
    %v143 = vadd.f32 0.0, %v142
    %v144 = vpop.f32.mrb[0].mxu0
    %145 = vmatprep.mubr.bf16.mxu0 0
    %146 = vmatmul.mubr.bf16.gmra.mrb[0].mxu0 %v103
    %v147 = vpop.f32.mrb[0].mxu0
    %v148 = vadd.f32 0.0, %v147
    %v149 = vpop.f32.mrb[0].mxu0
    %v150 = vpop.f32.mrb[0].mxu0
    %v151 = vadd.f32 0.0, %v150
    %v152 = vpop.f32.mrb[0].mxu0
    %153 = vdwg.mxu0
    %v154 = vadd.f32 %v64, %v140
    %v155 = vadd.f32 %v65, %v143
    %v156 = vadd.f32 %v66, %v148
    %v157 = vadd.f32 %v67, %v151
    %vm158 = vcmask 785408
    %159 = vst.msk [vmem:[#allocation2] sm:$0xff] %vm158, %v154
    %160 = vst.msk [vmem:[#allocation2 + $0x8] sm:$0xff] %vm158, %v155
    %161 = vst.msk [vmem:[#allocation2 + $0x10] sm:$0xff] %vm158, %v156
    %162 = vst.msk [vmem:[#allocation2 + $0x18] sm:$0xff] %vm158, %v157
    // Predicated region
    $region30: #{bbfc_forward.12} parent=1 // pred_check
      %p163 = pneg %p55
    $region31: #{bbfc_forward.12} parent=1 // pred_check_branch
      %165 = sbr.rel (%p163) target = $region33
    $region32: #{bbfc_forward.12} parent=1 // pred_region
      %v166 = vld [vmem:[#allocation2] sm:$0xff]
      %v167 = vld [vmem:[#allocation2 + $0x8] sm:$0xff]
      %v168 = vld [vmem:[#allocation2 + $0x10] sm:$0xff]
      %v169 = vld [vmem:[#allocation2 + $0x18] sm:$0xff]
      %v170 = vld [vmem:[#allocation8] sm:$0x1]
      %v172 = vlaneseq
      %v173 = vshrl.u32 %v172, 7
      %v174 = vsub.s32 0, %v173
      %v175 = vrot.slane %v170, %v174
      %v177 = vadd.f32 %v166, %v175
      %v178 = vadd.f32 %v167, %v175
      %v179 = vadd.f32 %v168, %v175
      %v180 = vadd.f32 %v169, %v175
      %v181 = vpack.c.bf16 %v178, %v177
      %v182 = vpack.c.bf16 %v180, %v179
      %v185 = vunpack.c.l.b16 %v181
      %v186 = vunpack.c.h.b16 %v181
      %v187 = vunpack.c.l.b16 %v182
      %v188 = vunpack.c.h.b16 %v182
      %v189 = vpack.c.b16 %v185, %v185
      %v190 = vpack.c.b16 %v186, %v186
      %v191 = vpack.c.b16 %v187, %v187
      %v192 = vpack.c.b16 %v188, %v188
      %vm197 = vcmask 781312
      %198 = vst.msk [vmem:[#allocation9] sm:$0xf] %vm197, %v189
      %199 = vst.msk [vmem:[#allocation9 + $0x4] sm:$0xf] %vm197, %v190
      %200 = vst.msk [vmem:[#allocation9 + $0x8] sm:$0xf] %vm197, %v191
      %201 = vst.msk [vmem:[#allocation9 + $0xc] sm:$0xf] %vm197, %v192
    $region33: #{bbfc_forward.12} parent=1 // pred_fallthru
      _
    // Predicated region
    $region34: #{bbfc_forward.12} parent=1 // pred_check
      _
    $region35: #{bbfc_forward.12} parent=1 // pred_check_branch
      %203 = sbr.rel (0) target = $region37
    $region36: #{bbfc_forward.12} parent=1 // pred_region
      %s205 = ssub.s32 256, 256
      %206 = vsyncadd [#allocation5], %s205
      %s207 = sshll.u32 [#allocation9], 4
      %s208 = int_to_ptr.vmem [resolvable:$true] %s207
      %213 = dma.vmem_to_hbm [thread:$0]  %s208, 256, %s3, [#allocation5], 64, 64, 4
    $region37: #{bbfc_forward.12} parent=1 // pred_fallthru
      _
    // Predicated region
    $region38: #{bbfc_forward.12} parent=1 // pred_check
      _
    $region39: #{bbfc_forward.12} parent=1 // pred_check_branch
      %215 = sbr.rel (0) target = $region41
    $region40: #{bbfc_forward.12} parent=1 // pred_region
      %216 = dma.done [#allocation5], 256
    $region41: #{bbfc_forward.12} parent=1 // pred_fallthru
      _
    %217 = vsyncpa [#allocation4], 1
    %218 = vsyncpa [#allocation7], 1
    %219 = vsyncpa [#allocation5], 1

// kernel: bbfc_forward.11
$region0: #{bbfc_forward.11}
  #allocation0 [shape = 'u32[]', space=smem, size = 0x4, offset = 0x4, fixed_abs, tag = 'smem constant byte address 0x4 - core index']
  #allocation1 [shape = 'u32[144,128]{1,0:T(1,128)}', space=vmem, size = 0x12000, scoped, tag = 'internal scratch']
  %s0 = inlined_call_operand.hbm [shape: f32[32,32], index: 0, kind: input, shape index: {}]
  %s1 = inlined_call_operand.hbm [shape: f32[1,32], index: 1, kind: input, shape index: {}]
  %s2 = inlined_call_operand.hbm [shape: f32[1,32], index: 2, kind: input, shape index: {}]
  %s3 = inlined_call_operand.hbm [shape: bf16[32,32], index: 3, kind: output, shape index: {}]
  %s4 = sld [smem:[#allocation0]]
  $region34: #{bbfc_forward.11} parent=0
    _
  %s6 = ssub.s32 1, %s4
  %s7 = scalar_select 0, %s6, %s4
  $region1: #{bbfc_forward.11} parent=0
    #allocation2 [shape = 'u8[16384]{0}', space=vmem, size = 0x4000, scoped, tag = 'input window, operand 0, single buffered']
    #allocation3 [shape = 's32[1]{0}', space=sflag, size = 0x4, scoped, tag = 'scoped memory for bbfc_forward.11']
    #allocation4 [shape = 's32[1]{0}', space=sflag, size = 0x4, scoped, tag = 'scoped memory for bbfc_forward.11']
    #allocation5 [shape = 'u8[512]{0}', space=vmem, size = 0x400, scoped, tag = 'input window, operand 1, single buffered']
    #allocation6 [shape = 's32[1]{0}', space=sflag, size = 0x4, scoped, tag = 'scoped memory for bbfc_forward.11']
    #allocation7 [shape = 'u8[512]{0}', space=vmem, size = 0x400, scoped, tag = 'input window, operand 2, single buffered']
    #allocation8 [shape = 'u8[8192]{0}', space=vmem, size = 0x2000, scoped, tag = 'output window, operand 0, single buffered']
    %8 = vsyncpa [#allocation3], 0
    %9 = vsyncpa [#allocation6], 0
    %10 = vsyncpa [#allocation4], 0
    // Predicated region
    $region2: #{bbfc_forward.11} parent=1 // pred_check
      _
    $region3: #{bbfc_forward.11} parent=1 // pred_check_branch
      %12 = sbr.rel (0) target = $region5
    $region4: #{bbfc_forward.11} parent=1 // pred_region
      %s14 = ssub.s32 512, 512
      %15 = vsyncadd [#allocation3], %s14
      %s16 = sshll.u32 [#allocation2], 4
      %s17 = int_to_ptr.vmem [resolvable:$true] %s16
      %22 = dma.hbm_to_vmem [thread:$0]  %s0, 512, %s17, [#allocation3], 128, 128, 8
    $region5: #{bbfc_forward.11} parent=1 // pred_fallthru
      _
    // Predicated region
    $region6: #{bbfc_forward.11} parent=1 // pred_check
      _
    $region7: #{bbfc_forward.11} parent=1 // pred_check_branch
      %24 = sbr.rel (0) target = $region9
    $region8: #{bbfc_forward.11} parent=1 // pred_region
      %s26 = ssub.s32 16, 16
      %27 = vsyncadd [#allocation6], %s26
      %s29 = sshll.u32 [#allocation5], 4
      %s30 = int_to_ptr.vmem [resolvable:$true] %s29
      %32 = dma.hbm_to_vmem [thread:$0]  %s1, 16, %s30, [#allocation6]
    $region9: #{bbfc_forward.11} parent=1 // pred_fallthru
      _
    // Predicated region
    $region10: #{bbfc_forward.11} parent=1 // pred_check
      _
    $region11: #{bbfc_forward.11} parent=1 // pred_check_branch
      %34 = sbr.rel (0) target = $region13
    $region12: #{bbfc_forward.11} parent=1 // pred_region
      %s36 = ssub.s32 16, 16
      %37 = vsyncadd [#allocation6], %s36
      %s39 = sshll.u32 [#allocation7], 4
      %s40 = int_to_ptr.vmem [resolvable:$true] %s39
      %42 = dma.hbm_to_vmem [thread:$0]  %s2, 16, %s40, [#allocation6]
    $region13: #{bbfc_forward.11} parent=1 // pred_fallthru
      _
    // Predicated region
    $region14: #{bbfc_forward.11} parent=1 // pred_check
      _
    $region15: #{bbfc_forward.11} parent=1 // pred_check_branch
      %44 = sbr.rel (0) target = $region17
    $region16: #{bbfc_forward.11} parent=1 // pred_region
      %45 = dma.done [#allocation3], 512
    $region17: #{bbfc_forward.11} parent=1 // pred_fallthru
      _
    // Predicated region
    $region18: #{bbfc_forward.11} parent=1 // pred_check
      _
    $region19: #{bbfc_forward.11} parent=1 // pred_check_branch
      %47 = sbr.rel (0) target = $region21
    $region20: #{bbfc_forward.11} parent=1 // pred_region
      %48 = dma.done [#allocation6], 16
    $region21: #{bbfc_forward.11} parent=1 // pred_fallthru
      _
    // Predicated region
    $region22: #{bbfc_forward.11} parent=1 // pred_check
      _
    $region23: #{bbfc_forward.11} parent=1 // pred_check_branch
      %50 = sbr.rel (0) target = $region25
    $region24: #{bbfc_forward.11} parent=1 // pred_region
      %51 = dma.done [#allocation6], 16
    $region25: #{bbfc_forward.11} parent=1 // pred_fallthru
      _
    %v52 = vld [vmem:[#allocation2] sm:$0xff]
    %v53 = vld [vmem:[#allocation2 + $0x8] sm:$0xff]
    %v54 = vld [vmem:[#allocation2 + $0x10] sm:$0xff]
    %v55 = vld [vmem:[#allocation2 + $0x18] sm:$0xff]
    %vm56 = vcmask 261120
    %v57 = vsel %vm56, %v52, 0.0
    %58 = vadd.xlane.f32.xlu0 %v57
    %v59 = vpop.xlane.xlu0 %58
    %v60 = vsel %vm56, %v53, 0.0
    %61 = vadd.xlane.f32.xlu0 %v60
    %v62 = vpop.xlane.xlu0 %61
    %v63 = vsel %vm56, %v54, 0.0
    %64 = vadd.xlane.f32.xlu0 %v63
    %v65 = vpop.xlane.xlu0 %64
    %v66 = vsel %vm56, %v55, 0.0
    %67 = vadd.xlane.f32.xlu0 %v66
    %v68 = vpop.xlane.xlu0 %67
    %v69 = vrcp.pop 32.0
    %v70 = vmul.f32 %v59, %v69
    %v71 = vmul.f32 %v62, %v69
    %v72 = vmul.f32 %v65, %v69
    %v73 = vmul.f32 %v68, %v69
    %v74 = vsub.f32 %v52, %v70
    %v75 = vsub.f32 %v53, %v71
    %v76 = vsub.f32 %v54, %v72
    %v77 = vsub.f32 %v55, %v73
    %v78 = vmul.f32 %v74, %v74
    %v79 = vmul.f32 %v75, %v75
    %v80 = vmul.f32 %v76, %v76
    %v81 = vmul.f32 %v77, %v77
    %v82 = vsel %vm56, %v78, 0.0
    %83 = vadd.xlane.f32.xlu0 %v82
    %v84 = vpop.xlane.xlu0 %83
    %v85 = vsel %vm56, %v79, 0.0
    %86 = vadd.xlane.f32.xlu0 %v85
    %v87 = vpop.xlane.xlu0 %86
    %v88 = vsel %vm56, %v80, 0.0
    %89 = vadd.xlane.f32.xlu0 %v88
    %v90 = vpop.xlane.xlu0 %89
    %v91 = vsel %vm56, %v81, 0.0
    %92 = vadd.xlane.f32.xlu0 %v91
    %v93 = vpop.xlane.xlu0 %92
    %v94 = vmul.f32 %v84, %v69
    %v95 = vmul.f32 %v87, %v69
    %v96 = vmul.f32 %v90, %v69
    %v97 = vmul.f32 %v93, %v69
    %v98 = vadd.f32 %v94, 1e-12
    %v99 = vadd.f32 %v95, 1e-12
    %v100 = vadd.f32 %v96, 1e-12
    %v101 = vadd.f32 %v97, 1e-12
    %v102 = vrsqrt.pop %v98
    %v103 = vrsqrt.pop %v99
    %v104 = vrsqrt.pop %v100
    %v105 = vrsqrt.pop %v101
    %v106 = vmul.f32 %v74, %v102
    %v107 = vmul.f32 %v75, %v103
    %v108 = vmul.f32 %v76, %v104
    %v109 = vmul.f32 %v77, %v105
    %v110 = vld [vmem:[#allocation5] sm:$0x1]
    %v112 = vlaneseq
    %v113 = vshrl.u32 %v112, 7
    %v114 = vsub.s32 0, %v113
    %v115 = vrot.slane %v110, %v114
    %v117 = vmul.f32 %v106, %v115
    %v118 = vmul.f32 %v107, %v115
    %v119 = vmul.f32 %v108, %v115
    %v120 = vmul.f32 %v109, %v115
    %v121 = vld [vmem:[#allocation7] sm:$0x1]
    %v123 = vlaneseq
    %v124 = vshrl.u32 %v123, 7
    %v125 = vsub.s32 0, %v124
    %v126 = vrot.slane %v121, %v125
    %v128 = vadd.f32 %v117, %v126
    %v129 = vadd.f32 %v118, %v126
    %v130 = vadd.f32 %v119, %v126
    %v131 = vadd.f32 %v120, %v126
    %v132 = vpack.c.bf16 %v129, %v128
    %v133 = vpack.c.bf16 %v131, %v130
    %v136 = vunpack.c.l.b16 %v132
    %v137 = vunpack.c.h.b16 %v132
    %v138 = vunpack.c.l.b16 %v133
    %v139 = vunpack.c.h.b16 %v133
    %v140 = vpack.c.b16 %v136, %v136
    %v141 = vpack.c.b16 %v137, %v137
    %v142 = vpack.c.b16 %v138, %v138
    %v143 = vpack.c.b16 %v139, %v139
    %vm148 = vcmask 257024
    %149 = vst.msk [vmem:[#allocation8] sm:$0xf] %vm148, %v140
    %150 = vst.msk [vmem:[#allocation8 + $0x4] sm:$0xf] %vm148, %v141
    %151 = vst.msk [vmem:[#allocation8 + $0x8] sm:$0xf] %vm148, %v142
    %152 = vst.msk [vmem:[#allocation8 + $0xc] sm:$0xf] %vm148, %v143
    // Predicated region
    $region26: #{bbfc_forward.11} parent=1 // pred_check
      _
    $region27: #{bbfc_forward.11} parent=1 // pred_check_branch
      %154 = sbr.rel (0) target = $region29
    $region28: #{bbfc_forward.11} parent=1 // pred_region
      %s156 = ssub.s32 256, 256
      %157 = vsyncadd [#allocation4], %s156
      %s158 = sshll.u32 [#allocation8], 4
      %s159 = int_to_ptr.vmem [resolvable:$true] %s158
      %164 = dma.vmem_to_hbm [thread:$0]  %s159, 256, %s3, [#allocation4], 64, 64, 4
    $region29: #{bbfc_forward.11} parent=1 // pred_fallthru
      _
    // Predicated region
    $region30: #{bbfc_forward.11} parent=1 // pred_check
      _
    $region31: #{bbfc_forward.11} parent=1 // pred_check_branch
      %166 = sbr.rel (0) target = $region33
    $region32: #{bbfc_forward.11} parent=1 // pred_region
      %167 = dma.done [#allocation4], 256
    $region33: #{bbfc_forward.11} parent=1 // pred_fallthru
      _
    %168 = vsyncpa [#allocation3], 1
    %169 = vsyncpa [#allocation6], 1
    %170 = vsyncpa [#allocation4], 1

// kernel: bbfc_forward.13
$region0: #{bbfc_forward.13}
  #allocation0 [shape = 'u32[]', space=smem, size = 0x4, offset = 0x4, fixed_abs, tag = 'smem constant byte address 0x4 - core index']
  #allocation1 [shape = 'u32[144,128]{1,0:T(1,128)}', space=vmem, size = 0x12000, scoped, tag = 'internal scratch']
  #allocation2 [shape = 'f32[2,8,1]{2,1,0:T(8,128)}', space=vmem, size = 0x2000, scoped, tag = 'scratch operand']
  #allocation3 [shape = 'f32[2,8,1]{2,1,0:T(8,128)}', space=vmem, size = 0x2000, scoped, tag = 'scratch operand']
  #allocation4 [shape = 'f32[2,8,16]{2,1,0:T(8,128)}', space=vmem, size = 0x2000, scoped, tag = 'scratch operand']
  %s0 = inlined_call_operand.hbm [shape: bf16[4,2,8,16], index: 0, kind: input, shape index: {}]
  %s1 = inlined_call_operand.hbm [shape: bf16[4,2,8,16], index: 1, kind: input, shape index: {}]
  %s2 = inlined_call_operand.hbm [shape: bf16[4,2,8,16], index: 2, kind: input, shape index: {}]
  %s3 = inlined_call_operand.hbm [shape: f32[4,1,8], index: 3, kind: input, shape index: {}]
  %s4 = inlined_call_operand.hbm [shape: bf16[4,2,8,16], index: 4, kind: output, shape index: {}]
  %s5 = sld [smem:[#allocation0]]
  $region73: #{bbfc_forward.13} parent=0
    _
  %s7 = ssub.s32 1, %s5
  %s8 = scalar_select 0, %s7, %s5
  $region1: #{bbfc_forward.13} parent=0
    #allocation5 [shape = 'u8[8192]{0}', space=vmem, size = 0x2000, scoped, tag = 'input window, operand 0']
    #allocation6 [shape = 's32[2]{0}', space=sflag, size = 0x8, scoped, tag = 'scoped memory for bbfc_forward.13']
    #allocation7 [shape = 's32[2]{0}', space=sflag, size = 0x8, scoped, tag = 'scoped memory for bbfc_forward.13']
    #allocation8 [shape = 'u8[8192]{0}', space=vmem, size = 0x2000, scoped, tag = 'input window, operand 1']
    #allocation9 [shape = 's32[2]{0}', space=sflag, size = 0x8, scoped, tag = 'scoped memory for bbfc_forward.13']
    #allocation10 [shape = 'u8[8192]{0}', space=vmem, size = 0x2000, scoped, tag = 'input window, operand 2']
    #allocation11 [shape = 'u8[1024]{0}', space=vmem, size = 0x400, scoped, tag = 'input window, operand 3']
    #allocation12 [shape = 's32[2]{0}', space=sflag, size = 0x8, scoped, tag = 'scoped memory for bbfc_forward.13']
    #allocation13 [shape = 'u8[8192]{0}', space=vmem, size = 0x2000, scoped, tag = 'output window, operand 0']
    %9 = vsyncpa [#allocation6], 0
    %s10 = scalar_lea.sflag [#allocation6], 1
    %11 = vsyncpa %s10, 0
    %12 = vsyncpa [#allocation9], 0
    %s13 = scalar_lea.sflag [#allocation9], 1
    %14 = vsyncpa %s13, 0
    %15 = vsyncpa [#allocation12], 0
    %s16 = scalar_lea.sflag [#allocation12], 1
    %17 = vsyncpa %s16, 0
    %18 = vsyncpa [#allocation7], 0
    %s19 = scalar_lea.sflag [#allocation7], 1
    %20 = vsyncpa %s19, 0
    loop: start=0, step=1, limit=6
    $region2: #{bbfc_forward.13} parent=1 // loop_pre_header
      _
    $region3: #{bbfc_forward.13} parent=1 // loop_header
      %s22 = sphi 0, %s26
      %p23 = scmp.ge.s32.totalorder %s22, 6
      %s29 = sphi 0, %s41
      %s30 = sphi 0, %s37
      %s31 = sphi 0, %s29
      %s32 = sphi 0, %s30
      %s33 = sphi 0, %s31
      %s34 = sphi 0, %s32
      %s44 = sphi 0, %s46
      %s47 = sphi 0, %s44
      %s48 = sphi 0, %s47
      %s64 = sphi 0, %s48
      %s72 = sphi 0, %s74
      %s75 = sphi 0, %s72
      %s76 = sphi 0, %s75
      %s92 = sphi 0, %s76
      %s100 = sphi 0, %s102
      %s103 = sphi 0, %s100
      %s104 = sphi 0, %s103
      %s120 = sphi 0, %s104
      %s128 = sphi 0, %s130
      %s131 = sphi 0, %s128
      %s132 = sphi 0, %s131
      %s148 = sphi 0, %s132
      %s154 = sphi 0, %s156
      %s157 = sphi 0, %s154
      %s158 = sphi 0, %s157
      %s174 = sphi 0, %s158
    $region4: #{bbfc_forward.13} parent=1 // loop_header_branch
      %25 = sbr.rel (%p23) target = $region8
    $region5: #{bbfc_forward.13} parent=1 // loop_body
      %s27 = ssub.s32 %s22, 1
      %s28 = ssub.s32 %s22, 2
      %s35 = sadd.s32 1, %s30
      %p36 = scmp.ge.s32.totalorder %s35, 1
      %s37 = scalar_select %p36, 0, %s35
      %s38 = sadd.s32 1, %s29
      %s39 = scalar_select %p36, %s38, %s29
      %p40 = scmp.ge.s32.totalorder %s39, 4
      %s41 = scalar_select %p40, 0, %s39
      %s42 = ssub.s32 %s29, %s41
      %p43 = scmp.eq.s32.totalorder %s42, 0
      %s45 = sadd.s32 %s44, 1
      %s46 = scalar_select %p43, %s44, %s45
      %p49 = pneg %p43
      %p50 = scmp.eq.s32.totalorder %s22, 3
      %p51 = por %p49, %p50
      %p52 = scmp.ne.s32.totalorder %s44, %s47
      %p53 = scmp.eq.s32.totalorder %s22, 0
      %p54 = por %p52, %p53
      %p55 = scmp.ne.s32.totalorder %s44, %s47
      %p56 = scmp.eq.s32.totalorder %s27, 3
      %p57 = por %p55, %p56
      %p58 = scmp.ne.s32.totalorder %s47, %s48
      %p59 = scmp.eq.s32.totalorder %s27, 0
      %p60 = por %p58, %p59
      %p61 = scmp.ne.s32.totalorder %s47, %s48
      %p62 = scmp.eq.s32.totalorder %s28, 3
      %p63 = por %p61, %p62
      %p65 = scmp.ne.s32.totalorder %s48, %s64
      %p66 = scmp.eq.s32.totalorder %s28, 0
      %p67 = por %p65, %p66
      %s68 = ssub.s32 %s29, %s41
      %s69 = ssub.s32 %s30, %s37
      %s70 = sor.u32 %s68, %s69
      %p71 = scmp.eq.s32.totalorder %s70, 0
      %s73 = sadd.s32 %s72, 1
      %s74 = scalar_select %p71, %s72, %s73
      %p77 = pneg %p71
      %p78 = scmp.eq.s32.totalorder %s22, 3
      %p79 = por %p77, %p78
      %p80 = scmp.ne.s32.totalorder %s72, %s75
      %p81 = scmp.eq.s32.totalorder %s22, 0
      %p82 = por %p80, %p81
      %p83 = scmp.ne.s32.totalorder %s72, %s75
      %p84 = scmp.eq.s32.totalorder %s27, 3
      %p85 = por %p83, %p84
      %p86 = scmp.ne.s32.totalorder %s75, %s76
      %p87 = scmp.eq.s32.totalorder %s27, 0
      %p88 = por %p86, %p87
      %p89 = scmp.ne.s32.totalorder %s75, %s76
      %p90 = scmp.eq.s32.totalorder %s28, 3
      %p91 = por %p89, %p90
      %p93 = scmp.ne.s32.totalorder %s76, %s92
      %p94 = scmp.eq.s32.totalorder %s28, 0
      %p95 = por %p93, %p94
      %s96 = ssub.s32 %s29, %s41
      %s97 = ssub.s32 %s30, %s37
      %s98 = sor.u32 %s96, %s97
      %p99 = scmp.eq.s32.totalorder %s98, 0
      %s101 = sadd.s32 %s100, 1
      %s102 = scalar_select %p99, %s100, %s101
      %p105 = pneg %p99
      %p106 = scmp.eq.s32.totalorder %s22, 3
      %p107 = por %p105, %p106
      %p108 = scmp.ne.s32.totalorder %s100, %s103
      %p109 = scmp.eq.s32.totalorder %s22, 0
      %p110 = por %p108, %p109
      %p111 = scmp.ne.s32.totalorder %s100, %s103
      %p112 = scmp.eq.s32.totalorder %s27, 3
      %p113 = por %p111, %p112
      %p114 = scmp.ne.s32.totalorder %s103, %s104
      %p115 = scmp.eq.s32.totalorder %s27, 0
      %p116 = por %p114, %p115
      %p117 = scmp.ne.s32.totalorder %s103, %s104
      %p118 = scmp.eq.s32.totalorder %s28, 3
      %p119 = por %p117, %p118
      %p121 = scmp.ne.s32.totalorder %s104, %s120
      %p122 = scmp.eq.s32.totalorder %s28, 0
      %p123 = por %p121, %p122
      %s124 = ssub.s32 %s29, %s41
      %s125 = ssub.s32 %s30, %s37
      %s126 = sor.u32 %s124, %s125
      %p127 = scmp.eq.s32.totalorder %s126, 0
      %s129 = sadd.s32 %s128, 1
      %s130 = scalar_select %p127, %s128, %s129
      %p133 = pneg %p127
      %p134 = scmp.eq.s32.totalorder %s22, 3
      %p135 = por %p133, %p134
      %p136 = scmp.ne.s32.totalorder %s128, %s131
      %p137 = scmp.eq.s32.totalorder %s22, 0
      %p138 = por %p136, %p137
      %p139 = scmp.ne.s32.totalorder %s128, %s131
      %p140 = scmp.eq.s32.totalorder %s27, 3
      %p141 = por %p139, %p140
      %p142 = scmp.ne.s32.totalorder %s131, %s132
      %p143 = scmp.eq.s32.totalorder %s27, 0
      %p144 = por %p142, %p143
      %p145 = scmp.ne.s32.totalorder %s131, %s132
      %p146 = scmp.eq.s32.totalorder %s28, 3
      %p147 = por %p145, %p146
      %p149 = scmp.ne.s32.totalorder %s132, %s148
      %p150 = scmp.eq.s32.totalorder %s28, 0
      %p151 = por %p149, %p150
      %s152 = ssub.s32 %s29, %s41
      %p153 = scmp.eq.s32.totalorder %s152, 0
      %s155 = sadd.s32 %s154, 1
      %s156 = scalar_select %p153, %s154, %s155
      %p159 = pneg %p153
      %p160 = scmp.eq.s32.totalorder %s22, 3
      %p161 = por %p159, %p160
      %p162 = scmp.ne.s32.totalorder %s154, %s157
      %p163 = scmp.eq.s32.totalorder %s22, 0
      %p164 = por %p162, %p163
      %p165 = scmp.ne.s32.totalorder %s154, %s157
      %p166 = scmp.eq.s32.totalorder %s27, 3
      %p167 = por %p165, %p166
      %p168 = scmp.ne.s32.totalorder %s157, %s158
      %p169 = scmp.eq.s32.totalorder %s27, 0
      %p170 = por %p168, %p169
      %p171 = scmp.ne.s32.totalorder %s157, %s158
      %p172 = scmp.eq.s32.totalorder %s28, 3
      %p173 = por %p171, %p172
      %p175 = scmp.ne.s32.totalorder %s158, %s174
      %p176 = scmp.eq.s32.totalorder %s28, 0
      %p177 = por %p175, %p176
      %p178 = scmp.le.s32.totalorder 1, %s22
      %p179 = scmp.lt.s32.totalorder %s22, 5
      %p180 = pnand %p178, %p179
      %p181 = pneg %p180
      // Predicated region
      $region9: #{bbfc_forward.13} parent=5 // pred_check
        _
      $region10: #{bbfc_forward.13} parent=5 // pred_check_branch
        %183 = sbr.rel (%p180) target = $region12
      $region11: #{bbfc_forward.13} parent=5 // pred_region
        %s184 = ssub.s32 %s22, 1
      $region12: #{bbfc_forward.13} parent=5 // pred_fallthru
        _
      %p185 = scmp.lt.s32.totalorder %s22, 4
      // Predicated region
      $region13: #{bbfc_forward.13} parent=5 // pred_check
        %p186 = pneg %p185
      $region14: #{bbfc_forward.13} parent=5 // pred_check_branch
        %188 = sbr.rel (%p186) target = $region16
      $region15: #{bbfc_forward.13} parent=5 // pred_region
        // Predicated region
        $region17: #{bbfc_forward.13} parent=15 // pred_check
          %p189 = pneg %p54
        $region18: #{bbfc_forward.13} parent=15 // pred_check_branch
          %191 = sbr.rel (%p189) target = $region20
        $region19: #{bbfc_forward.13} parent=15 // pred_region
          %s192 = sand.u32 %s44, 1
          %s193 = scalar_lea.sflag [#allocation6], %s192
          %s194 = sand.u32 %s44, 1
          %s195 = smul.addr %s194, 8
          %s196 = scalar_lea.vmem [#allocation5], %s195
          %s198 = ssub.s32 128, 128
          %199 = vsyncadd %s193, %s198
          %s200 = smul.addr %s29, 2
          %s201 = smul.addr %s200, 64
          %s202 = scalar_lea.hbm %s0, %s201
          %s203 = sshll.u32 %s196, 4
          %s204 = int_to_ptr.vmem [resolvable:$true] %s203
          %209 = dma.hbm_to_vmem [thread:$0]  %s202, 128, %s204, %s193, 64, 64, 4
        $region20: #{bbfc_forward.13} parent=15 // pred_fallthru
          _
        // Predicated region
        $region21: #{bbfc_forward.13} parent=15 // pred_check
          %p210 = pneg %p82
        $region22: #{bbfc_forward.13} parent=15 // pred_check_branch
          %212 = sbr.rel (%p210) target = $region24
        $region23: #{bbfc_forward.13} parent=15 // pred_region
          %s213 = sand.u32 %s22, 1
          %s214 = scalar_lea.sflag [#allocation9], %s213
          %s215 = sand.u32 %s72, 1
          %s216 = smul.addr %s215, 8
          %s217 = scalar_lea.vmem [#allocation8], %s216
          %s219 = ssub.s32 128, 128
          %220 = vsyncadd %s214, %s219
          %s221 = smul.addr %s29, 2
          %s222 = sadd.s32 %s30, %s221
          %s223 = smul.addr %s222, 64
          %s224 = scalar_lea.hbm %s1, %s223
          %s225 = sshll.u32 %s217, 4
          %s226 = int_to_ptr.vmem [resolvable:$true] %s225
          %231 = dma.hbm_to_vmem [thread:$0]  %s224, 128, %s226, %s214, 64, 64, 4
        $region24: #{bbfc_forward.13} parent=15 // pred_fallthru
          _
        // Predicated region
        $region25: #{bbfc_forward.13} parent=15 // pred_check
          %p232 = pneg %p110
        $region26: #{bbfc_forward.13} parent=15 // pred_check_branch
          %234 = sbr.rel (%p232) target = $region28
        $region27: #{bbfc_forward.13} parent=15 // pred_region
          %s235 = sand.u32 %s22, 1
          %s236 = scalar_lea.sflag [#allocation9], %s235
          %s237 = sand.u32 %s100, 1
          %s238 = smul.addr %s237, 8
          %s239 = scalar_lea.vmem [#allocation10], %s238
          %s241 = ssub.s32 128, 128
          %242 = vsyncadd %s236, %s241
          %s243 = smul.addr %s29, 2
          %s244 = sadd.s32 %s30, %s243
          %s245 = smul.addr %s244, 64
          %s246 = scalar_lea.hbm %s2, %s245
          %s247 = sshll.u32 %s239, 4
          %s248 = int_to_ptr.vmem [resolvable:$true] %s247
          %253 = dma.hbm_to_vmem [thread:$0]  %s246, 128, %s248, %s236, 64, 64, 4
        $region28: #{bbfc_forward.13} parent=15 // pred_fallthru
          _
        // Predicated region
        $region29: #{bbfc_forward.13} parent=15 // pred_check
          %p254 = pneg %p138
        $region30: #{bbfc_forward.13} parent=15 // pred_check_branch
          %256 = sbr.rel (%p254) target = $region32
        $region31: #{bbfc_forward.13} parent=15 // pred_region
          %s257 = sand.u32 %s128, 1
          %s258 = scalar_lea.sflag [#allocation12], %s257
          %s259 = sand.u32 %s128, 1
          %s260 = scalar_lea.vmem [#allocation11], %s259
          %s262 = ssub.s32 16, 16
          %263 = vsyncadd %s258, %s262
          %s264 = sadd.s32 %s30, %s29
          %s265 = smul.addr %s264, 16
          %s266 = scalar_lea.hbm %s3, %s265
          %s268 = sshll.u32 %s260, 4
          %s269 = int_to_ptr.vmem [resolvable:$true] %s268
          %271 = dma.hbm_to_vmem [thread:$0]  %s266, 16, %s269, %s258
        $region32: #{bbfc_forward.13} parent=15 // pred_fallthru
          _
      $region16: #{bbfc_forward.13} parent=5 // pred_fallthru
        _
      %p272 = scmp.le.s32.totalorder 1, %s22
      %p273 = scmp.lt.s32.totalorder %s22, 5
      %p274 = pnand %p272, %p273
      %p275 = pneg %p274
      // Predicated region
      $region33: #{bbfc_forward.13} parent=5 // pred_check
        _
      $region34: #{bbfc_forward.13} parent=5 // pred_check_branch
        %277 = sbr.rel (%p274) target = $region36
      $region35: #{bbfc_forward.13} parent=5 // pred_region
        %s278 = ssub.s32 %s22, 1
        %s279 = sand.u32 %s47, 1
        %s280 = scalar_lea.sflag [#allocation6], %s279
        %s281 = sand.u32 %s47, 1
        %s282 = smul.addr %s281, 8
        %s283 = scalar_lea.vmem [#allocation5], %s282
        // Predicated region
        $region37: #{bbfc_forward.13} parent=35 // pred_check
          %p284 = pneg %p60
        $region38: #{bbfc_forward.13} parent=35 // pred_check_branch
          %286 = sbr.rel (%p284) target = $region40
        $region39: #{bbfc_forward.13} parent=35 // pred_region
          %287 = dma.done %s280, 128
        $region40: #{bbfc_forward.13} parent=35 // pred_fallthru
          _
        %s288 = sand.u32 %s27, 1
        %s289 = scalar_lea.sflag [#allocation9], %s288
        %s290 = sand.u32 %s75, 1
        %s291 = smul.addr %s290, 8
        %s292 = scalar_lea.vmem [#allocation8], %s291
        // Predicated region
        $region41: #{bbfc_forward.13} parent=35 // pred_check
          %p293 = pneg %p88
        $region42: #{bbfc_forward.13} parent=35 // pred_check_branch
          %295 = sbr.rel (%p293) target = $region44
        $region43: #{bbfc_forward.13} parent=35 // pred_region
          %296 = dma.done %s289, 128
        $region44: #{bbfc_forward.13} parent=35 // pred_fallthru
          _
        %s297 = sand.u32 %s27, 1
        %s298 = scalar_lea.sflag [#allocation9], %s297
        %s299 = sand.u32 %s103, 1
        %s300 = smul.addr %s299, 8
        %s301 = scalar_lea.vmem [#allocation10], %s300
        // Predicated region
        $region45: #{bbfc_forward.13} parent=35 // pred_check
          %p302 = pneg %p116
        $region46: #{bbfc_forward.13} parent=35 // pred_check_branch
          %304 = sbr.rel (%p302) target = $region48
        $region47: #{bbfc_forward.13} parent=35 // pred_region
          %305 = dma.done %s298, 128
        $region48: #{bbfc_forward.13} parent=35 // pred_fallthru
          _
        %s306 = sand.u32 %s131, 1
        %s307 = scalar_lea.sflag [#allocation12], %s306
        %s308 = sand.u32 %s131, 1
        %s309 = scalar_lea.vmem [#allocation11], %s308
        // Predicated region
        $region49: #{bbfc_forward.13} parent=35 // pred_check
          %p310 = pneg %p144
        $region50: #{bbfc_forward.13} parent=35 // pred_check_branch
          %312 = sbr.rel (%p310) target = $region52
        $region51: #{bbfc_forward.13} parent=35 // pred_region
          %313 = dma.done %s307, 16
        $region52: #{bbfc_forward.13} parent=35 // pred_fallthru
          _
        %s314 = sand.u32 %s47, 1
        %s315 = scalar_lea.sflag [#allocation6], %s314
        %s316 = sand.u32 %s47, 1
        %s317 = smul.addr %s316, 8
        %s318 = scalar_lea.vmem [#allocation5], %s317
        %p319 = pneg %p60
        %p320 = pneg %p57
        %s321 = sand.u32 %s27, 1
        %s322 = scalar_lea.sflag [#allocation9], %s321
        %s323 = sand.u32 %s75, 1
        %s324 = smul.addr %s323, 8
        %s325 = scalar_lea.vmem [#allocation8], %s324
        %p326 = pneg %p88
        %p327 = pneg %p85
        %s328 = sand.u32 %s27, 1
        %s329 = scalar_lea.sflag [#allocation9], %s328
        %s330 = sand.u32 %s103, 1
        %s331 = smul.addr %s330, 8
        %s332 = scalar_lea.vmem [#allocation10], %s331
        %p333 = pneg %p116
        %p334 = pneg %p113
        %s335 = sand.u32 %s131, 1
        %s336 = scalar_lea.sflag [#allocation12], %s335
        %s337 = sand.u32 %s131, 1
        %s338 = scalar_lea.vmem [#allocation11], %s337
        %p339 = pneg %p144
        %p340 = pneg %p141
        %p341 = pneg %p170
        %p342 = pneg %p167
        %s343 = sand.u32 %s157, 1
        %s344 = scalar_lea.sflag [#allocation7], %s343
        %s345 = sand.u32 %s157, 1
        %s346 = smul.addr %s345, 8
        %s347 = scalar_lea.vmem [#allocation13], %s346
        %p349 = scmp.eq.s32.totalorder %s32, 0
        // Predicated region
        $region53: #{bbfc_forward.13} parent=35 // pred_check
          %p350 = pneg %p349
        $region54: #{bbfc_forward.13} parent=35 // pred_check_branch
          %352 = sbr.rel (%p350) target = $region56
        $region55: #{bbfc_forward.13} parent=35 // pred_region
          %vm353 = vcmask 7168
          %354 = vst.msk [vmem:[#allocation2] sm:$0xff] %vm353, -inf
          %355 = vst.msk [vmem:[#allocation2 + $0x8] sm:$0xff] %vm353, -inf
          %356 = vst.msk [vmem:[#allocation3] sm:$0xff] %vm353, 0.0
          %357 = vst.msk [vmem:[#allocation3 + $0x8] sm:$0xff] %vm353, 0.0
          %vm358 = vcmask 130048
          %359 = vst.msk [vmem:[#allocation4] sm:$0xff] %vm358, 0.0
          %360 = vst.msk [vmem:[#allocation4 + $0x8] sm:$0xff] %vm358, 0.0
        $region56: #{bbfc_forward.13} parent=35 // pred_fallthru
          _
        %v361 = vld [vmem:[%s283] sm:$0xf]
        %v362 = vld [vmem:[%s283 + $0x4] sm:$0xf]
        %v363 = vld [vmem:[%s292] sm:$0xf]
        %v364 = vld [vmem:[%s292 + $0x4] sm:$0xf]
        %v365 = vld [vmem:[%s301] sm:$0xf]
        %v366 = vld [vmem:[%s301 + $0x4] sm:$0xf]
        %v367 = vld [vmem:[%s309] sm:$0x1]
        %v369 = vlaneseq
        %v370 = vshrl.u32 %v369, 7
        %v371 = vsub.s32 0, %v370
        %v372 = vrot.slane %v367, %v371
        %vm374 = vcmask 130048
        %v376 = vsel %vm374, %v361, 0
        %v379 = vsel %vm374, %v363, 0
        %381 = vmatprep.subr.bf16.mxu0 0
        %382 = vmatpush1.bf16.xpose.msra.mxu0 %v379
        %383 = vmatprep.subr.bf16.mxu0 0
        %384 = vmatpush1.bf16.xpose.msra.mxu0 0
        %385 = vmatprep.subr.bf16.mxu0 0
        %386 = vmatpush1.bf16.xpose.msra.mxu0 0
        %387 = vmatprep.subr.bf16.mxu0 0
        %388 = vmatpush1.bf16.xpose.msra.mxu0 0
        %389 = vmatprep.subr.bf16.mxu0 0
        %390 = vmatpush1.bf16.xpose.msra.mxu0 0
        %391 = vmatprep.subr.bf16.mxu0 0
        %392 = vmatpush1.bf16.xpose.msra.mxu0 0
        %393 = vmatprep.subr.bf16.mxu0 0
        %394 = vmatpush1.bf16.xpose.msra.mxu0 0
        %395 = vmatprep.subr.bf16.mxu0 0
        %396 = vmatpush1.bf16.xpose.msra.mxu0 0
        %397 = vmatprep.subr.bf16.mxu0 0
        %398 = vmatpush1.bf16.xpose.msra.mxu0 0
        %399 = vmatprep.subr.bf16.mxu0 0
        %400 = vmatpush1.bf16.xpose.msra.mxu0 0
        %401 = vmatprep.subr.bf16.mxu0 0
        %402 = vmatpush1.bf16.xpose.msra.mxu0 0
        %403 = vmatprep.subr.bf16.mxu0 0
        %404 = vmatpush1.bf16.xpose.msra.mxu0 0
        %405 = vmatprep.subr.bf16.mxu0 0
        %406 = vmatpush1.bf16.xpose.msra.mxu0 0
        %407 = vmatprep.subr.bf16.mxu0 0
        %408 = vmatpush1.bf16.xpose.msra.mxu0 0
        %409 = vmatprep.subr.bf16.mxu0 0
        %410 = vmatpush1.bf16.xpose.msra.mxu0 0
        %411 = vmatprep.subr.bf16.mxu0 0
        %412 = vmatpush1.bf16.xpose.msra.mxu0 0
        %413 = vmatprep.mubr.bf16.mxu0 0
        %414 = vmatmul.mubr.bf16.gmra.mrb[0].mxu0 %v376
        %v415 = vpop.f32.mrb[0].mxu0
        %v416 = vadd.f32 %v372, %v415
        %v417 = vpop.f32.mrb[0].mxu0
        %v418 = vpop.f32.mrb[0].mxu0
        %v419 = vpop.f32.mrb[0].mxu0
        %420 = vdwg.mxu0
        %v422 = vsel %vm374, %v362, 0
        %v425 = vsel %vm374, %v364, 0
        %427 = vmatprep.subr.bf16.mxu0 0
        %428 = vmatpush1.bf16.xpose.msra.mxu0 %v425
        %429 = vmatprep.subr.bf16.mxu0 0
        %430 = vmatpush1.bf16.xpose.msra.mxu0 0
        %431 = vmatprep.subr.bf16.mxu0 0
        %432 = vmatpush1.bf16.xpose.msra.mxu0 0
        %433 = vmatprep.subr.bf16.mxu0 0
        %434 = vmatpush1.bf16.xpose.msra.mxu0 0
        %435 = vmatprep.subr.bf16.mxu0 0
        %436 = vmatpush1.bf16.xpose.msra.mxu0 0
        %437 = vmatprep.subr.bf16.mxu0 0
        %438 = vmatpush1.bf16.xpose.msra.mxu0 0
        %439 = vmatprep.subr.bf16.mxu0 0
        %440 = vmatpush1.bf16.xpose.msra.mxu0 0
        %441 = vmatprep.subr.bf16.mxu0 0
        %442 = vmatpush1.bf16.xpose.msra.mxu0 0
        %443 = vmatprep.subr.bf16.mxu0 0
        %444 = vmatpush1.bf16.xpose.msra.mxu0 0
        %445 = vmatprep.subr.bf16.mxu0 0
        %446 = vmatpush1.bf16.xpose.msra.mxu0 0
        %447 = vmatprep.subr.bf16.mxu0 0
        %448 = vmatpush1.bf16.xpose.msra.mxu0 0
        %449 = vmatprep.subr.bf16.mxu0 0
        %450 = vmatpush1.bf16.xpose.msra.mxu0 0
        %451 = vmatprep.subr.bf16.mxu0 0
        %452 = vmatpush1.bf16.xpose.msra.mxu0 0
        %453 = vmatprep.subr.bf16.mxu0 0
        %454 = vmatpush1.bf16.xpose.msra.mxu0 0
        %455 = vmatprep.subr.bf16.mxu0 0
        %456 = vmatpush1.bf16.xpose.msra.mxu0 0
        %457 = vmatprep.subr.bf16.mxu0 0
        %458 = vmatpush1.bf16.xpose.msra.mxu0 0
        %459 = vmatprep.mubr.bf16.mxu0 0
        %460 = vmatmul.mubr.bf16.gmra.mrb[0].mxu0 %v422
        %v461 = vpop.f32.mrb[0].mxu0
        %v462 = vadd.f32 %v372, %v461
        %v463 = vpop.f32.mrb[0].mxu0
        %v464 = vpop.f32.mrb[0].mxu0
        %v465 = vpop.f32.mrb[0].mxu0
        %466 = vdwg.mxu0
        %v467 = vld [vmem:[#allocation2] sm:$0xff]
        %v468 = vld [vmem:[#allocation2 + $0x8] sm:$0xff]
        %vm469 = vcmask 64512
        %v470 = vsel %vm469, %v416, -inf
        %471 = vmax.xlane.f32.xlu0 %v470
        %v472 = vpop.xlane.xlu0 %471
        %v473 = vsel %vm469, %v462, -inf
        %474 = vmax.xlane.f32.xlu0 %v473
        %v475 = vpop.xlane.xlu0 %474
        %v476 = vmax.f32 %v467, %v472
        %v477 = vmax.f32 %v468, %v475
        %v478 = vsub.f32 %v467, %v476
        %v479 = vsub.f32 %v468, %v477
        %v480 = vmul.f32 %v478, 1.442695
        %v481 = vpow.pop %v480
        %v482 = vmul.f32 %v479, 1.442695
        %v483 = vpow.pop %v482
        %485 = vset.pattern.permute.xlu0 0
        %486 = vperm.xlu0 %485, %v476
        %v487 = vpop.permute.xlu0 %486
        %490 = vset.pattern.permute.xlu0 0
        %491 = vperm.xlu0 %490, %v477
        %v492 = vpop.permute.xlu0 %491
        %v494 = vsub.f32 %v416, %v487
        %v495 = vsub.f32 %v462, %v492
        %v496 = vmul.f32 %v494, 1.442695
        %v497 = vpow.pop %v496
        %v498 = vmul.f32 %v495, 1.442695
        %v499 = vpow.pop %v498
        %v500 = vld [vmem:[#allocation3] sm:$0xff]
        %v501 = vld [vmem:[#allocation3 + $0x8] sm:$0xff]
        %v502 = vmul.f32 %v481, %v500
        %v503 = vmul.f32 %v483, %v501
        %v504 = vsel %vm469, %v497, 0.0
        %505 = vadd.xlane.f32.xlu0 %v504
        %v506 = vpop.xlane.xlu0 %505
        %v507 = vsel %vm469, %v499, 0.0
        %508 = vadd.xlane.f32.xlu0 %v507
        %v509 = vpop.xlane.xlu0 %508
        %v510 = vadd.f32 %v502, %v506
        %v511 = vadd.f32 %v503, %v509
        %vm512 = vcmask 7168
        %513 = vst.msk [vmem:[#allocation3] sm:$0xff] %vm512, %v510
        %514 = vst.msk [vmem:[#allocation3 + $0x8] sm:$0xff] %vm512, %v511
        %v515 = vld [vmem:[#allocation4] sm:$0xff]
        %v516 = vld [vmem:[#allocation4 + $0x8] sm:$0xff]
        %518 = vset.pattern.permute.xlu0 0
        %519 = vperm.xlu0 %518, %v481
        %v520 = vpop.permute.xlu0 %519
        %523 = vset.pattern.permute.xlu0 0
        %524 = vperm.xlu0 %523, %v483
        %v525 = vpop.permute.xlu0 %524
        %v527 = vmul.f32 %v520, %v515
        %v528 = vmul.f32 %v525, %v516
        %v529 = vpack.c.bf16 %v497, %v497
        %v530 = vpack.c.bf16 %v499, %v499
        %v532 = vsel %vm469, %v529, 0
        %vm534 = vcmask 1043456
        %v536 = vsel %vm534, %v365, 0
        %538 = vmatprep.subr.bf16.mxu0 0
        %539 = vmatpush1.bf16.msra.mxu0 %v536
        %540 = vmatprep.subr.bf16.mxu0 0
        %541 = vmatpush1.bf16.msra.mxu0 0
        %542 = vmatprep.subr.bf16.mxu0 0
        %543 = vmatpush1.bf16.msra.mxu0 0
        %544 = vmatprep.subr.bf16.mxu0 0
        %545 = vmatpush1.bf16.msra.mxu0 0
        %546 = vmatprep.subr.bf16.mxu0 0
        %547 = vmatpush1.bf16.msra.mxu0 0
        %548 = vmatprep.subr.bf16.mxu0 0
        %549 = vmatpush1.bf16.msra.mxu0 0
        %550 = vmatprep.subr.bf16.mxu0 0
        %551 = vmatpush1.bf16.msra.mxu0 0
        %552 = vmatprep.subr.bf16.mxu0 0
        %553 = vmatpush1.bf16.msra.mxu0 0
        %554 = vmatprep.subr.bf16.mxu0 0
        %555 = vmatpush1.bf16.msra.mxu0 0
        %556 = vmatprep.subr.bf16.mxu0 0
        %557 = vmatpush1.bf16.msra.mxu0 0
        %558 = vmatprep.subr.bf16.mxu0 0
        %559 = vmatpush1.bf16.msra.mxu0 0
        %560 = vmatprep.subr.bf16.mxu0 0
        %561 = vmatpush1.bf16.msra.mxu0 0
        %562 = vmatprep.subr.bf16.mxu0 0
        %563 = vmatpush1.bf16.msra.mxu0 0
        %564 = vmatprep.subr.bf16.mxu0 0
        %565 = vmatpush1.bf16.msra.mxu0 0
        %566 = vmatprep.subr.bf16.mxu0 0
        %567 = vmatpush1.bf16.msra.mxu0 0
        %568 = vmatprep.subr.bf16.mxu0 0
        %569 = vmatpush1.bf16.msra.mxu0 0
        %570 = vmatprep.mubr.bf16.mxu0 0
        %571 = vmatmul.mubr.bf16.gmra.mrb[0].mxu0 %v532
        %v572 = vpop.f32.mrb[0].mxu0
        %v573 = vadd.f32 0.0, %v572
        %v574 = vpop.f32.mrb[0].mxu0
        %v575 = vpop.f32.mrb[0].mxu0
        %v576 = vpop.f32.mrb[0].mxu0
        %577 = vdwg.mxu0
        %v579 = vsel %vm469, %v530, 0
        %v582 = vsel %vm534, %v366, 0
        %584 = vmatprep.subr.bf16.mxu0 0
        %585 = vmatpush1.bf16.msra.mxu0 %v582
        %586 = vmatprep.subr.bf16.mxu0 0
        %587 = vmatpush1.bf16.msra.mxu0 0
        %588 = vmatprep.subr.bf16.mxu0 0
        %589 = vmatpush1.bf16.msra.mxu0 0
        %590 = vmatprep.subr.bf16.mxu0 0
        %591 = vmatpush1.bf16.msra.mxu0 0
        %592 = vmatprep.subr.bf16.mxu0 0
        %593 = vmatpush1.bf16.msra.mxu0 0
        %594 = vmatprep.subr.bf16.mxu0 0
        %595 = vmatpush1.bf16.msra.mxu0 0
        %596 = vmatprep.subr.bf16.mxu0 0
        %597 = vmatpush1.bf16.msra.mxu0 0
        %598 = vmatprep.subr.bf16.mxu0 0
        %599 = vmatpush1.bf16.msra.mxu0 0
        %600 = vmatprep.subr.bf16.mxu0 0
        %601 = vmatpush1.bf16.msra.mxu0 0
        %602 = vmatprep.subr.bf16.mxu0 0
        %603 = vmatpush1.bf16.msra.mxu0 0
        %604 = vmatprep.subr.bf16.mxu0 0
        %605 = vmatpush1.bf16.msra.mxu0 0
        %606 = vmatprep.subr.bf16.mxu0 0
        %607 = vmatpush1.bf16.msra.mxu0 0
        %608 = vmatprep.subr.bf16.mxu0 0
        %609 = vmatpush1.bf16.msra.mxu0 0
        %610 = vmatprep.subr.bf16.mxu0 0
        %611 = vmatpush1.bf16.msra.mxu0 0
        %612 = vmatprep.subr.bf16.mxu0 0
        %613 = vmatpush1.bf16.msra.mxu0 0
        %614 = vmatprep.subr.bf16.mxu0 0
        %615 = vmatpush1.bf16.msra.mxu0 0
        %616 = vmatprep.mubr.bf16.mxu0 0
        %617 = vmatmul.mubr.bf16.gmra.mrb[0].mxu0 %v579
        %v618 = vpop.f32.mrb[0].mxu0
        %v619 = vadd.f32 0.0, %v618
        %v620 = vpop.f32.mrb[0].mxu0
        %v621 = vpop.f32.mrb[0].mxu0
        %v622 = vpop.f32.mrb[0].mxu0
        %623 = vdwg.mxu0
        %v624 = vadd.f32 %v527, %v573
        %v625 = vadd.f32 %v528, %v619
        %626 = vst.msk [vmem:[#allocation4] sm:$0xff] %vm374, %v624
        %627 = vst.msk [vmem:[#allocation4 + $0x8] sm:$0xff] %vm374, %v625
        %628 = vst.msk [vmem:[#allocation2] sm:$0xff] %vm512, %v476
        %629 = vst.msk [vmem:[#allocation2 + $0x8] sm:$0xff] %vm512, %v477
        // Predicated region
        $region57: #{bbfc_forward.13} parent=35 // pred_check
          %p630 = pneg %p349
        $region58: #{bbfc_forward.13} parent=35 // pred_check_branch
          %632 = sbr.rel (%p630) target = $region60
        $region59: #{bbfc_forward.13} parent=35 // pred_region
          %v633 = vld [vmem:[#allocation3] sm:$0xff]
          %v634 = vld [vmem:[#allocation3 + $0x8] sm:$0xff]
          %v635 = vrcp.pop %v633
          %v636 = vrcp.pop %v634
          %v637 = vld [vmem:[#allocation4] sm:$0xff]
          %v638 = vld [vmem:[#allocation4 + $0x8] sm:$0xff]
          %640 = vset.pattern.permute.xlu0 0
          %641 = vperm.xlu0 %640, %v635
          %v642 = vpop.permute.xlu0 %641
          %645 = vset.pattern.permute.xlu0 0
          %646 = vperm.xlu0 %645, %v636
          %v647 = vpop.permute.xlu0 %646
          %v649 = vmul.f32 %v637, %v642
          %v650 = vmul.f32 %v638, %v647
          %v651 = vpack.c.bf16 %v649, %v649
          %v652 = vpack.c.bf16 %v650, %v650
          %vm653 = vcmask 125952
          %654 = vst.msk [vmem:[%s347] sm:$0xf] %vm653, %v651
          %655 = vst.msk [vmem:[%s347 + $0x4] sm:$0xf] %vm653, %v652
        $region60: #{bbfc_forward.13} parent=35 // pred_fallthru
          _
        %s656 = sand.u32 %s157, 1
        %s657 = scalar_lea.sflag [#allocation7], %s656
        %s658 = sand.u32 %s157, 1
        %s659 = smul.addr %s658, 8
        %s660 = scalar_lea.vmem [#allocation13], %s659
        // Predicated region
        $region61: #{bbfc_forward.13} parent=35 // pred_check
          %p661 = pneg %p167
        $region62: #{bbfc_forward.13} parent=35 // pred_check_branch
          %663 = sbr.rel (%p661) target = $region64
        $region63: #{bbfc_forward.13} parent=35 // pred_region
          %s665 = ssub.s32 128, 128
          %666 = vsyncadd %s657, %s665
          %s667 = smul.addr %s31, 2
          %s668 = smul.addr %s667, 64
          %s669 = scalar_lea.hbm %s4, %s668
          %s670 = sshll.u32 %s660, 4
          %s671 = int_to_ptr.vmem [resolvable:$true] %s670
          %676 = dma.vmem_to_hbm [thread:$0]  %s671, 128, %s669, %s657, 64, 64, 4
        $region64: #{bbfc_forward.13} parent=35 // pred_fallthru
          _
      $region36: #{bbfc_forward.13} parent=5 // pred_fallthru
        _
      %p677 = scmp.le.s32.totalorder 2, %s22
      // Predicated region
      $region65: #{bbfc_forward.13} parent=5 // pred_check
        %p678 = pneg %p677
      $region66: #{bbfc_forward.13} parent=5 // pred_check_branch
        %680 = sbr.rel (%p678) target = $region68
      $region67: #{bbfc_forward.13} parent=5 // pred_region
        %s681 = ssub.s32 %s22, 2
        // Predicated region
        $region69: #{bbfc_forward.13} parent=67 // pred_check
          %p682 = pneg %p173
        $region70: #{bbfc_forward.13} parent=67 // pred_check_branch
          %684 = sbr.rel (%p682) target = $region72
        $region71: #{bbfc_forward.13} parent=67 // pred_region
          %s685 = sand.u32 %s158, 1
          %s686 = scalar_lea.sflag [#allocation7], %s685
          %s687 = sand.u32 %s158, 1
          %s688 = smul.addr %s687, 8
          %s689 = scalar_lea.vmem [#allocation13], %s688
          %690 = dma.done %s686, 128
        $region72: #{bbfc_forward.13} parent=67 // pred_fallthru
          _
      $region68: #{bbfc_forward.13} parent=5 // pred_fallthru
        _
    $region6: #{bbfc_forward.13} parent=1 // loop_footer
      %s26 = sadd.s32 1, %s22
    $region7: #{bbfc_forward.13} parent=1 // loop_footer_branch
      %21 = sbr.rel target = $region3
    $region8: #{bbfc_forward.13} parent=1 // loop_exit
      _
    %691 = vsyncpa [#allocation6], 1
    %s692 = scalar_lea.sflag [#allocation6], 1
    %693 = vsyncpa %s692, 1
    %694 = vsyncpa [#allocation9], 1
    %s695 = scalar_lea.sflag [#allocation9], 1
    %696 = vsyncpa %s695, 1
    %697 = vsyncpa [#allocation12], 1
    %s698 = scalar_lea.sflag [#allocation12], 1
    %699 = vsyncpa %s698, 1
    %700 = vsyncpa [#allocation7], 1
    %s701 = scalar_lea.sflag [#allocation7], 1
    %702 = vsyncpa %s701, 1

// kernel: bbfc_forward.14
$region0: #{bbfc_forward.14}
  #allocation0 [shape = 'u32[]', space=smem, size = 0x4, offset = 0x4, fixed_abs, tag = 'smem constant byte address 0x4 - core index']
  #allocation1 [shape = 'u32[144,128]{1,0:T(1,128)}', space=vmem, size = 0x12000, scoped, tag = 'internal scratch']
  #allocation2 [shape = 'f32[32,32]{1,0:T(8,128)}', space=vmem, size = 0x4000, scoped, tag = 'scratch operand']
  %s0 = inlined_call_operand.hbm [shape: bf16[32,32], index: 0, kind: input, shape index: {}]
  %s1 = inlined_call_operand.hbm [shape: bf16[32,32], index: 1, kind: input, shape index: {}]
  %s2 = inlined_call_operand.hbm [shape: f32[1,32], index: 2, kind: input, shape index: {}]
  %s3 = inlined_call_operand.hbm [shape: bf16[32,32], index: 3, kind: input, shape index: {}]
  %s4 = inlined_call_operand.hbm [shape: f32[1,32], index: 4, kind: input, shape index: {}]
  %s5 = inlined_call_operand.hbm [shape: f32[1,32], index: 5, kind: input, shape index: {}]
  %s6 = inlined_call_operand.hbm [shape: bf16[32,32], index: 6, kind: output, shape index: {}]
  %s7 = sld [smem:[#allocation0]]
  $region66: #{bbfc_forward.14} parent=0
    _
  %s9 = ssub.s32 1, %s7
  %s10 = scalar_select 0, %s9, %s7
  $region1: #{bbfc_forward.14} parent=0
    #allocation3 [shape = 'u8[8192]{0}', space=vmem, size = 0x2000, scoped, tag = 'input window, operand 0, single buffered']
    #allocation4 [shape = 's32[1]{0}', space=sflag, size = 0x4, scoped, tag = 'scoped memory for bbfc_forward.14']
    #allocation5 [shape = 's32[1]{0}', space=sflag, size = 0x4, scoped, tag = 'scoped memory for bbfc_forward.14']
    #allocation6 [shape = 'u8[8192]{0}', space=vmem, size = 0x2000, scoped, tag = 'input window, operand 1, single buffered']
    #allocation7 [shape = 's32[1]{0}', space=sflag, size = 0x4, scoped, tag = 'scoped memory for bbfc_forward.14']
    #allocation8 [shape = 'u8[512]{0}', space=vmem, size = 0x400, scoped, tag = 'input window, operand 2, single buffered']
    #allocation9 [shape = 'u8[8192]{0}', space=vmem, size = 0x2000, scoped, tag = 'input window, operand 3, single buffered']
    #allocation10 [shape = 's32[1]{0}', space=sflag, size = 0x4, scoped, tag = 'scoped memory for bbfc_forward.14']
    #allocation11 [shape = 'u8[512]{0}', space=vmem, size = 0x400, scoped, tag = 'input window, operand 4, single buffered']
    #allocation12 [shape = 'u8[512]{0}', space=vmem, size = 0x400, scoped, tag = 'input window, operand 5, single buffered']
    #allocation13 [shape = 's32[1]{0}', space=sflag, size = 0x4, scoped, tag = 'scoped memory for bbfc_forward.14']
    #allocation14 [shape = 'u8[8192]{0}', space=vmem, size = 0x2000, scoped, tag = 'output window, operand 0, single buffered']
    %11 = vsyncpa [#allocation4], 0
    %12 = vsyncpa [#allocation7], 0
    %13 = vsyncpa [#allocation10], 0
    %14 = vsyncpa [#allocation13], 0
    %15 = vsyncpa [#allocation5], 0
    // Predicated region
    $region2: #{bbfc_forward.14} parent=1 // pred_check
      _
    $region3: #{bbfc_forward.14} parent=1 // pred_check_branch
      %17 = sbr.rel (0) target = $region5
    $region4: #{bbfc_forward.14} parent=1 // pred_region
      %s19 = ssub.s32 256, 256
      %20 = vsyncadd [#allocation4], %s19
      %s21 = sshll.u32 [#allocation3], 4
      %s22 = int_to_ptr.vmem [resolvable:$true] %s21
      %27 = dma.hbm_to_vmem [thread:$0]  %s0, 256, %s22, [#allocation4], 64, 64, 4
    $region5: #{bbfc_forward.14} parent=1 // pred_fallthru
      _
    // Predicated region
    $region6: #{bbfc_forward.14} parent=1 // pred_check
      _
    $region7: #{bbfc_forward.14} parent=1 // pred_check_branch
      %29 = sbr.rel (0) target = $region9
    $region8: #{bbfc_forward.14} parent=1 // pred_region
      %s31 = ssub.s32 256, 256
      %32 = vsyncadd [#allocation7], %s31
      %s33 = sshll.u32 [#allocation6], 4
      %s34 = int_to_ptr.vmem [resolvable:$true] %s33
      %39 = dma.hbm_to_vmem [thread:$0]  %s1, 256, %s34, [#allocation7], 64, 64, 4
    $region9: #{bbfc_forward.14} parent=1 // pred_fallthru
      _
    // Predicated region
    $region10: #{bbfc_forward.14} parent=1 // pred_check
      _
    $region11: #{bbfc_forward.14} parent=1 // pred_check_branch
      %41 = sbr.rel (0) target = $region13
    $region12: #{bbfc_forward.14} parent=1 // pred_region
      %s43 = ssub.s32 16, 16
      %44 = vsyncadd [#allocation7], %s43
      %s46 = sshll.u32 [#allocation8], 4
      %s47 = int_to_ptr.vmem [resolvable:$true] %s46
      %49 = dma.hbm_to_vmem [thread:$0]  %s2, 16, %s47, [#allocation7]
    $region13: #{bbfc_forward.14} parent=1 // pred_fallthru
      _
    // Predicated region
    $region14: #{bbfc_forward.14} parent=1 // pred_check
      _
    $region15: #{bbfc_forward.14} parent=1 // pred_check_branch
      %51 = sbr.rel (0) target = $region17
    $region16: #{bbfc_forward.14} parent=1 // pred_region
      %s53 = ssub.s32 256, 256
      %54 = vsyncadd [#allocation10], %s53
      %s55 = sshll.u32 [#allocation9], 4
      %s56 = int_to_ptr.vmem [resolvable:$true] %s55
      %61 = dma.hbm_to_vmem [thread:$0]  %s3, 256, %s56, [#allocation10], 64, 64, 4
    $region17: #{bbfc_forward.14} parent=1 // pred_fallthru
      _
    // Predicated region
    $region18: #{bbfc_forward.14} parent=1 // pred_check
      _
    $region19: #{bbfc_forward.14} parent=1 // pred_check_branch
      %63 = sbr.rel (0) target = $region21
    $region20: #{bbfc_forward.14} parent=1 // pred_region
      %s65 = ssub.s32 16, 16
      %66 = vsyncadd [#allocation10], %s65
      %s68 = sshll.u32 [#allocation11], 4
      %s69 = int_to_ptr.vmem [resolvable:$true] %s68
      %71 = dma.hbm_to_vmem [thread:$0]  %s4, 16, %s69, [#allocation10]
    $region21: #{bbfc_forward.14} parent=1 // pred_fallthru
      _
    // Predicated region
    $region22: #{bbfc_forward.14} parent=1 // pred_check
      _
    $region23: #{bbfc_forward.14} parent=1 // pred_check_branch
      %73 = sbr.rel (0) target = $region25
    $region24: #{bbfc_forward.14} parent=1 // pred_region
      %s75 = ssub.s32 16, 16
      %76 = vsyncadd [#allocation13], %s75
      %s78 = sshll.u32 [#allocation12], 4
      %s79 = int_to_ptr.vmem [resolvable:$true] %s78
      %81 = dma.hbm_to_vmem [thread:$0]  %s5, 16, %s79, [#allocation13]
    $region25: #{bbfc_forward.14} parent=1 // pred_fallthru
      _
    // Predicated region
    $region26: #{bbfc_forward.14} parent=1 // pred_check
      _
    $region27: #{bbfc_forward.14} parent=1 // pred_check_branch
      %83 = sbr.rel (0) target = $region29
    $region28: #{bbfc_forward.14} parent=1 // pred_region
      %84 = dma.done [#allocation4], 256
    $region29: #{bbfc_forward.14} parent=1 // pred_fallthru
      _
    // Predicated region
    $region30: #{bbfc_forward.14} parent=1 // pred_check
      _
    $region31: #{bbfc_forward.14} parent=1 // pred_check_branch
      %86 = sbr.rel (0) target = $region33
    $region32: #{bbfc_forward.14} parent=1 // pred_region
      %87 = dma.done [#allocation7], 256
    $region33: #{bbfc_forward.14} parent=1 // pred_fallthru
      _
    // Predicated region
    $region34: #{bbfc_forward.14} parent=1 // pred_check
      _
    $region35: #{bbfc_forward.14} parent=1 // pred_check_branch
      %89 = sbr.rel (0) target = $region37
    $region36: #{bbfc_forward.14} parent=1 // pred_region
      %90 = dma.done [#allocation7], 16
    $region37: #{bbfc_forward.14} parent=1 // pred_fallthru
      _
    // Predicated region
    $region38: #{bbfc_forward.14} parent=1 // pred_check
      _
    $region39: #{bbfc_forward.14} parent=1 // pred_check_branch
      %92 = sbr.rel (0) target = $region41
    $region40: #{bbfc_forward.14} parent=1 // pred_region
      %93 = dma.done [#allocation10], 256
    $region41: #{bbfc_forward.14} parent=1 // pred_fallthru
      _
    // Predicated region
    $region42: #{bbfc_forward.14} parent=1 // pred_check
      _
    $region43: #{bbfc_forward.14} parent=1 // pred_check_branch
      %95 = sbr.rel (0) target = $region45
    $region44: #{bbfc_forward.14} parent=1 // pred_region
      %96 = dma.done [#allocation10], 16
    $region45: #{bbfc_forward.14} parent=1 // pred_fallthru
      _
    // Predicated region
    $region46: #{bbfc_forward.14} parent=1 // pred_check
      _
    $region47: #{bbfc_forward.14} parent=1 // pred_check_branch
      %98 = sbr.rel (0) target = $region49
    $region48: #{bbfc_forward.14} parent=1 // pred_region
      %99 = dma.done [#allocation13], 16
    $region49: #{bbfc_forward.14} parent=1 // pred_fallthru
      _
    %p101 = scmp.eq.s32.totalorder 0, 0
    // Predicated region
    $region50: #{bbfc_forward.14} parent=1 // pred_check
      %p102 = pneg %p101
    $region51: #{bbfc_forward.14} parent=1 // pred_check_branch
      %104 = sbr.rel (%p102) target = $region53
    $region52: #{bbfc_forward.14} parent=1 // pred_region
      %vm105 = vcmask 261120
      %106 = vst.msk [vmem:[#allocation2] sm:$0xff] %vm105, 0.0
      %107 = vst.msk [vmem:[#allocation2 + $0x8] sm:$0xff] %vm105, 0.0
      %108 = vst.msk [vmem:[#allocation2 + $0x10] sm:$0xff] %vm105, 0.0
      %109 = vst.msk [vmem:[#allocation2 + $0x18] sm:$0xff] %vm105, 0.0
    $region53: #{bbfc_forward.14} parent=1 // pred_fallthru
      _
    %v110 = vld [vmem:[#allocation2] sm:$0xff]
    %v111 = vld [vmem:[#allocation2 + $0x8] sm:$0xff]
    %v112 = vld [vmem:[#allocation2 + $0x10] sm:$0xff]
    %v113 = vld [vmem:[#allocation2 + $0x18] sm:$0xff]
    %v114 = vld [vmem:[#allocation3] sm:$0xf]
    %v115 = vld [vmem:[#allocation3 + $0x4] sm:$0xf]
    %v116 = vld [vmem:[#allocation3 + $0x8] sm:$0xf]
    %v117 = vld [vmem:[#allocation3 + $0xc] sm:$0xf]
    %v118 = vld [vmem:[#allocation6] sm:$0xf]
    %v119 = vld [vmem:[#allocation6 + $0x4] sm:$0xf]
    %v120 = vld [vmem:[#allocation6 + $0x8] sm:$0xf]
    %v121 = vld [vmem:[#allocation6 + $0xc] sm:$0xf]
    %v126 = vunpack.c.l.b16 %v114
    %v127 = vunpack.c.l.b16 %v115
    %v128 = vunpack.c.l.b16 %v116
    %v129 = vunpack.c.l.b16 %v117
    %v130 = vpack.c.b16 %v127, %v126
    %v131 = vpack.c.b16 %v129, %v128
    %v136 = vunpack.c.l.b16 %v118
    %v137 = vunpack.c.l.b16 %v119
    %v138 = vunpack.c.l.b16 %v120
    %v139 = vunpack.c.l.b16 %v121
    %v140 = vpack.c.b16 %v137, %v136
    %v141 = vpack.c.b16 %v139, %v138
    %vm144 = vcmask 261120
    %v146 = vsel %vm144, %v130, 0
    %v149 = vsel %vm144, %v131, 0
    %151 = vmatprep.subr.bf16.mxu0 0
    %152 = vmatpush1.bf16.msra.mxu0 %v140
    %153 = vmatprep.subr.bf16.mxu0 0
    %154 = vmatpush1.bf16.msra.mxu0 %v141
    %155 = vmatprep.subr.bf16.mxu0 0
    %156 = vmatpush1.bf16.msra.mxu0 0
    %157 = vmatprep.subr.bf16.mxu0 0
    %158 = vmatpush1.bf16.msra.mxu0 0
    %159 = vmatprep.subr.bf16.mxu0 0
    %160 = vmatpush1.bf16.msra.mxu0 0
    %161 = vmatprep.subr.bf16.mxu0 0
    %162 = vmatpush1.bf16.msra.mxu0 0
    %163 = vmatprep.subr.bf16.mxu0 0
    %164 = vmatpush1.bf16.msra.mxu0 0
    %165 = vmatprep.subr.bf16.mxu0 0
    %166 = vmatpush1.bf16.msra.mxu0 0
    %167 = vmatprep.subr.bf16.mxu0 0
    %168 = vmatpush1.bf16.msra.mxu0 0
    %169 = vmatprep.subr.bf16.mxu0 0
    %170 = vmatpush1.bf16.msra.mxu0 0
    %171 = vmatprep.subr.bf16.mxu0 0
    %172 = vmatpush1.bf16.msra.mxu0 0
    %173 = vmatprep.subr.bf16.mxu0 0
    %174 = vmatpush1.bf16.msra.mxu0 0
    %175 = vmatprep.subr.bf16.mxu0 0
    %176 = vmatpush1.bf16.msra.mxu0 0
    %177 = vmatprep.subr.bf16.mxu0 0
    %178 = vmatpush1.bf16.msra.mxu0 0
    %179 = vmatprep.subr.bf16.mxu0 0
    %180 = vmatpush1.bf16.msra.mxu0 0
    %181 = vmatprep.subr.bf16.mxu0 0
    %182 = vmatpush1.bf16.msra.mxu0 0
    %183 = vmatprep.mubr.bf16.mxu0 0
    %184 = vmatmul.mubr.bf16.gmra.mrb[0].mxu0 %v146
    %v185 = vpop.f32.mrb[0].mxu0
    %v186 = vadd.f32 0.0, %v185
    %v187 = vpop.f32.mrb[0].mxu0
    %v188 = vpop.f32.mrb[0].mxu0
    %v189 = vadd.f32 0.0, %v188
    %v190 = vpop.f32.mrb[0].mxu0
    %191 = vmatprep.mubr.bf16.mxu0 0
    %192 = vmatmul.mubr.bf16.gmra.mrb[0].mxu0 %v149
    %v193 = vpop.f32.mrb[0].mxu0
    %v194 = vadd.f32 0.0, %v193
    %v195 = vpop.f32.mrb[0].mxu0
    %v196 = vpop.f32.mrb[0].mxu0
    %v197 = vadd.f32 0.0, %v196
    %v198 = vpop.f32.mrb[0].mxu0
    %199 = vdwg.mxu0
    %v200 = vadd.f32 %v110, %v186
    %v201 = vadd.f32 %v111, %v189
    %v202 = vadd.f32 %v112, %v194
    %v203 = vadd.f32 %v113, %v197
    %204 = vst.msk [vmem:[#allocation2] sm:$0xff] %vm144, %v200
    %205 = vst.msk [vmem:[#allocation2 + $0x8] sm:$0xff] %vm144, %v201
    %206 = vst.msk [vmem:[#allocation2 + $0x10] sm:$0xff] %vm144, %v202
    %207 = vst.msk [vmem:[#allocation2 + $0x18] sm:$0xff] %vm144, %v203
    // Predicated region
    $region54: #{bbfc_forward.14} parent=1 // pred_check
      %p208 = pneg %p101
    $region55: #{bbfc_forward.14} parent=1 // pred_check_branch
      %210 = sbr.rel (%p208) target = $region57
    $region56: #{bbfc_forward.14} parent=1 // pred_region
      %v211 = vld [vmem:[#allocation2] sm:$0xff]
      %v212 = vld [vmem:[#allocation2 + $0x8] sm:$0xff]
      %v213 = vld [vmem:[#allocation2 + $0x10] sm:$0xff]
      %v214 = vld [vmem:[#allocation2 + $0x18] sm:$0xff]
      %v215 = vld [vmem:[#allocation8] sm:$0x1]
      %v217 = vlaneseq
      %v218 = vshrl.u32 %v217, 7
      %v219 = vsub.s32 0, %v218
      %v220 = vrot.slane %v215, %v219
      %v222 = vadd.f32 %v211, %v220
      %v223 = vadd.f32 %v212, %v220
      %v224 = vadd.f32 %v213, %v220
      %v225 = vadd.f32 %v214, %v220
      %v226 = vld [vmem:[#allocation9] sm:$0xf]
      %v227 = vld [vmem:[#allocation9 + $0x4] sm:$0xf]
      %v228 = vld [vmem:[#allocation9 + $0x8] sm:$0xf]
      %v229 = vld [vmem:[#allocation9 + $0xc] sm:$0xf]
      %v230 = vunpack.c.l.bf16 %v226
      %v231 = vunpack.c.l.bf16 %v227
      %v232 = vunpack.c.l.bf16 %v228
      %v233 = vunpack.c.l.bf16 %v229
      %v234 = vadd.f32 %v222, %v230
      %v235 = vadd.f32 %v223, %v231
      %v236 = vadd.f32 %v224, %v232
      %v237 = vadd.f32 %v225, %v233
      %v238 = vsel %vm144, %v234, 0.0
      %239 = vadd.xlane.f32.xlu0 %v238
      %v240 = vpop.xlane.xlu0 %239
      %v241 = vsel %vm144, %v235, 0.0
      %242 = vadd.xlane.f32.xlu0 %v241
      %v243 = vpop.xlane.xlu0 %242
      %v244 = vsel %vm144, %v236, 0.0
      %245 = vadd.xlane.f32.xlu0 %v244
      %v246 = vpop.xlane.xlu0 %245
      %v247 = vsel %vm144, %v237, 0.0
      %248 = vadd.xlane.f32.xlu0 %v247
      %v249 = vpop.xlane.xlu0 %248
      %v250 = vrcp.pop 32.0
      %v251 = vmul.f32 %v240, %v250
      %v252 = vmul.f32 %v243, %v250
      %v253 = vmul.f32 %v246, %v250
      %v254 = vmul.f32 %v249, %v250
      %v255 = vsub.f32 %v234, %v251
      %v256 = vsub.f32 %v235, %v252
      %v257 = vsub.f32 %v236, %v253
      %v258 = vsub.f32 %v237, %v254
      %v259 = vmul.f32 %v255, %v255
      %v260 = vmul.f32 %v256, %v256
      %v261 = vmul.f32 %v257, %v257
      %v262 = vmul.f32 %v258, %v258
      %v263 = vsel %vm144, %v259, 0.0
      %264 = vadd.xlane.f32.xlu0 %v263
      %v265 = vpop.xlane.xlu0 %264
      %v266 = vsel %vm144, %v260, 0.0
      %267 = vadd.xlane.f32.xlu0 %v266
      %v268 = vpop.xlane.xlu0 %267
      %v269 = vsel %vm144, %v261, 0.0
      %270 = vadd.xlane.f32.xlu0 %v269
      %v271 = vpop.xlane.xlu0 %270
      %v272 = vsel %vm144, %v262, 0.0
      %273 = vadd.xlane.f32.xlu0 %v272
      %v274 = vpop.xlane.xlu0 %273
      %v275 = vmul.f32 %v265, %v250
      %v276 = vmul.f32 %v268, %v250
      %v277 = vmul.f32 %v271, %v250
      %v278 = vmul.f32 %v274, %v250
      %v279 = vadd.f32 %v275, 1e-12
      %v280 = vadd.f32 %v276, 1e-12
      %v281 = vadd.f32 %v277, 1e-12
      %v282 = vadd.f32 %v278, 1e-12
      %v283 = vrsqrt.pop %v279
      %v284 = vrsqrt.pop %v280
      %v285 = vrsqrt.pop %v281
      %v286 = vrsqrt.pop %v282
      %v287 = vmul.f32 %v255, %v283
      %v288 = vmul.f32 %v256, %v284
      %v289 = vmul.f32 %v257, %v285
      %v290 = vmul.f32 %v258, %v286
      %v291 = vld [vmem:[#allocation11] sm:$0x1]
      %v293 = vlaneseq
      %v294 = vshrl.u32 %v293, 7
      %v295 = vsub.s32 0, %v294
      %v296 = vrot.slane %v291, %v295
      %v298 = vmul.f32 %v287, %v296
      %v299 = vmul.f32 %v288, %v296
      %v300 = vmul.f32 %v289, %v296
      %v301 = vmul.f32 %v290, %v296
      %v302 = vld [vmem:[#allocation12] sm:$0x1]
      %v304 = vlaneseq
      %v305 = vshrl.u32 %v304, 7
      %v306 = vsub.s32 0, %v305
      %v307 = vrot.slane %v302, %v306
      %v309 = vadd.f32 %v298, %v307
      %v310 = vadd.f32 %v299, %v307
      %v311 = vadd.f32 %v300, %v307
      %v312 = vadd.f32 %v301, %v307
      %v313 = vpack.c.bf16 %v310, %v309
      %v314 = vpack.c.bf16 %v312, %v311
      %v317 = vunpack.c.l.b16 %v313
      %v318 = vunpack.c.h.b16 %v313
      %v319 = vunpack.c.l.b16 %v314
      %v320 = vunpack.c.h.b16 %v314
      %v321 = vpack.c.b16 %v317, %v317
      %v322 = vpack.c.b16 %v318, %v318
      %v323 = vpack.c.b16 %v319, %v319
      %v324 = vpack.c.b16 %v320, %v320
      %vm329 = vcmask 257024
      %330 = vst.msk [vmem:[#allocation14] sm:$0xf] %vm329, %v321
      %331 = vst.msk [vmem:[#allocation14 + $0x4] sm:$0xf] %vm329, %v322
      %332 = vst.msk [vmem:[#allocation14 + $0x8] sm:$0xf] %vm329, %v323
      %333 = vst.msk [vmem:[#allocation14 + $0xc] sm:$0xf] %vm329, %v324
    $region57: #{bbfc_forward.14} parent=1 // pred_fallthru
      _
    // Predicated region
    $region58: #{bbfc_forward.14} parent=1 // pred_check
      _
    $region59: #{bbfc_forward.14} parent=1 // pred_check_branch
      %335 = sbr.rel (0) target = $region61
    $region60: #{bbfc_forward.14} parent=1 // pred_region
      %s337 = ssub.s32 256, 256
      %338 = vsyncadd [#allocation5], %s337
      %s339 = sshll.u32 [#allocation14], 4
      %s340 = int_to_ptr.vmem [resolvable:$true] %s339
      %345 = dma.vmem_to_hbm [thread:$0]  %s340, 256, %s6, [#allocation5], 64, 64, 4
    $region61: #{bbfc_forward.14} parent=1 // pred_fallthru
      _
    // Predicated region
    $region62: #{bbfc_forward.14} parent=1 // pred_check
      _
    $region63: #{bbfc_forward.14} parent=1 // pred_check_branch
      %347 = sbr.rel (0) target = $region65
    $region64: #{bbfc_forward.14} parent=1 // pred_region
      %348 = dma.done [#allocation5], 256
    $region65: #{bbfc_forward.14} parent=1 // pred_fallthru
      _
    %349 = vsyncpa [#allocation4], 1
    %350 = vsyncpa [#allocation7], 1
    %351 = vsyncpa [#allocation10], 1
    %352 = vsyncpa [#allocation13], 1
    %353 = vsyncpa [#allocation5], 1

// kernel: bbfc_forward.15
$region0: #{bbfc_forward.15}
  #allocation0 [shape = 'u32[]', space=smem, size = 0x4, offset = 0x4, fixed_abs, tag = 'smem constant byte address 0x4 - core index']
  #allocation1 [shape = 'u32[144,128]{1,0:T(1,128)}', space=vmem, size = 0x12000, scoped, tag = 'internal scratch']
  #allocation2 [shape = 'f32[32,64]{1,0:T(8,128)}', space=vmem, size = 0x4000, scoped, tag = 'scratch operand']
  %s0 = inlined_call_operand.hbm [shape: bf16[32,32], index: 0, kind: input, shape index: {}]
  %s1 = inlined_call_operand.hbm [shape: bf16[32,64], index: 1, kind: input, shape index: {}]
  %s2 = inlined_call_operand.hbm [shape: f32[1,64], index: 2, kind: input, shape index: {}]
  %s3 = inlined_call_operand.hbm [shape: bf16[32,64], index: 3, kind: output, shape index: {}]
  %s4 = sld [smem:[#allocation0]]
  $region42: #{bbfc_forward.15} parent=0
    _
  %s6 = ssub.s32 1, %s4
  %s7 = scalar_select 0, %s6, %s4
  $region1: #{bbfc_forward.15} parent=0
    #allocation3 [shape = 'u8[8192]{0}', space=vmem, size = 0x2000, scoped, tag = 'input window, operand 0, single buffered']
    #allocation4 [shape = 's32[1]{0}', space=sflag, size = 0x4, scoped, tag = 'scoped memory for bbfc_forward.15']
    #allocation5 [shape = 's32[1]{0}', space=sflag, size = 0x4, scoped, tag = 'scoped memory for bbfc_forward.15']
    #allocation6 [shape = 'u8[8192]{0}', space=vmem, size = 0x2000, scoped, tag = 'input window, operand 1, single buffered']
    #allocation7 [shape = 's32[1]{0}', space=sflag, size = 0x4, scoped, tag = 'scoped memory for bbfc_forward.15']
    #allocation8 [shape = 'u8[512]{0}', space=vmem, size = 0x400, scoped, tag = 'input window, operand 2, single buffered']
    #allocation9 [shape = 'u8[8192]{0}', space=vmem, size = 0x2000, scoped, tag = 'output window, operand 0, single buffered']
    %8 = vsyncpa [#allocation4], 0
    %9 = vsyncpa [#allocation7], 0
    %10 = vsyncpa [#allocation5], 0
    // Predicated region
    $region2: #{bbfc_forward.15} parent=1 // pred_check
      _
    $region3: #{bbfc_forward.15} parent=1 // pred_check_branch
      %12 = sbr.rel (0) target = $region5
    $region4: #{bbfc_forward.15} parent=1 // pred_region
      %s14 = ssub.s32 256, 256
      %15 = vsyncadd [#allocation4], %s14
      %s16 = sshll.u32 [#allocation3], 4
      %s17 = int_to_ptr.vmem [resolvable:$true] %s16
      %22 = dma.hbm_to_vmem [thread:$0]  %s0, 256, %s17, [#allocation4], 64, 64, 4
    $region5: #{bbfc_forward.15} parent=1 // pred_fallthru
      _
    // Predicated region
    $region6: #{bbfc_forward.15} parent=1 // pred_check
      _
    $region7: #{bbfc_forward.15} parent=1 // pred_check_branch
      %24 = sbr.rel (0) target = $region9
    $region8: #{bbfc_forward.15} parent=1 // pred_region
      %s26 = ssub.s32 256, 256
      %27 = vsyncadd [#allocation7], %s26
      %s28 = sshll.u32 [#allocation6], 4
      %s29 = int_to_ptr.vmem [resolvable:$true] %s28
      %34 = dma.hbm_to_vmem [thread:$0]  %s1, 256, %s29, [#allocation7], 64, 64, 4
    $region9: #{bbfc_forward.15} parent=1 // pred_fallthru
      _
    // Predicated region
    $region10: #{bbfc_forward.15} parent=1 // pred_check
      _
    $region11: #{bbfc_forward.15} parent=1 // pred_check_branch
      %36 = sbr.rel (0) target = $region13
    $region12: #{bbfc_forward.15} parent=1 // pred_region
      %s38 = ssub.s32 16, 16
      %39 = vsyncadd [#allocation7], %s38
      %s41 = sshll.u32 [#allocation8], 4
      %s42 = int_to_ptr.vmem [resolvable:$true] %s41
      %44 = dma.hbm_to_vmem [thread:$0]  %s2, 16, %s42, [#allocation7]
    $region13: #{bbfc_forward.15} parent=1 // pred_fallthru
      _
    // Predicated region
    $region14: #{bbfc_forward.15} parent=1 // pred_check
      _
    $region15: #{bbfc_forward.15} parent=1 // pred_check_branch
      %46 = sbr.rel (0) target = $region17
    $region16: #{bbfc_forward.15} parent=1 // pred_region
      %47 = dma.done [#allocation4], 256
    $region17: #{bbfc_forward.15} parent=1 // pred_fallthru
      _
    // Predicated region
    $region18: #{bbfc_forward.15} parent=1 // pred_check
      _
    $region19: #{bbfc_forward.15} parent=1 // pred_check_branch
      %49 = sbr.rel (0) target = $region21
    $region20: #{bbfc_forward.15} parent=1 // pred_region
      %50 = dma.done [#allocation7], 256
    $region21: #{bbfc_forward.15} parent=1 // pred_fallthru
      _
    // Predicated region
    $region22: #{bbfc_forward.15} parent=1 // pred_check
      _
    $region23: #{bbfc_forward.15} parent=1 // pred_check_branch
      %52 = sbr.rel (0) target = $region25
    $region24: #{bbfc_forward.15} parent=1 // pred_region
      %53 = dma.done [#allocation7], 16
    $region25: #{bbfc_forward.15} parent=1 // pred_fallthru
      _
    %p55 = scmp.eq.s32.totalorder 0, 0
    // Predicated region
    $region26: #{bbfc_forward.15} parent=1 // pred_check
      %p56 = pneg %p55
    $region27: #{bbfc_forward.15} parent=1 // pred_check_branch
      %58 = sbr.rel (%p56) target = $region29
    $region28: #{bbfc_forward.15} parent=1 // pred_region
      %vm59 = vcmask 523264
      %60 = vst.msk [vmem:[#allocation2] sm:$0xff] %vm59, 0.0
      %61 = vst.msk [vmem:[#allocation2 + $0x8] sm:$0xff] %vm59, 0.0
      %62 = vst.msk [vmem:[#allocation2 + $0x10] sm:$0xff] %vm59, 0.0
      %63 = vst.msk [vmem:[#allocation2 + $0x18] sm:$0xff] %vm59, 0.0
    $region29: #{bbfc_forward.15} parent=1 // pred_fallthru
      _
    %v64 = vld [vmem:[#allocation2] sm:$0xff]
    %v65 = vld [vmem:[#allocation2 + $0x8] sm:$0xff]
    %v66 = vld [vmem:[#allocation2 + $0x10] sm:$0xff]
    %v67 = vld [vmem:[#allocation2 + $0x18] sm:$0xff]
    %v68 = vld [vmem:[#allocation3] sm:$0xf]
    %v69 = vld [vmem:[#allocation3 + $0x4] sm:$0xf]
    %v70 = vld [vmem:[#allocation3 + $0x8] sm:$0xf]
    %v71 = vld [vmem:[#allocation3 + $0xc] sm:$0xf]
    %v72 = vld [vmem:[#allocation6] sm:$0xf]
    %v73 = vld [vmem:[#allocation6 + $0x4] sm:$0xf]
    %v74 = vld [vmem:[#allocation6 + $0x8] sm:$0xf]
    %v75 = vld [vmem:[#allocation6 + $0xc] sm:$0xf]
    %v80 = vunpack.c.l.b16 %v68
    %v81 = vunpack.c.l.b16 %v69
    %v82 = vunpack.c.l.b16 %v70
    %v83 = vunpack.c.l.b16 %v71
    %v84 = vpack.c.b16 %v81, %v80
    %v85 = vpack.c.b16 %v83, %v82
    %v90 = vunpack.c.l.b16 %v72
    %v91 = vunpack.c.l.b16 %v73
    %v92 = vunpack.c.l.b16 %v74
    %v93 = vunpack.c.l.b16 %v75
    %v94 = vpack.c.b16 %v91, %v90
    %v95 = vpack.c.b16 %v93, %v92
    %vm98 = vcmask 261120
    %v100 = vsel %vm98, %v84, 0
    %v103 = vsel %vm98, %v85, 0
    %105 = vmatprep.subr.bf16.mxu0 0
    %106 = vmatpush1.bf16.msra.mxu0 %v94
    %107 = vmatprep.subr.bf16.mxu0 0
    %108 = vmatpush1.bf16.msra.mxu0 %v95
    %109 = vmatprep.subr.bf16.mxu0 0
    %110 = vmatpush1.bf16.msra.mxu0 0
    %111 = vmatprep.subr.bf16.mxu0 0
    %112 = vmatpush1.bf16.msra.mxu0 0
    %113 = vmatprep.subr.bf16.mxu0 0
    %114 = vmatpush1.bf16.msra.mxu0 0
    %115 = vmatprep.subr.bf16.mxu0 0
    %116 = vmatpush1.bf16.msra.mxu0 0
    %117 = vmatprep.subr.bf16.mxu0 0
    %118 = vmatpush1.bf16.msra.mxu0 0
    %119 = vmatprep.subr.bf16.mxu0 0
    %120 = vmatpush1.bf16.msra.mxu0 0
    %121 = vmatprep.subr.bf16.mxu0 0
    %122 = vmatpush1.bf16.msra.mxu0 0
    %123 = vmatprep.subr.bf16.mxu0 0
    %124 = vmatpush1.bf16.msra.mxu0 0
    %125 = vmatprep.subr.bf16.mxu0 0
    %126 = vmatpush1.bf16.msra.mxu0 0
    %127 = vmatprep.subr.bf16.mxu0 0
    %128 = vmatpush1.bf16.msra.mxu0 0
    %129 = vmatprep.subr.bf16.mxu0 0
    %130 = vmatpush1.bf16.msra.mxu0 0
    %131 = vmatprep.subr.bf16.mxu0 0
    %132 = vmatpush1.bf16.msra.mxu0 0
    %133 = vmatprep.subr.bf16.mxu0 0
    %134 = vmatpush1.bf16.msra.mxu0 0
    %135 = vmatprep.subr.bf16.mxu0 0
    %136 = vmatpush1.bf16.msra.mxu0 0
    %137 = vmatprep.mubr.bf16.mxu0 0
    %138 = vmatmul.mubr.bf16.gmra.mrb[0].mxu0 %v100
    %v139 = vpop.f32.mrb[0].mxu0
    %v140 = vadd.f32 0.0, %v139
    %v141 = vpop.f32.mrb[0].mxu0
    %v142 = vpop.f32.mrb[0].mxu0
    %v143 = vadd.f32 0.0, %v142
    %v144 = vpop.f32.mrb[0].mxu0
    %145 = vmatprep.mubr.bf16.mxu0 0
    %146 = vmatmul.mubr.bf16.gmra.mrb[0].mxu0 %v103
    %v147 = vpop.f32.mrb[0].mxu0
    %v148 = vadd.f32 0.0, %v147
    %v149 = vpop.f32.mrb[0].mxu0
    %v150 = vpop.f32.mrb[0].mxu0
    %v151 = vadd.f32 0.0, %v150
    %v152 = vpop.f32.mrb[0].mxu0
    %153 = vdwg.mxu0
    %v154 = vadd.f32 %v64, %v140
    %v155 = vadd.f32 %v65, %v143
    %v156 = vadd.f32 %v66, %v148
    %v157 = vadd.f32 %v67, %v151
    %vm158 = vcmask 523264
    %159 = vst.msk [vmem:[#allocation2] sm:$0xff] %vm158, %v154
    %160 = vst.msk [vmem:[#allocation2 + $0x8] sm:$0xff] %vm158, %v155
    %161 = vst.msk [vmem:[#allocation2 + $0x10] sm:$0xff] %vm158, %v156
    %162 = vst.msk [vmem:[#allocation2 + $0x18] sm:$0xff] %vm158, %v157
    // Predicated region
    $region30: #{bbfc_forward.15} parent=1 // pred_check
      %p163 = pneg %p55
    $region31: #{bbfc_forward.15} parent=1 // pred_check_branch
      %165 = sbr.rel (%p163) target = $region33
    $region32: #{bbfc_forward.15} parent=1 // pred_region
      %v166 = vld [vmem:[#allocation2] sm:$0xff]
      %v167 = vld [vmem:[#allocation2 + $0x8] sm:$0xff]
      %v168 = vld [vmem:[#allocation2 + $0x10] sm:$0xff]
      %v169 = vld [vmem:[#allocation2 + $0x18] sm:$0xff]
      %v170 = vld [vmem:[#allocation8] sm:$0x1]
      %v172 = vlaneseq
      %v173 = vshrl.u32 %v172, 7
      %v174 = vsub.s32 0, %v173
      %v175 = vrot.slane %v170, %v174
      %v177 = vadd.f32 %v166, %v175
      %v178 = vadd.f32 %v167, %v175
      %v179 = vadd.f32 %v168, %v175
      %v180 = vadd.f32 %v169, %v175
      %v181 = vmul.f32 %v177, 0.5
      %v182 = vmul.f32 %v178, 0.5
      %v183 = vmul.f32 %v179, 0.5
      %v184 = vmul.f32 %v180, 0.5
      %v185 = vmul.f32 %v177, 0.044715
      %v186 = vmul.f32 %v178, 0.044715
      %v187 = vmul.f32 %v179, 0.044715
      %v188 = vmul.f32 %v180, 0.044715
      %v189 = vmul.f32 %v185, %v177
      %v190 = vmul.f32 %v186, %v178
      %v191 = vmul.f32 %v187, %v179
      %v192 = vmul.f32 %v188, %v180
      %v193 = vmul.f32 %v189, %v177
      %v194 = vmul.f32 %v190, %v178
      %v195 = vmul.f32 %v191, %v179
      %v196 = vmul.f32 %v192, %v180
      %v197 = vadd.f32 %v177, %v193
      %v198 = vadd.f32 %v178, %v194
      %v199 = vadd.f32 %v179, %v195
      %v200 = vadd.f32 %v180, %v196
      %v201 = vmul.f32 %v197, 0.7978846
      %v202 = vmul.f32 %v198, 0.7978846
      %v203 = vmul.f32 %v199, 0.7978846
      %v204 = vmul.f32 %v200, 0.7978846
      %v205 = vtanh.pop %v201
      %v206 = vtanh.pop %v202
      %v207 = vtanh.pop %v203
      %v208 = vtanh.pop %v204
      %v209 = vadd.f32 %v205, 1.0
      %v210 = vadd.f32 %v206, 1.0
      %v211 = vadd.f32 %v207, 1.0
      %v212 = vadd.f32 %v208, 1.0
      %v213 = vmul.f32 %v181, %v209
      %v214 = vmul.f32 %v182, %v210
      %v215 = vmul.f32 %v183, %v211
      %v216 = vmul.f32 %v184, %v212
      %v217 = vpack.c.bf16 %v214, %v213
      %v218 = vpack.c.bf16 %v216, %v215
      %v221 = vunpack.c.l.b16 %v217
      %v222 = vunpack.c.h.b16 %v217
      %v223 = vunpack.c.l.b16 %v218
      %v224 = vunpack.c.h.b16 %v218
      %v225 = vpack.c.b16 %v221, %v221
      %v226 = vpack.c.b16 %v222, %v222
      %v227 = vpack.c.b16 %v223, %v223
      %v228 = vpack.c.b16 %v224, %v224
      %vm233 = vcmask 519168
      %234 = vst.msk [vmem:[#allocation9] sm:$0xf] %vm233, %v225
      %235 = vst.msk [vmem:[#allocation9 + $0x4] sm:$0xf] %vm233, %v226
      %236 = vst.msk [vmem:[#allocation9 + $0x8] sm:$0xf] %vm233, %v227
      %237 = vst.msk [vmem:[#allocation9 + $0xc] sm:$0xf] %vm233, %v228
    $region33: #{bbfc_forward.15} parent=1 // pred_fallthru
      _
    // Predicated region
    $region34: #{bbfc_forward.15} parent=1 // pred_check
      _
    $region35: #{bbfc_forward.15} parent=1 // pred_check_branch
      %239 = sbr.rel (0) target = $region37
    $region36: #{bbfc_forward.15} parent=1 // pred_region
      %s241 = ssub.s32 256, 256
      %242 = vsyncadd [#allocation5], %s241
      %s243 = sshll.u32 [#allocation9], 4
      %s244 = int_to_ptr.vmem [resolvable:$true] %s243
      %249 = dma.vmem_to_hbm [thread:$0]  %s244, 256, %s3, [#allocation5], 64, 64, 4
    $region37: #{bbfc_forward.15} parent=1 // pred_fallthru
      _
    // Predicated region
    $region38: #{bbfc_forward.15} parent=1 // pred_check
      _
    $region39: #{bbfc_forward.15} parent=1 // pred_check_branch
      %251 = sbr.rel (0) target = $region41
    $region40: #{bbfc_forward.15} parent=1 // pred_region
      %252 = dma.done [#allocation5], 256
    $region41: #{bbfc_forward.15} parent=1 // pred_fallthru
      _
    %253 = vsyncpa [#allocation4], 1
    %254 = vsyncpa [#allocation7], 1
    %255 = vsyncpa [#allocation5], 1

// kernel: bbfc_forward.16
$region0: #{bbfc_forward.16}
  #allocation0 [shape = 'u32[]', space=smem, size = 0x4, offset = 0x4, fixed_abs, tag = 'smem constant byte address 0x4 - core index']
  #allocation1 [shape = 'u32[144,128]{1,0:T(1,128)}', space=vmem, size = 0x12000, scoped, tag = 'internal scratch']
  #allocation2 [shape = 'f32[32,32]{1,0:T(8,128)}', space=vmem, size = 0x4000, scoped, tag = 'scratch operand']
  %s0 = inlined_call_operand.hbm [shape: bf16[32,64], index: 0, kind: input, shape index: {}]
  %s1 = inlined_call_operand.hbm [shape: bf16[64,32], index: 1, kind: input, shape index: {}]
  %s2 = inlined_call_operand.hbm [shape: f32[1,32], index: 2, kind: input, shape index: {}]
  %s3 = inlined_call_operand.hbm [shape: bf16[32,32], index: 3, kind: input, shape index: {}]
  %s4 = inlined_call_operand.hbm [shape: f32[1,32], index: 4, kind: input, shape index: {}]
  %s5 = inlined_call_operand.hbm [shape: f32[1,32], index: 5, kind: input, shape index: {}]
  %s6 = inlined_call_operand.hbm [shape: bf16[32,32], index: 6, kind: output, shape index: {}]
  %s7 = sld [smem:[#allocation0]]
  $region66: #{bbfc_forward.16} parent=0
    _
  %s9 = ssub.s32 1, %s7
  %s10 = scalar_select 0, %s9, %s7
  $region1: #{bbfc_forward.16} parent=0
    #allocation3 [shape = 'u8[8192]{0}', space=vmem, size = 0x2000, scoped, tag = 'input window, operand 0, single buffered']
    #allocation4 [shape = 's32[1]{0}', space=sflag, size = 0x4, scoped, tag = 'scoped memory for bbfc_forward.16']
    #allocation5 [shape = 's32[1]{0}', space=sflag, size = 0x4, scoped, tag = 'scoped memory for bbfc_forward.16']
    #allocation6 [shape = 'u8[16384]{0}', space=vmem, size = 0x4000, scoped, tag = 'input window, operand 1, single buffered']
    #allocation7 [shape = 's32[1]{0}', space=sflag, size = 0x4, scoped, tag = 'scoped memory for bbfc_forward.16']
    #allocation8 [shape = 'u8[512]{0}', space=vmem, size = 0x400, scoped, tag = 'input window, operand 2, single buffered']
    #allocation9 [shape = 'u8[8192]{0}', space=vmem, size = 0x2000, scoped, tag = 'input window, operand 3, single buffered']
    #allocation10 [shape = 's32[1]{0}', space=sflag, size = 0x4, scoped, tag = 'scoped memory for bbfc_forward.16']
    #allocation11 [shape = 'u8[512]{0}', space=vmem, size = 0x400, scoped, tag = 'input window, operand 4, single buffered']
    #allocation12 [shape = 'u8[512]{0}', space=vmem, size = 0x400, scoped, tag = 'input window, operand 5, single buffered']
    #allocation13 [shape = 's32[1]{0}', space=sflag, size = 0x4, scoped, tag = 'scoped memory for bbfc_forward.16']
    #allocation14 [shape = 'u8[8192]{0}', space=vmem, size = 0x2000, scoped, tag = 'output window, operand 0, single buffered']
    %11 = vsyncpa [#allocation4], 0
    %12 = vsyncpa [#allocation7], 0
    %13 = vsyncpa [#allocation10], 0
    %14 = vsyncpa [#allocation13], 0
    %15 = vsyncpa [#allocation5], 0
    // Predicated region
    $region2: #{bbfc_forward.16} parent=1 // pred_check
      _
    $region3: #{bbfc_forward.16} parent=1 // pred_check_branch
      %17 = sbr.rel (0) target = $region5
    $region4: #{bbfc_forward.16} parent=1 // pred_region
      %s19 = ssub.s32 256, 256
      %20 = vsyncadd [#allocation4], %s19
      %s21 = sshll.u32 [#allocation3], 4
      %s22 = int_to_ptr.vmem [resolvable:$true] %s21
      %27 = dma.hbm_to_vmem [thread:$0]  %s0, 256, %s22, [#allocation4], 64, 64, 4
    $region5: #{bbfc_forward.16} parent=1 // pred_fallthru
      _
    // Predicated region
    $region6: #{bbfc_forward.16} parent=1 // pred_check
      _
    $region7: #{bbfc_forward.16} parent=1 // pred_check_branch
      %29 = sbr.rel (0) target = $region9
    $region8: #{bbfc_forward.16} parent=1 // pred_region
      %s31 = ssub.s32 512, 512
      %32 = vsyncadd [#allocation7], %s31
      %s33 = sshll.u32 [#allocation6], 4
      %s34 = int_to_ptr.vmem [resolvable:$true] %s33
      %39 = dma.hbm_to_vmem [thread:$0]  %s1, 512, %s34, [#allocation7], 64, 64, 4
    $region9: #{bbfc_forward.16} parent=1 // pred_fallthru
      _
    // Predicated region
    $region10: #{bbfc_forward.16} parent=1 // pred_check
      _
    $region11: #{bbfc_forward.16} parent=1 // pred_check_branch
      %41 = sbr.rel (0) target = $region13
    $region12: #{bbfc_forward.16} parent=1 // pred_region
      %s43 = ssub.s32 16, 16
      %44 = vsyncadd [#allocation7], %s43
      %s46 = sshll.u32 [#allocation8], 4
      %s47 = int_to_ptr.vmem [resolvable:$true] %s46
      %49 = dma.hbm_to_vmem [thread:$0]  %s2, 16, %s47, [#allocation7]
    $region13: #{bbfc_forward.16} parent=1 // pred_fallthru
      _
    // Predicated region
    $region14: #{bbfc_forward.16} parent=1 // pred_check
      _
    $region15: #{bbfc_forward.16} parent=1 // pred_check_branch
      %51 = sbr.rel (0) target = $region17
    $region16: #{bbfc_forward.16} parent=1 // pred_region
      %s53 = ssub.s32 256, 256
      %54 = vsyncadd [#allocation10], %s53
      %s55 = sshll.u32 [#allocation9], 4
      %s56 = int_to_ptr.vmem [resolvable:$true] %s55
      %61 = dma.hbm_to_vmem [thread:$0]  %s3, 256, %s56, [#allocation10], 64, 64, 4
    $region17: #{bbfc_forward.16} parent=1 // pred_fallthru
      _
    // Predicated region
    $region18: #{bbfc_forward.16} parent=1 // pred_check
      _
    $region19: #{bbfc_forward.16} parent=1 // pred_check_branch
      %63 = sbr.rel (0) target = $region21
    $region20: #{bbfc_forward.16} parent=1 // pred_region
      %s65 = ssub.s32 16, 16
      %66 = vsyncadd [#allocation10], %s65
      %s68 = sshll.u32 [#allocation11], 4
      %s69 = int_to_ptr.vmem [resolvable:$true] %s68
      %71 = dma.hbm_to_vmem [thread:$0]  %s4, 16, %s69, [#allocation10]
    $region21: #{bbfc_forward.16} parent=1 // pred_fallthru
      _
    // Predicated region
    $region22: #{bbfc_forward.16} parent=1 // pred_check
      _
    $region23: #{bbfc_forward.16} parent=1 // pred_check_branch
      %73 = sbr.rel (0) target = $region25
    $region24: #{bbfc_forward.16} parent=1 // pred_region
      %s75 = ssub.s32 16, 16
      %76 = vsyncadd [#allocation13], %s75
      %s78 = sshll.u32 [#allocation12], 4
      %s79 = int_to_ptr.vmem [resolvable:$true] %s78
      %81 = dma.hbm_to_vmem [thread:$0]  %s5, 16, %s79, [#allocation13]
    $region25: #{bbfc_forward.16} parent=1 // pred_fallthru
      _
    // Predicated region
    $region26: #{bbfc_forward.16} parent=1 // pred_check
      _
    $region27: #{bbfc_forward.16} parent=1 // pred_check_branch
      %83 = sbr.rel (0) target = $region29
    $region28: #{bbfc_forward.16} parent=1 // pred_region
      %84 = dma.done [#allocation4], 256
    $region29: #{bbfc_forward.16} parent=1 // pred_fallthru
      _
    // Predicated region
    $region30: #{bbfc_forward.16} parent=1 // pred_check
      _
    $region31: #{bbfc_forward.16} parent=1 // pred_check_branch
      %86 = sbr.rel (0) target = $region33
    $region32: #{bbfc_forward.16} parent=1 // pred_region
      %87 = dma.done [#allocation7], 512
    $region33: #{bbfc_forward.16} parent=1 // pred_fallthru
      _
    // Predicated region
    $region34: #{bbfc_forward.16} parent=1 // pred_check
      _
    $region35: #{bbfc_forward.16} parent=1 // pred_check_branch
      %89 = sbr.rel (0) target = $region37
    $region36: #{bbfc_forward.16} parent=1 // pred_region
      %90 = dma.done [#allocation7], 16
    $region37: #{bbfc_forward.16} parent=1 // pred_fallthru
      _
    // Predicated region
    $region38: #{bbfc_forward.16} parent=1 // pred_check
      _
    $region39: #{bbfc_forward.16} parent=1 // pred_check_branch
      %92 = sbr.rel (0) target = $region41
    $region40: #{bbfc_forward.16} parent=1 // pred_region
      %93 = dma.done [#allocation10], 256
    $region41: #{bbfc_forward.16} parent=1 // pred_fallthru
      _
    // Predicated region
    $region42: #{bbfc_forward.16} parent=1 // pred_check
      _
    $region43: #{bbfc_forward.16} parent=1 // pred_check_branch
      %95 = sbr.rel (0) target = $region45
    $region44: #{bbfc_forward.16} parent=1 // pred_region
      %96 = dma.done [#allocation10], 16
    $region45: #{bbfc_forward.16} parent=1 // pred_fallthru
      _
    // Predicated region
    $region46: #{bbfc_forward.16} parent=1 // pred_check
      _
    $region47: #{bbfc_forward.16} parent=1 // pred_check_branch
      %98 = sbr.rel (0) target = $region49
    $region48: #{bbfc_forward.16} parent=1 // pred_region
      %99 = dma.done [#allocation13], 16
    $region49: #{bbfc_forward.16} parent=1 // pred_fallthru
      _
    %p101 = scmp.eq.s32.totalorder 0, 0
    // Predicated region
    $region50: #{bbfc_forward.16} parent=1 // pred_check
      %p102 = pneg %p101
    $region51: #{bbfc_forward.16} parent=1 // pred_check_branch
      %104 = sbr.rel (%p102) target = $region53
    $region52: #{bbfc_forward.16} parent=1 // pred_region
      %vm105 = vcmask 261120
      %106 = vst.msk [vmem:[#allocation2] sm:$0xff] %vm105, 0.0
      %107 = vst.msk [vmem:[#allocation2 + $0x8] sm:$0xff] %vm105, 0.0
      %108 = vst.msk [vmem:[#allocation2 + $0x10] sm:$0xff] %vm105, 0.0
      %109 = vst.msk [vmem:[#allocation2 + $0x18] sm:$0xff] %vm105, 0.0
    $region53: #{bbfc_forward.16} parent=1 // pred_fallthru
      _
    %v110 = vld [vmem:[#allocation2] sm:$0xff]
    %v111 = vld [vmem:[#allocation2 + $0x8] sm:$0xff]
    %v112 = vld [vmem:[#allocation2 + $0x10] sm:$0xff]
    %v113 = vld [vmem:[#allocation2 + $0x18] sm:$0xff]
    %v114 = vld [vmem:[#allocation3] sm:$0xf]
    %v115 = vld [vmem:[#allocation3 + $0x4] sm:$0xf]
    %v116 = vld [vmem:[#allocation3 + $0x8] sm:$0xf]
    %v117 = vld [vmem:[#allocation3 + $0xc] sm:$0xf]
    %v118 = vld [vmem:[#allocation6] sm:$0xf]
    %v119 = vld [vmem:[#allocation6 + $0x4] sm:$0xf]
    %v120 = vld [vmem:[#allocation6 + $0x8] sm:$0xf]
    %v121 = vld [vmem:[#allocation6 + $0xc] sm:$0xf]
    %v122 = vld [vmem:[#allocation6 + $0x10] sm:$0xf]
    %v123 = vld [vmem:[#allocation6 + $0x14] sm:$0xf]
    %v124 = vld [vmem:[#allocation6 + $0x18] sm:$0xf]
    %v125 = vld [vmem:[#allocation6 + $0x1c] sm:$0xf]
    %v130 = vunpack.c.l.b16 %v114
    %v131 = vunpack.c.l.b16 %v115
    %v132 = vunpack.c.l.b16 %v116
    %v133 = vunpack.c.l.b16 %v117
    %v134 = vpack.c.b16 %v131, %v130
    %v135 = vpack.c.b16 %v133, %v132
    %v144 = vunpack.c.l.b16 %v118
    %v145 = vunpack.c.l.b16 %v119
    %v146 = vunpack.c.l.b16 %v120
    %v147 = vunpack.c.l.b16 %v121
    %v148 = vunpack.c.l.b16 %v122
    %v149 = vunpack.c.l.b16 %v123
    %v150 = vunpack.c.l.b16 %v124
    %v151 = vunpack.c.l.b16 %v125
    %v152 = vpack.c.b16 %v145, %v144
    %v153 = vpack.c.b16 %v147, %v146
    %v154 = vpack.c.b16 %v149, %v148
    %v155 = vpack.c.b16 %v151, %v150
    %vm160 = vcmask 523264
    %v162 = vsel %vm160, %v134, 0
    %v165 = vsel %vm160, %v135, 0
    %167 = vmatprep.subr.bf16.mxu0 0
    %168 = vmatpush1.bf16.msra.mxu0 %v152
    %169 = vmatprep.subr.bf16.mxu0 0
    %170 = vmatpush1.bf16.msra.mxu0 %v153
    %171 = vmatprep.subr.bf16.mxu0 0
    %172 = vmatpush1.bf16.msra.mxu0 %v154
    %173 = vmatprep.subr.bf16.mxu0 0
    %174 = vmatpush1.bf16.msra.mxu0 %v155
    %175 = vmatprep.subr.bf16.mxu0 0
    %176 = vmatpush1.bf16.msra.mxu0 0
    %177 = vmatprep.subr.bf16.mxu0 0
    %178 = vmatpush1.bf16.msra.mxu0 0
    %179 = vmatprep.subr.bf16.mxu0 0
    %180 = vmatpush1.bf16.msra.mxu0 0
    %181 = vmatprep.subr.bf16.mxu0 0
    %182 = vmatpush1.bf16.msra.mxu0 0
    %183 = vmatprep.subr.bf16.mxu0 0
    %184 = vmatpush1.bf16.msra.mxu0 0
    %185 = vmatprep.subr.bf16.mxu0 0
    %186 = vmatpush1.bf16.msra.mxu0 0
    %187 = vmatprep.subr.bf16.mxu0 0
    %188 = vmatpush1.bf16.msra.mxu0 0
    %189 = vmatprep.subr.bf16.mxu0 0
    %190 = vmatpush1.bf16.msra.mxu0 0
    %191 = vmatprep.subr.bf16.mxu0 0
    %192 = vmatpush1.bf16.msra.mxu0 0
    %193 = vmatprep.subr.bf16.mxu0 0
    %194 = vmatpush1.bf16.msra.mxu0 0
    %195 = vmatprep.subr.bf16.mxu0 0
    %196 = vmatpush1.bf16.msra.mxu0 0
    %197 = vmatprep.subr.bf16.mxu0 0
    %198 = vmatpush1.bf16.msra.mxu0 0
    %199 = vmatprep.mubr.bf16.mxu0 0
    %200 = vmatmul.mubr.bf16.gmra.mrb[0].mxu0 %v162
    %v201 = vpop.f32.mrb[0].mxu0
    %v202 = vadd.f32 0.0, %v201
    %v203 = vpop.f32.mrb[0].mxu0
    %v204 = vpop.f32.mrb[0].mxu0
    %v205 = vadd.f32 0.0, %v204
    %v206 = vpop.f32.mrb[0].mxu0
    %207 = vmatprep.mubr.bf16.mxu0 0
    %208 = vmatmul.mubr.bf16.gmra.mrb[0].mxu0 %v165
    %v209 = vpop.f32.mrb[0].mxu0
    %v210 = vadd.f32 0.0, %v209
    %v211 = vpop.f32.mrb[0].mxu0
    %v212 = vpop.f32.mrb[0].mxu0
    %v213 = vadd.f32 0.0, %v212
    %v214 = vpop.f32.mrb[0].mxu0
    %215 = vdwg.mxu0
    %v216 = vadd.f32 %v110, %v202
    %v217 = vadd.f32 %v111, %v205
    %v218 = vadd.f32 %v112, %v210
    %v219 = vadd.f32 %v113, %v213
    %vm220 = vcmask 261120
    %221 = vst.msk [vmem:[#allocation2] sm:$0xff] %vm220, %v216
    %222 = vst.msk [vmem:[#allocation2 + $0x8] sm:$0xff] %vm220, %v217
    %223 = vst.msk [vmem:[#allocation2 + $0x10] sm:$0xff] %vm220, %v218
    %224 = vst.msk [vmem:[#allocation2 + $0x18] sm:$0xff] %vm220, %v219
    // Predicated region
    $region54: #{bbfc_forward.16} parent=1 // pred_check
      %p225 = pneg %p101
    $region55: #{bbfc_forward.16} parent=1 // pred_check_branch
      %227 = sbr.rel (%p225) target = $region57
    $region56: #{bbfc_forward.16} parent=1 // pred_region
      %v228 = vld [vmem:[#allocation2] sm:$0xff]
      %v229 = vld [vmem:[#allocation2 + $0x8] sm:$0xff]
      %v230 = vld [vmem:[#allocation2 + $0x10] sm:$0xff]
      %v231 = vld [vmem:[#allocation2 + $0x18] sm:$0xff]
      %v232 = vld [vmem:[#allocation8] sm:$0x1]
      %v234 = vlaneseq
      %v235 = vshrl.u32 %v234, 7
      %v236 = vsub.s32 0, %v235
      %v237 = vrot.slane %v232, %v236
      %v239 = vadd.f32 %v228, %v237
      %v240 = vadd.f32 %v229, %v237
      %v241 = vadd.f32 %v230, %v237
      %v242 = vadd.f32 %v231, %v237
      %v243 = vld [vmem:[#allocation9] sm:$0xf]
      %v244 = vld [vmem:[#allocation9 + $0x4] sm:$0xf]
      %v245 = vld [vmem:[#allocation9 + $0x8] sm:$0xf]
      %v246 = vld [vmem:[#allocation9 + $0xc] sm:$0xf]
      %v247 = vunpack.c.l.bf16 %v243
      %v248 = vunpack.c.l.bf16 %v244
      %v249 = vunpack.c.l.bf16 %v245
      %v250 = vunpack.c.l.bf16 %v246
      %v251 = vadd.f32 %v239, %v247
      %v252 = vadd.f32 %v240, %v248
      %v253 = vadd.f32 %v241, %v249
      %v254 = vadd.f32 %v242, %v250
      %v255 = vsel %vm220, %v251, 0.0
      %256 = vadd.xlane.f32.xlu0 %v255
      %v257 = vpop.xlane.xlu0 %256
      %v258 = vsel %vm220, %v252, 0.0
      %259 = vadd.xlane.f32.xlu0 %v258
      %v260 = vpop.xlane.xlu0 %259
      %v261 = vsel %vm220, %v253, 0.0
      %262 = vadd.xlane.f32.xlu0 %v261
      %v263 = vpop.xlane.xlu0 %262
      %v264 = vsel %vm220, %v254, 0.0
      %265 = vadd.xlane.f32.xlu0 %v264
      %v266 = vpop.xlane.xlu0 %265
      %v267 = vrcp.pop 32.0
      %v268 = vmul.f32 %v257, %v267
      %v269 = vmul.f32 %v260, %v267
      %v270 = vmul.f32 %v263, %v267
      %v271 = vmul.f32 %v266, %v267
      %v272 = vsub.f32 %v251, %v268
      %v273 = vsub.f32 %v252, %v269
      %v274 = vsub.f32 %v253, %v270
      %v275 = vsub.f32 %v254, %v271
      %v276 = vmul.f32 %v272, %v272
      %v277 = vmul.f32 %v273, %v273
      %v278 = vmul.f32 %v274, %v274
      %v279 = vmul.f32 %v275, %v275
      %v280 = vsel %vm220, %v276, 0.0
      %281 = vadd.xlane.f32.xlu0 %v280
      %v282 = vpop.xlane.xlu0 %281
      %v283 = vsel %vm220, %v277, 0.0
      %284 = vadd.xlane.f32.xlu0 %v283
      %v285 = vpop.xlane.xlu0 %284
      %v286 = vsel %vm220, %v278, 0.0
      %287 = vadd.xlane.f32.xlu0 %v286
      %v288 = vpop.xlane.xlu0 %287
      %v289 = vsel %vm220, %v279, 0.0
      %290 = vadd.xlane.f32.xlu0 %v289
      %v291 = vpop.xlane.xlu0 %290
      %v292 = vmul.f32 %v282, %v267
      %v293 = vmul.f32 %v285, %v267
      %v294 = vmul.f32 %v288, %v267
      %v295 = vmul.f32 %v291, %v267
      %v296 = vadd.f32 %v292, 1e-12
      %v297 = vadd.f32 %v293, 1e-12
      %v298 = vadd.f32 %v294, 1e-12
      %v299 = vadd.f32 %v295, 1e-12
      %v300 = vrsqrt.pop %v296
      %v301 = vrsqrt.pop %v297
      %v302 = vrsqrt.pop %v298
      %v303 = vrsqrt.pop %v299
      %v304 = vmul.f32 %v272, %v300
      %v305 = vmul.f32 %v273, %v301
      %v306 = vmul.f32 %v274, %v302
      %v307 = vmul.f32 %v275, %v303
      %v308 = vld [vmem:[#allocation11] sm:$0x1]
      %v310 = vlaneseq
      %v311 = vshrl.u32 %v310, 7
      %v312 = vsub.s32 0, %v311
      %v313 = vrot.slane %v308, %v312
      %v315 = vmul.f32 %v304, %v313
      %v316 = vmul.f32 %v305, %v313
      %v317 = vmul.f32 %v306, %v313
      %v318 = vmul.f32 %v307, %v313
      %v319 = vld [vmem:[#allocation12] sm:$0x1]
      %v321 = vlaneseq
      %v322 = vshrl.u32 %v321, 7
      %v323 = vsub.s32 0, %v322
      %v324 = vrot.slane %v319, %v323
      %v326 = vadd.f32 %v315, %v324
      %v327 = vadd.f32 %v316, %v324
      %v328 = vadd.f32 %v317, %v324
      %v329 = vadd.f32 %v318, %v324
      %v330 = vpack.c.bf16 %v327, %v326
      %v331 = vpack.c.bf16 %v329, %v328
      %v334 = vunpack.c.l.b16 %v330
      %v335 = vunpack.c.h.b16 %v330
      %v336 = vunpack.c.l.b16 %v331
      %v337 = vunpack.c.h.b16 %v331
      %v338 = vpack.c.b16 %v334, %v334
      %v339 = vpack.c.b16 %v335, %v335
      %v340 = vpack.c.b16 %v336, %v336
      %v341 = vpack.c.b16 %v337, %v337
      %vm346 = vcmask 257024
      %347 = vst.msk [vmem:[#allocation14] sm:$0xf] %vm346, %v338
      %348 = vst.msk [vmem:[#allocation14 + $0x4] sm:$0xf] %vm346, %v339
      %349 = vst.msk [vmem:[#allocation14 + $0x8] sm:$0xf] %vm346, %v340
      %350 = vst.msk [vmem:[#allocation14 + $0xc] sm:$0xf] %vm346, %v341
    $region57: #{bbfc_forward.16} parent=1 // pred_fallthru
      _
    // Predicated region
    $region58: #{bbfc_forward.16} parent=1 // pred_check
      _
    $region59: #{bbfc_forward.16} parent=1 // pred_check_branch
      %352 = sbr.rel (0) target = $region61
    $region60: #{bbfc_forward.16} parent=1 // pred_region
      %s354 = ssub.s32 256, 256
      %355 = vsyncadd [#allocation5], %s354
      %s356 = sshll.u32 [#allocation14], 4
      %s357 = int_to_ptr.vmem [resolvable:$true] %s356
      %362 = dma.vmem_to_hbm [thread:$0]  %s357, 256, %s6, [#allocation5], 64, 64, 4
    $region61: #{bbfc_forward.16} parent=1 // pred_fallthru
      _
    // Predicated region
    $region62: #{bbfc_forward.16} parent=1 // pred_check
      _
    $region63: #{bbfc_forward.16} parent=1 // pred_check_branch
      %364 = sbr.rel (0) target = $region65
    $region64: #{bbfc_forward.16} parent=1 // pred_region
      %365 = dma.done [#allocation5], 256
    $region65: #{bbfc_forward.16} parent=1 // pred_fallthru
      _
    %366 = vsyncpa [#allocation4], 1
    %367 = vsyncpa [#allocation7], 1
    %368 = vsyncpa [#allocation10], 1
    %369 = vsyncpa [#allocation13], 1
    %370 = vsyncpa [#allocation5], 1

</llo_original>
